<compile_context>
chip_gen: v6e
topology: v6e:2x2x1
jax: 0.10.0
libtpu: 0.0.40
codegen_flags: <defaults>
</compile_context>

<pallas_src>
import math
import jax
import jax.numpy as jnp
from jax.experimental import pallas as pl
from jax.experimental.pallas import tpu as pltpu

# ---- model hyper-params (small, consistent with the module's __init__) ----
BATCH      = 2
SEQ        = 8
D_MODEL    = 32
N_HEAD     = 4
FFN_HIDDEN = 64
N_LAYERS   = 2
D_HEAD     = D_MODEL // N_HEAD
LN_EPS     = 1e-12        # eps used by the reference custom LayerNorm
NEG_INF    = -10000.0     # masked_fill value used by the reference attention
SCALE      = 1.0 / math.sqrt(D_HEAD)


# ----------------------------- kernel ------------------------------------
def _layer_norm(y, gamma, beta):
    mean = jnp.mean(y, axis=-1, keepdims=True)
    yc = y - mean
    var = jnp.mean(yc * yc, axis=-1, keepdims=True)            # unbiased=False
    return gamma * yc * jax.lax.rsqrt(var + LN_EPS) + beta      # rsqrt -> EUP


def _one_layer(x2, keep_bh, wqkv, bqkv, wo, w1, b1, w2, vec):
    """One encoder layer on the batch-flattened activations.

    x2      : (B*S, D)  activations, batch folded into rows
    keep_bh : (B*H, 1, S) bool key mask (True = attend), head-replicated
    wqkv    : (D, 3D)  fused [Wq | Wk | Wv], lane-dense
    bqkv    : (1, 3D)  fused [bq | bk | bv]
    wo      : (D, D)   output projection
    w1      : (D, F), b1: (1, F), w2: (F, D)
    vec     : (6, D) rows = [bo, gamma1, beta1, b2, gamma2, beta2]
    """
    # ---- fused QKV projection: ONE lane-dense matmul for q, k, v, all heads
    qkv = jnp.dot(x2, wqkv, preferred_element_type=jnp.float32) + bqkv   # (B*S, 3D)

    # ---- split into per-(batch, head) stacks via static slices (no transposes)
    qs, ks, vs = [], [], []
    for b in range(BATCH):
        rows = qkv[b * SEQ:(b + 1) * SEQ, :]                    # (S, 3D)
        for h in range(N_HEAD):
            c = h * D_HEAD
            qs.append(rows[:, c:c + D_HEAD])
            ks.append(rows[:, D_MODEL + c:D_MODEL + c + D_HEAD])
            vs.append(rows[:, 2 * D_MODEL + c:2 * D_MODEL + c + D_HEAD])
    qh = jnp.stack(qs)                                          # (B*H, S, Dh)
    kh = jnp.stack(ks)
    vh = jnp.stack(vs)

    # ---- scaled dot-product attention, batched over (batch*head)
    s = jnp.einsum('hqd,hkd->hqk', qh, kh,
                   preferred_element_type=jnp.float32) * SCALE  # (B*H, S, S)
    # replacement-style masking == torch masked_fill(mask == 0, -10000)
    s = jnp.where(keep_bh, s, NEG_INF)
    s = s - jnp.max(s, axis=-1, keepdims=True)
    p = jnp.exp(s)
    p = p / jnp.sum(p, axis=-1, keepdims=True)   # exact divide: keep 1e-4 tol

    ctx = jnp.einsum('hqk,hkd->hqd', p, vh,
                     preferred_element_type=jnp.float32)        # (B*H, S, Dh)

    # ---- re-assemble (B*S, D) and do ONE dense output projection
    ctx2 = jnp.concatenate(
        [jnp.concatenate([ctx[b * N_HEAD + h] for h in range(N_HEAD)], axis=-1)
         for b in range(BATCH)], axis=0)                        # (B*S, D)
    attn = jnp.dot(ctx2, wo, preferred_element_type=jnp.float32) + vec[0:1, :]

    # dropout1 is identity at inference
    x1 = _layer_norm(attn + x2, vec[1:2, :], vec[2:3, :])

    # ---- position-wise feed forward
    h = jnp.dot(x1, w1, preferred_element_type=jnp.float32) + b1
    h = jnp.maximum(h, 0.0)                      # ReLU (inner dropout = identity)
    h = jnp.dot(h, w2, preferred_element_type=jnp.float32) + vec[3:4, :]

    # dropout2 is identity at inference
    return _layer_norm(h + x1, vec[4:5, :], vec[5:6, :])


def encoder_kernel(x_ref, mask_ref,
                   wqkv_ref, bqkv_ref, wo_ref, w1_ref, b1_ref, w2_ref, vec_ref,
                   o_ref):
    # Single invocation: batch folded into rows, all layers fused, all weights
    # resident in VMEM for the whole kernel.
    x = x_ref[...]                                 # (B*S, D)
    keep = mask_ref[...] != 0.0                    # (B, 1, S), computed once
    keep_bh = jnp.concatenate(
        [jnp.broadcast_to(keep[b:b + 1], (N_HEAD, 1, SEQ)) for b in range(BATCH)],
        axis=0)                                    # (B*H, 1, S)
    for l in range(N_LAYERS):                      # static loop: no per-layer overhead
        x = _one_layer(x, keep_bh,
                       wqkv_ref[l], bqkv_ref[l], wo_ref[l],
                       w1_ref[l], b1_ref[l], w2_ref[l], vec_ref[l])
    o_ref[...] = x


# ----------------------------- wrapper ------------------------------------
def pack_params(params):
    """Repack per-layer PyTorch-style params into stacked lane-dense slabs."""
    wqkv, bqkv, wo, w1, b1, w2, vec = [], [], [], [], [], [], []
    for p in params:
        wqkv.append(jnp.concatenate([p["wq"], p["wk"], p["wv"]], axis=1))   # (D, 3D)
        bqkv.append(jnp.concatenate([p["bq"], p["bk"], p["bv"]]).reshape(1, 3 * D_MODEL))
        wo.append(p["wo"])                                                  # (D, D)
        w1.append(p["w1"])
        b1.append(p["b1"].reshape(1, FFN_HIDDEN))
        w2.append(p["w2"])
        vec.append(jnp.stack(
            [p["bo"], p["g1"], p["be1"], p["b2"], p["g2"], p["be2"]], axis=0))
    return (jnp.stack(wqkv), jnp.stack(bqkv), jnp.stack(wo),
            jnp.stack(w1), jnp.stack(b1), jnp.stack(w2), jnp.stack(vec))


def encoder_forward(x, mask, packed):
    """Single pallas_call running the full encoder stack on the whole batch."""
    B, S, D = x.shape
    x2 = x.reshape(B * S, D)           # wrapper-side layout plumbing only
    wqkv, bqkv, wo, w1, b1, w2, vec = packed

    def const_spec(a):  # full-array block, identical for the (single) grid step
        n = a.ndim
        return pl.BlockSpec(a.shape, lambda i, n=n: (0,) * n)

    in_specs = [
        pl.BlockSpec((B * S, D), lambda i: (0, 0)),     # x (batch folded)
        pl.BlockSpec((B, 1, S), lambda i: (0, 0, 0)),   # src_mask
        const_spec(wqkv), const_spec(bqkv), const_spec(wo),
        const_spec(w1), const_spec(b1), const_spec(w2), const_spec(vec),
    ]

    out = pl.pallas_call(
        encoder_kernel,
        out_shape=jax.ShapeDtypeStruct((B * S, D), jnp.float32),
        grid_spec=pltpu.PrefetchScalarGridSpec(
            num_scalar_prefetch=0,
            grid=(1,),                                  # batch folded: one step
            in_specs=in_specs,
            out_specs=pl.BlockSpec((B * S, D), lambda i: (0, 0)),
        ),
        compiler_params=pltpu.CompilerParams(
            dimension_semantics=("arbitrary",)),
    )(x2, mask, wqkv, bqkv, wo, w1, b1, w2, vec)
    return out.reshape(B, S, D)


# ---------------- deterministic parameter init ----------------
def init_params(key):
    params = []
    for l in range(N_LAYERS):
        k = jax.random.fold_in(key, l)
        ks = jax.random.split(k, 16)

        def lin(kk, din, dout):
            return (jax.random.normal(kk, (din, dout), jnp.float32)
                    * (1.0 / math.sqrt(din)))

        def vec(kk, d, scale=0.1):
            return scale * jax.random.normal(kk, (d,), jnp.float32)

        p = {
            "wq": lin(ks[0], D_MODEL, D_MODEL),  "bq": vec(ks[1], D_MODEL),
            "wk": lin(ks[2], D_MODEL, D_MODEL),  "bk": vec(ks[3], D_MODEL),
            "wv": lin(ks[4], D_MODEL, D_MODEL),  "bv": vec(ks[5], D_MODEL),
            "wo": lin(ks[6], D_MODEL, D_MODEL),  "bo": vec(ks[7], D_MODEL),
            "g1": 1.0 + vec(ks[8], D_MODEL),     "be1": vec(ks[9], D_MODEL),
            "w1": lin(ks[10], D_MODEL, FFN_HIDDEN), "b1": vec(ks[11], FFN_HIDDEN),
            "w2": lin(ks[12], FFN_HIDDEN, D_MODEL), "b2": vec(ks[13], D_MODEL),
            "g2": 1.0 + vec(ks[14], D_MODEL),    "be2": vec(ks[15], D_MODEL),
        }
        params.append(p)
    return params


# ---------------- pure-JAX reference for validation ----------------
def _ref_layer(x, mask, p):
    q = x @ p["wq"] + p["bq"]
    k = x @ p["wk"] + p["bk"]
    v = x @ p["wv"] + p["bv"]
    B, S, D = x.shape

    def split(t):  # (B, S, D) -> (B, H, S, Dh)
        return t.reshape(B, S, N_HEAD, D_HEAD).transpose(0, 2, 1, 3)

    qh, kh, vh = split(q), split(k), split(v)
    s = jnp.einsum("bhqd,bhkd->bhqk", qh, kh) / math.sqrt(D_HEAD)
    s = jnp.where(mask[:, None, :, :] == 0.0, NEG_INF, s)
    p_attn = jax.nn.softmax(s, axis=-1)
    o = jnp.einsum("bhqk,bhkd->bhqd", p_attn, vh).transpose(0, 2, 1, 3).reshape(B, S, D)
    o = o @ p["wo"] + p["bo"]

    def ln(y, g, b):
        m = jnp.mean(y, -1, keepdims=True)
        var = jnp.mean((y - m) ** 2, -1, keepdims=True)
        return g * (y - m) / jnp.sqrt(var + LN_EPS) + b

    x1 = ln(o + x, p["g1"], p["be1"])
    h = jnp.maximum(x1 @ p["w1"] + p["b1"], 0.0) @ p["w2"] + p["b2"]
    return ln(h + x1, p["g2"], p["be2"])


def encoder_ref(x, mask, params):
    for p in params:
        x = _ref_layer(x, mask, p)
    return x


if __name__ == "__main__":
    key = jax.random.PRNGKey(0)
    kx, kp = jax.random.split(key)

    x = jax.random.normal(kx, (BATCH, SEQ, D_MODEL), jnp.float32)
    src_mask = jnp.ones((BATCH, 1, SEQ), jnp.float32)
    src_mask = src_mask.at[1, 0, 6:].set(0.0)   # pad out the last 2 keys of batch 1

    params = init_params(kp)
    packed = pack_params(params)

    out = encoder_forward(x, src_mask, packed)
    jax.block_until_ready(out)

    ref = encoder_ref(x, src_mask, params)
    assert out.shape == (BATCH, SEQ, D_MODEL)
    assert jnp.allclose(out, ref, atol=1e-4, rtol=1e-4), "mismatch vs pure-JAX reference"

    print("KERNEL_OK")
</pallas_src>

<mosaic_0001>
module attributes {stable_mosaic.version = 11 : i64} {
  func.func @encoder_kernel(%arg0: i32, %arg1: memref<16x32xf32, #tpu.memory_space<vmem>>, %arg2: memref<2x1x8xf32, #tpu.memory_space<vmem>>, %arg3: memref<2x32x96xf32, #tpu.memory_space<vmem>>, %arg4: memref<2x1x96xf32, #tpu.memory_space<vmem>>, %arg5: memref<2x32x32xf32, #tpu.memory_space<vmem>>, %arg6: memref<2x32x64xf32, #tpu.memory_space<vmem>>, %arg7: memref<2x1x64xf32, #tpu.memory_space<vmem>>, %arg8: memref<2x64x32xf32, #tpu.memory_space<vmem>>, %arg9: memref<2x6x32xf32, #tpu.memory_space<vmem>>, %arg10: memref<16x32xf32, #tpu.memory_space<vmem>>) attributes {dimension_semantics = [#tpu.dimension_semantics<arbitrary>], iteration_bounds = array<i64: 1>, scalar_prefetch = 0 : i64, scratch_operands = 0 : i64, tpu.core_type = #tpu.core_type<tc>, window_params = [{pipeline_mode = #tpu.pipeline_mode<synchronous>, transform_indices = @transform_0, window_bounds = array<i64: 16, 32>}, {pipeline_mode = #tpu.pipeline_mode<synchronous>, transform_indices = @transform_1, window_bounds = array<i64: 2, 1, 8>}, {pipeline_mode = #tpu.pipeline_mode<synchronous>, transform_indices = @transform_2, window_bounds = array<i64: 2, 32, 96>}, {pipeline_mode = #tpu.pipeline_mode<synchronous>, transform_indices = @transform_3, window_bounds = array<i64: 2, 1, 96>}, {pipeline_mode = #tpu.pipeline_mode<synchronous>, transform_indices = @transform_4, window_bounds = array<i64: 2, 32, 32>}, {pipeline_mode = #tpu.pipeline_mode<synchronous>, transform_indices = @transform_5, window_bounds = array<i64: 2, 32, 64>}, {pipeline_mode = #tpu.pipeline_mode<synchronous>, transform_indices = @transform_6, window_bounds = array<i64: 2, 1, 64>}, {pipeline_mode = #tpu.pipeline_mode<synchronous>, transform_indices = @transform_7, window_bounds = array<i64: 2, 64, 32>}, {pipeline_mode = #tpu.pipeline_mode<synchronous>, transform_indices = @transform_8, window_bounds = array<i64: 2, 6, 32>}, {pipeline_mode = #tpu.pipeline_mode<synchronous>, transform_indices = @transform_9, window_bounds = array<i64: 16, 32>}]} {
    %c0 = arith.constant 0 : index
    %c0_0 = arith.constant 0 : index
    %0 = vector.load %arg1[%c0, %c0_0] : memref<16x32xf32, #tpu.memory_space<vmem>>, vector<16x32xf32>
    %c0_1 = arith.constant 0 : index
    %c0_2 = arith.constant 0 : index
    %c0_3 = arith.constant 0 : index
    %1 = vector.load %arg2[%c0_1, %c0_2, %c0_3] : memref<2x1x8xf32, #tpu.memory_space<vmem>>, vector<2x1x8xf32>
    %cst = arith.constant 0.000000e+00 : f32
    %2 = vector.broadcast %cst : f32 to vector<2x1x8xf32>
    %3 = arith.cmpf one, %1, %2 : vector<2x1x8xf32>
    %4 = vector.extract_strided_slice %3 {offsets = [0, 0, 0], sizes = [1, 1, 8], strides = [1, 1, 1]} : vector<2x1x8xi1> to vector<1x1x8xi1>
    %5 = vector.shape_cast %4 : vector<1x1x8xi1> to vector<1x1x8xi1>
    %6 = vector.broadcast %5 : vector<1x1x8xi1> to vector<4x1x8xi1>
    %7 = vector.extract_strided_slice %3 {offsets = [1, 0, 0], sizes = [1, 1, 8], strides = [1, 1, 1]} : vector<2x1x8xi1> to vector<1x1x8xi1>
    %8 = vector.shape_cast %7 : vector<1x1x8xi1> to vector<1x1x8xi1>
    %9 = vector.broadcast %8 : vector<1x1x8xi1> to vector<4x1x8xi1>
    %10 = tpu.concatenate %6, %9 in 0 : vector<4x1x8xi1>, vector<4x1x8xi1> -> vector<8x1x8xi1>
    %c0_4 = arith.constant 0 : index
    %c0_5 = arith.constant 0 : index
    %c0_6 = arith.constant 0 : index
    %11 = vector.load %arg3[%c0_4, %c0_5, %c0_6] : memref<2x32x96xf32, #tpu.memory_space<vmem>>, vector<1x32x96xf32>
    %12 = vector.shape_cast %11 : vector<1x32x96xf32> to vector<32x96xf32>
    %c0_7 = arith.constant 0 : index
    %c0_8 = arith.constant 0 : index
    %c0_9 = arith.constant 0 : index
    %13 = vector.load %arg4[%c0_7, %c0_8, %c0_9] : memref<2x1x96xf32, #tpu.memory_space<vmem>>, vector<1x1x96xf32>
    %14 = vector.shape_cast %13 : vector<1x1x96xf32> to vector<1x96xf32>
    %c0_10 = arith.constant 0 : index
    %c0_11 = arith.constant 0 : index
    %c0_12 = arith.constant 0 : index
    %15 = vector.load %arg5[%c0_10, %c0_11, %c0_12] : memref<2x32x32xf32, #tpu.memory_space<vmem>>, vector<1x32x32xf32>
    %16 = vector.shape_cast %15 : vector<1x32x32xf32> to vector<32x32xf32>
    %c0_13 = arith.constant 0 : index
    %c0_14 = arith.constant 0 : index
    %c0_15 = arith.constant 0 : index
    %17 = vector.load %arg6[%c0_13, %c0_14, %c0_15] : memref<2x32x64xf32, #tpu.memory_space<vmem>>, vector<1x32x64xf32>
    %18 = vector.shape_cast %17 : vector<1x32x64xf32> to vector<32x64xf32>
    %c0_16 = arith.constant 0 : index
    %c0_17 = arith.constant 0 : index
    %c0_18 = arith.constant 0 : index
    %19 = vector.load %arg7[%c0_16, %c0_17, %c0_18] : memref<2x1x64xf32, #tpu.memory_space<vmem>>, vector<1x1x64xf32>
    %20 = vector.shape_cast %19 : vector<1x1x64xf32> to vector<1x64xf32>
    %c0_19 = arith.constant 0 : index
    %c0_20 = arith.constant 0 : index
    %c0_21 = arith.constant 0 : index
    %21 = vector.load %arg8[%c0_19, %c0_20, %c0_21] : memref<2x64x32xf32, #tpu.memory_space<vmem>>, vector<1x64x32xf32>
    %22 = vector.shape_cast %21 : vector<1x64x32xf32> to vector<64x32xf32>
    %c0_22 = arith.constant 0 : index
    %c0_23 = arith.constant 0 : index
    %c0_24 = arith.constant 0 : index
    %23 = vector.load %arg9[%c0_22, %c0_23, %c0_24] : memref<2x6x32xf32, #tpu.memory_space<vmem>>, vector<1x6x32xf32>
    %24 = vector.shape_cast %23 : vector<1x6x32xf32> to vector<6x32xf32>
    %cst_25 = arith.constant dense<0.000000e+00> : vector<16x96xf32>
    %25 = tpu.matmul %0, %12, %cst_25 {dimension_numbers = #tpu.dot_dimension_numbers<[1], [0], [0], [1], [0, 0, 1, 1], [], []>} : vector<16x32xf32>, vector<32x96xf32>, vector<16x96xf32> -> vector<16x96xf32>
    %26 = vector.broadcast %14 : vector<1x96xf32> to vector<16x96xf32>
    %27 = arith.addf %25, %26 : vector<16x96xf32>
    %28 = vector.extract_strided_slice %27 {offsets = [0, 0], sizes = [8, 96], strides = [1, 1]} : vector<16x96xf32> to vector<8x96xf32>
    %29 = vector.extract_strided_slice %28 {offsets = [0, 0], sizes = [8, 8], strides = [1, 1]} : vector<8x96xf32> to vector<8x8xf32>
    %30 = vector.extract_strided_slice %28 {offsets = [0, 32], sizes = [8, 8], strides = [1, 1]} : vector<8x96xf32> to vector<8x8xf32>
    %31 = vector.extract_strided_slice %28 {offsets = [0, 64], sizes = [8, 8], strides = [1, 1]} : vector<8x96xf32> to vector<8x8xf32>
    %32 = vector.extract_strided_slice %28 {offsets = [0, 8], sizes = [8, 8], strides = [1, 1]} : vector<8x96xf32> to vector<8x8xf32>
    %33 = vector.extract_strided_slice %28 {offsets = [0, 40], sizes = [8, 8], strides = [1, 1]} : vector<8x96xf32> to vector<8x8xf32>
    %34 = vector.extract_strided_slice %28 {offsets = [0, 72], sizes = [8, 8], strides = [1, 1]} : vector<8x96xf32> to vector<8x8xf32>
    %35 = vector.extract_strided_slice %28 {offsets = [0, 16], sizes = [8, 8], strides = [1, 1]} : vector<8x96xf32> to vector<8x8xf32>
    %36 = vector.extract_strided_slice %28 {offsets = [0, 48], sizes = [8, 8], strides = [1, 1]} : vector<8x96xf32> to vector<8x8xf32>
    %37 = vector.extract_strided_slice %28 {offsets = [0, 80], sizes = [8, 8], strides = [1, 1]} : vector<8x96xf32> to vector<8x8xf32>
    %38 = vector.extract_strided_slice %28 {offsets = [0, 24], sizes = [8, 8], strides = [1, 1]} : vector<8x96xf32> to vector<8x8xf32>
    %39 = vector.extract_strided_slice %28 {offsets = [0, 56], sizes = [8, 8], strides = [1, 1]} : vector<8x96xf32> to vector<8x8xf32>
    %40 = vector.extract_strided_slice %28 {offsets = [0, 88], sizes = [8, 8], strides = [1, 1]} : vector<8x96xf32> to vector<8x8xf32>
    %41 = vector.extract_strided_slice %27 {offsets = [8, 0], sizes = [8, 96], strides = [1, 1]} : vector<16x96xf32> to vector<8x96xf32>
    %42 = vector.extract_strided_slice %41 {offsets = [0, 0], sizes = [8, 8], strides = [1, 1]} : vector<8x96xf32> to vector<8x8xf32>
    %43 = vector.extract_strided_slice %41 {offsets = [0, 32], sizes = [8, 8], strides = [1, 1]} : vector<8x96xf32> to vector<8x8xf32>
    %44 = vector.extract_strided_slice %41 {offsets = [0, 64], sizes = [8, 8], strides = [1, 1]} : vector<8x96xf32> to vector<8x8xf32>
    %45 = vector.extract_strided_slice %41 {offsets = [0, 8], sizes = [8, 8], strides = [1, 1]} : vector<8x96xf32> to vector<8x8xf32>
    %46 = vector.extract_strided_slice %41 {offsets = [0, 40], sizes = [8, 8], strides = [1, 1]} : vector<8x96xf32> to vector<8x8xf32>
    %47 = vector.extract_strided_slice %41 {offsets = [0, 72], sizes = [8, 8], strides = [1, 1]} : vector<8x96xf32> to vector<8x8xf32>
    %48 = vector.extract_strided_slice %41 {offsets = [0, 16], sizes = [8, 8], strides = [1, 1]} : vector<8x96xf32> to vector<8x8xf32>
    %49 = vector.extract_strided_slice %41 {offsets = [0, 48], sizes = [8, 8], strides = [1, 1]} : vector<8x96xf32> to vector<8x8xf32>
    %50 = vector.extract_strided_slice %41 {offsets = [0, 80], sizes = [8, 8], strides = [1, 1]} : vector<8x96xf32> to vector<8x8xf32>
    %51 = vector.extract_strided_slice %41 {offsets = [0, 24], sizes = [8, 8], strides = [1, 1]} : vector<8x96xf32> to vector<8x8xf32>
    %52 = vector.extract_strided_slice %41 {offsets = [0, 56], sizes = [8, 8], strides = [1, 1]} : vector<8x96xf32> to vector<8x8xf32>
    %53 = vector.extract_strided_slice %41 {offsets = [0, 88], sizes = [8, 8], strides = [1, 1]} : vector<8x96xf32> to vector<8x8xf32>
    %54 = vector.shape_cast %29 : vector<8x8xf32> to vector<1x8x8xf32>
    %55 = vector.shape_cast %32 : vector<8x8xf32> to vector<1x8x8xf32>
    %56 = vector.shape_cast %35 : vector<8x8xf32> to vector<1x8x8xf32>
    %57 = vector.shape_cast %38 : vector<8x8xf32> to vector<1x8x8xf32>
    %58 = vector.shape_cast %42 : vector<8x8xf32> to vector<1x8x8xf32>
    %59 = vector.shape_cast %45 : vector<8x8xf32> to vector<1x8x8xf32>
    %60 = vector.shape_cast %48 : vector<8x8xf32> to vector<1x8x8xf32>
    %61 = vector.shape_cast %51 : vector<8x8xf32> to vector<1x8x8xf32>
    %62 = tpu.concatenate %54, %55, %56, %57, %58, %59, %60, %61 in 0 : vector<1x8x8xf32>, vector<1x8x8xf32>, vector<1x8x8xf32>, vector<1x8x8xf32>, vector<1x8x8xf32>, vector<1x8x8xf32>, vector<1x8x8xf32>, vector<1x8x8xf32> -> vector<8x8x8xf32>
    %63 = vector.shape_cast %30 : vector<8x8xf32> to vector<1x8x8xf32>
    %64 = vector.shape_cast %33 : vector<8x8xf32> to vector<1x8x8xf32>
    %65 = vector.shape_cast %36 : vector<8x8xf32> to vector<1x8x8xf32>
    %66 = vector.shape_cast %39 : vector<8x8xf32> to vector<1x8x8xf32>
    %67 = vector.shape_cast %43 : vector<8x8xf32> to vector<1x8x8xf32>
    %68 = vector.shape_cast %46 : vector<8x8xf32> to vector<1x8x8xf32>
    %69 = vector.shape_cast %49 : vector<8x8xf32> to vector<1x8x8xf32>
    %70 = vector.shape_cast %52 : vector<8x8xf32> to vector<1x8x8xf32>
    %71 = tpu.concatenate %63, %64, %65, %66, %67, %68, %69, %70 in 0 : vector<1x8x8xf32>, vector<1x8x8xf32>, vector<1x8x8xf32>, vector<1x8x8xf32>, vector<1x8x8xf32>, vector<1x8x8xf32>, vector<1x8x8xf32>, vector<1x8x8xf32> -> vector<8x8x8xf32>
    %72 = vector.shape_cast %31 : vector<8x8xf32> to vector<1x8x8xf32>
    %73 = vector.shape_cast %34 : vector<8x8xf32> to vector<1x8x8xf32>
    %74 = vector.shape_cast %37 : vector<8x8xf32> to vector<1x8x8xf32>
    %75 = vector.shape_cast %40 : vector<8x8xf32> to vector<1x8x8xf32>
    %76 = vector.shape_cast %44 : vector<8x8xf32> to vector<1x8x8xf32>
    %77 = vector.shape_cast %47 : vector<8x8xf32> to vector<1x8x8xf32>
    %78 = vector.shape_cast %50 : vector<8x8xf32> to vector<1x8x8xf32>
    %79 = vector.shape_cast %53 : vector<8x8xf32> to vector<1x8x8xf32>
    %80 = tpu.concatenate %72, %73, %74, %75, %76, %77, %78, %79 in 0 : vector<1x8x8xf32>, vector<1x8x8xf32>, vector<1x8x8xf32>, vector<1x8x8xf32>, vector<1x8x8xf32>, vector<1x8x8xf32>, vector<1x8x8xf32>, vector<1x8x8xf32> -> vector<8x8x8xf32>
    "tpu.trace_start"() <{level = 10 : i32, message = "hqd,hkd->hqk"}> : () -> ()
    %cst_26 = arith.constant dense<0.000000e+00> : vector<8x8x8xf32>
    %81 = tpu.matmul %62, %71, %cst_26 {dimension_numbers = #tpu.dot_dimension_numbers<[2], [2], [1], [1], [0, 0, 0, 1, 1, 1], [0], [0]>} : vector<8x8x8xf32>, vector<8x8x8xf32>, vector<8x8x8xf32> -> vector<8x8x8xf32>
    "tpu.trace_stop"() : () -> ()
    %cst_27 = arith.constant 0.353553385 : f32
    %82 = vector.broadcast %cst_27 : f32 to vector<8x8x8xf32>
    %83 = arith.mulf %81, %82 : vector<8x8x8xf32>
    %cst_28 = arith.constant -1.000000e+04 : f32
    %84 = vector.shape_cast %10 : vector<8x1x8xi1> to vector<8x1x8xi1>
    %85 = vector.broadcast %84 : vector<8x1x8xi1> to vector<8x8x8xi1>
    %86 = vector.broadcast %cst_28 : f32 to vector<8x8x8xf32>
    %87 = arith.select %85, %83, %86 : vector<8x8x8xi1>, vector<8x8x8xf32>
    %cst_29 = arith.constant dense<0xFF800000> : vector<8x8xf32>
    %88 = vector.multi_reduction <maximumf>, %87, %cst_29 [2] : vector<8x8x8xf32> to vector<8x8xf32>
    %89 = vector.shape_cast %88 : vector<8x8xf32> to vector<8x8x1xf32>
    %90 = vector.broadcast %89 : vector<8x8x1xf32> to vector<8x8x8xf32>
    %91 = arith.subf %87, %90 : vector<8x8x8xf32>
    %92 = math.exp %91 : vector<8x8x8xf32>
    %cst_30 = arith.constant dense<0.000000e+00> : vector<8x8xf32>
    %93 = vector.multi_reduction <add>, %92, %cst_30 [2] : vector<8x8x8xf32> to vector<8x8xf32>
    %94 = vector.shape_cast %93 : vector<8x8xf32> to vector<8x8x1xf32>
    %95 = vector.broadcast %94 : vector<8x8x1xf32> to vector<8x8x8xf32>
    %96 = arith.divf %92, %95 : vector<8x8x8xf32>
    "tpu.trace_start"() <{level = 10 : i32, message = "hqk,hkd->hqd"}> : () -> ()
    %cst_31 = arith.constant dense<0.000000e+00> : vector<8x8x8xf32>
    %97 = tpu.matmul %96, %80, %cst_31 {dimension_numbers = #tpu.dot_dimension_numbers<[2], [1], [1], [2], [0, 0, 0, 1, 1, 2], [0], [0]>} : vector<8x8x8xf32>, vector<8x8x8xf32>, vector<8x8x8xf32> -> vector<8x8x8xf32>
    "tpu.trace_stop"() : () -> ()
    %98 = vector.extract_strided_slice %97 {offsets = [0, 0, 0], sizes = [1, 8, 8], strides = [1, 1, 1]} : vector<8x8x8xf32> to vector<1x8x8xf32>
    %99 = vector.shape_cast %98 : vector<1x8x8xf32> to vector<8x8xf32>
    %100 = vector.extract_strided_slice %97 {offsets = [1, 0, 0], sizes = [1, 8, 8], strides = [1, 1, 1]} : vector<8x8x8xf32> to vector<1x8x8xf32>
    %101 = vector.shape_cast %100 : vector<1x8x8xf32> to vector<8x8xf32>
    %102 = vector.extract_strided_slice %97 {offsets = [2, 0, 0], sizes = [1, 8, 8], strides = [1, 1, 1]} : vector<8x8x8xf32> to vector<1x8x8xf32>
    %103 = vector.shape_cast %102 : vector<1x8x8xf32> to vector<8x8xf32>
    %104 = vector.extract_strided_slice %97 {offsets = [3, 0, 0], sizes = [1, 8, 8], strides = [1, 1, 1]} : vector<8x8x8xf32> to vector<1x8x8xf32>
    %105 = vector.shape_cast %104 : vector<1x8x8xf32> to vector<8x8xf32>
    %106 = tpu.concatenate %99, %101, %103, %105 in 1 : vector<8x8xf32>, vector<8x8xf32>, vector<8x8xf32>, vector<8x8xf32> -> vector<8x32xf32>
    %107 = vector.extract_strided_slice %97 {offsets = [4, 0, 0], sizes = [1, 8, 8], strides = [1, 1, 1]} : vector<8x8x8xf32> to vector<1x8x8xf32>
    %108 = vector.shape_cast %107 : vector<1x8x8xf32> to vector<8x8xf32>
    %109 = vector.extract_strided_slice %97 {offsets = [5, 0, 0], sizes = [1, 8, 8], strides = [1, 1, 1]} : vector<8x8x8xf32> to vector<1x8x8xf32>
    %110 = vector.shape_cast %109 : vector<1x8x8xf32> to vector<8x8xf32>
    %111 = vector.extract_strided_slice %97 {offsets = [6, 0, 0], sizes = [1, 8, 8], strides = [1, 1, 1]} : vector<8x8x8xf32> to vector<1x8x8xf32>
    %112 = vector.shape_cast %111 : vector<1x8x8xf32> to vector<8x8xf32>
    %113 = vector.extract_strided_slice %97 {offsets = [7, 0, 0], sizes = [1, 8, 8], strides = [1, 1, 1]} : vector<8x8x8xf32> to vector<1x8x8xf32>
    %114 = vector.shape_cast %113 : vector<1x8x8xf32> to vector<8x8xf32>
    %115 = tpu.concatenate %108, %110, %112, %114 in 1 : vector<8x8xf32>, vector<8x8xf32>, vector<8x8xf32>, vector<8x8xf32> -> vector<8x32xf32>
    %116 = tpu.concatenate %106, %115 in 0 : vector<8x32xf32>, vector<8x32xf32> -> vector<16x32xf32>
    %cst_32 = arith.constant dense<0.000000e+00> : vector<16x32xf32>
    %117 = tpu.matmul %116, %16, %cst_32 {dimension_numbers = #tpu.dot_dimension_numbers<[1], [0], [0], [1], [0, 0, 1, 1], [], []>} : vector<16x32xf32>, vector<32x32xf32>, vector<16x32xf32> -> vector<16x32xf32>
    %118 = vector.extract_strided_slice %24 {offsets = [0, 0], sizes = [1, 32], strides = [1, 1]} : vector<6x32xf32> to vector<1x32xf32>
    %119 = vector.broadcast %118 : vector<1x32xf32> to vector<16x32xf32>
    %120 = arith.addf %117, %119 : vector<16x32xf32>
    %121 = arith.addf %120, %0 : vector<16x32xf32>
    %122 = vector.extract_strided_slice %24 {offsets = [1, 0], sizes = [1, 32], strides = [1, 1]} : vector<6x32xf32> to vector<1x32xf32>
    %123 = vector.extract_strided_slice %24 {offsets = [2, 0], sizes = [1, 32], strides = [1, 1]} : vector<6x32xf32> to vector<1x32xf32>
    %cst_33 = arith.constant dense<0.000000e+00> : vector<16xf32>
    %124 = vector.multi_reduction <add>, %121, %cst_33 [1] : vector<16x32xf32> to vector<16xf32>
    %125 = vector.shape_cast %124 : vector<16xf32> to vector<16x1xf32>
    %cst_34 = arith.constant 3.200000e+01 : f32
    %126 = vector.broadcast %cst_34 : f32 to vector<16x1xf32>
    %127 = arith.divf %125, %126 : vector<16x1xf32>
    %128 = vector.broadcast %127 : vector<16x1xf32> to vector<16x32xf32>
    %129 = arith.subf %121, %128 : vector<16x32xf32>
    %130 = arith.mulf %129, %129 : vector<16x32xf32>
    %cst_35 = arith.constant dense<0.000000e+00> : vector<16xf32>
    %131 = vector.multi_reduction <add>, %130, %cst_35 [1] : vector<16x32xf32> to vector<16xf32>
    %132 = vector.shape_cast %131 : vector<16xf32> to vector<16x1xf32>
    %cst_36 = arith.constant 3.200000e+01 : f32
    %133 = vector.broadcast %cst_36 : f32 to vector<16x1xf32>
    %134 = arith.divf %132, %133 : vector<16x1xf32>
    %135 = vector.broadcast %122 : vector<1x32xf32> to vector<16x32xf32>
    %136 = arith.mulf %135, %129 : vector<16x32xf32>
    %cst_37 = arith.constant 9.99999996E-13 : f32
    %137 = vector.broadcast %cst_37 : f32 to vector<16x1xf32>
    %138 = arith.addf %134, %137 : vector<16x1xf32>
    %139 = math.rsqrt %138 : vector<16x1xf32>
    %140 = vector.broadcast %139 : vector<16x1xf32> to vector<16x32xf32>
    %141 = arith.mulf %136, %140 : vector<16x32xf32>
    %142 = vector.broadcast %123 : vector<1x32xf32> to vector<16x32xf32>
    %143 = arith.addf %141, %142 : vector<16x32xf32>
    %cst_38 = arith.constant dense<0.000000e+00> : vector<16x64xf32>
    %144 = tpu.matmul %143, %18, %cst_38 {dimension_numbers = #tpu.dot_dimension_numbers<[1], [0], [0], [1], [0, 0, 1, 1], [], []>} : vector<16x32xf32>, vector<32x64xf32>, vector<16x64xf32> -> vector<16x64xf32>
    %145 = vector.broadcast %20 : vector<1x64xf32> to vector<16x64xf32>
    %146 = arith.addf %144, %145 : vector<16x64xf32>
    %cst_39 = arith.constant 0.000000e+00 : f32
    %147 = vector.broadcast %cst_39 : f32 to vector<16x64xf32>
    %148 = arith.maximumf %146, %147 : vector<16x64xf32>
    %cst_40 = arith.constant dense<0.000000e+00> : vector<16x32xf32>
    %149 = tpu.matmul %148, %22, %cst_40 {dimension_numbers = #tpu.dot_dimension_numbers<[1], [0], [0], [1], [0, 0, 1, 1], [], []>} : vector<16x64xf32>, vector<64x32xf32>, vector<16x32xf32> -> vector<16x32xf32>
    %150 = vector.extract_strided_slice %24 {offsets = [3, 0], sizes = [1, 32], strides = [1, 1]} : vector<6x32xf32> to vector<1x32xf32>
    %151 = vector.broadcast %150 : vector<1x32xf32> to vector<16x32xf32>
    %152 = arith.addf %149, %151 : vector<16x32xf32>
    %153 = arith.addf %152, %143 : vector<16x32xf32>
    %154 = vector.extract_strided_slice %24 {offsets = [4, 0], sizes = [1, 32], strides = [1, 1]} : vector<6x32xf32> to vector<1x32xf32>
    %155 = vector.extract_strided_slice %24 {offsets = [5, 0], sizes = [1, 32], strides = [1, 1]} : vector<6x32xf32> to vector<1x32xf32>
    %cst_41 = arith.constant dense<0.000000e+00> : vector<16xf32>
    %156 = vector.multi_reduction <add>, %153, %cst_41 [1] : vector<16x32xf32> to vector<16xf32>
    %157 = vector.shape_cast %156 : vector<16xf32> to vector<16x1xf32>
    %cst_42 = arith.constant 3.200000e+01 : f32
    %158 = vector.broadcast %cst_42 : f32 to vector<16x1xf32>
    %159 = arith.divf %157, %158 : vector<16x1xf32>
    %160 = vector.broadcast %159 : vector<16x1xf32> to vector<16x32xf32>
    %161 = arith.subf %153, %160 : vector<16x32xf32>
    %162 = arith.mulf %161, %161 : vector<16x32xf32>
    %cst_43 = arith.constant dense<0.000000e+00> : vector<16xf32>
    %163 = vector.multi_reduction <add>, %162, %cst_43 [1] : vector<16x32xf32> to vector<16xf32>
    %164 = vector.shape_cast %163 : vector<16xf32> to vector<16x1xf32>
    %cst_44 = arith.constant 3.200000e+01 : f32
    %165 = vector.broadcast %cst_44 : f32 to vector<16x1xf32>
    %166 = arith.divf %164, %165 : vector<16x1xf32>
    %167 = vector.broadcast %154 : vector<1x32xf32> to vector<16x32xf32>
    %168 = arith.mulf %167, %161 : vector<16x32xf32>
    %cst_45 = arith.constant 9.99999996E-13 : f32
    %169 = vector.broadcast %cst_45 : f32 to vector<16x1xf32>
    %170 = arith.addf %166, %169 : vector<16x1xf32>
    %171 = math.rsqrt %170 : vector<16x1xf32>
    %172 = vector.broadcast %171 : vector<16x1xf32> to vector<16x32xf32>
    %173 = arith.mulf %168, %172 : vector<16x32xf32>
    %174 = vector.broadcast %155 : vector<1x32xf32> to vector<16x32xf32>
    %175 = arith.addf %173, %174 : vector<16x32xf32>
    %c1 = arith.constant 1 : index
    %c0_46 = arith.constant 0 : index
    %c0_47 = arith.constant 0 : index
    %176 = vector.load %arg3[%c1, %c0_46, %c0_47] : memref<2x32x96xf32, #tpu.memory_space<vmem>>, vector<1x32x96xf32>
    %177 = vector.shape_cast %176 : vector<1x32x96xf32> to vector<32x96xf32>
    %c1_48 = arith.constant 1 : index
    %c0_49 = arith.constant 0 : index
    %c0_50 = arith.constant 0 : index
    %178 = vector.load %arg4[%c1_48, %c0_49, %c0_50] : memref<2x1x96xf32, #tpu.memory_space<vmem>>, vector<1x1x96xf32>
    %179 = vector.shape_cast %178 : vector<1x1x96xf32> to vector<1x96xf32>
    %c1_51 = arith.constant 1 : index
    %c0_52 = arith.constant 0 : index
    %c0_53 = arith.constant 0 : index
    %180 = vector.load %arg5[%c1_51, %c0_52, %c0_53] : memref<2x32x32xf32, #tpu.memory_space<vmem>>, vector<1x32x32xf32>
    %181 = vector.shape_cast %180 : vector<1x32x32xf32> to vector<32x32xf32>
    %c1_54 = arith.constant 1 : index
    %c0_55 = arith.constant 0 : index
    %c0_56 = arith.constant 0 : index
    %182 = vector.load %arg6[%c1_54, %c0_55, %c0_56] : memref<2x32x64xf32, #tpu.memory_space<vmem>>, vector<1x32x64xf32>
    %183 = vector.shape_cast %182 : vector<1x32x64xf32> to vector<32x64xf32>
    %c1_57 = arith.constant 1 : index
    %c0_58 = arith.constant 0 : index
    %c0_59 = arith.constant 0 : index
    %184 = vector.load %arg7[%c1_57, %c0_58, %c0_59] : memref<2x1x64xf32, #tpu.memory_space<vmem>>, vector<1x1x64xf32>
    %185 = vector.shape_cast %184 : vector<1x1x64xf32> to vector<1x64xf32>
    %c1_60 = arith.constant 1 : index
    %c0_61 = arith.constant 0 : index
    %c0_62 = arith.constant 0 : index
    %186 = vector.load %arg8[%c1_60, %c0_61, %c0_62] : memref<2x64x32xf32, #tpu.memory_space<vmem>>, vector<1x64x32xf32>
    %187 = vector.shape_cast %186 : vector<1x64x32xf32> to vector<64x32xf32>
    %c1_63 = arith.constant 1 : index
    %c0_64 = arith.constant 0 : index
    %c0_65 = arith.constant 0 : index
    %188 = vector.load %arg9[%c1_63, %c0_64, %c0_65] : memref<2x6x32xf32, #tpu.memory_space<vmem>>, vector<1x6x32xf32>
    %189 = vector.shape_cast %188 : vector<1x6x32xf32> to vector<6x32xf32>
    %cst_66 = arith.constant dense<0.000000e+00> : vector<16x96xf32>
    %190 = tpu.matmul %175, %177, %cst_66 {dimension_numbers = #tpu.dot_dimension_numbers<[1], [0], [0], [1], [0, 0, 1, 1], [], []>} : vector<16x32xf32>, vector<32x96xf32>, vector<16x96xf32> -> vector<16x96xf32>
    %191 = vector.broadcast %179 : vector<1x96xf32> to vector<16x96xf32>
    %192 = arith.addf %190, %191 : vector<16x96xf32>
    %193 = vector.extract_strided_slice %192 {offsets = [0, 0], sizes = [8, 96], strides = [1, 1]} : vector<16x96xf32> to vector<8x96xf32>
    %194 = vector.extract_strided_slice %193 {offsets = [0, 0], sizes = [8, 8], strides = [1, 1]} : vector<8x96xf32> to vector<8x8xf32>
    %195 = vector.extract_strided_slice %193 {offsets = [0, 32], sizes = [8, 8], strides = [1, 1]} : vector<8x96xf32> to vector<8x8xf32>
    %196 = vector.extract_strided_slice %193 {offsets = [0, 64], sizes = [8, 8], strides = [1, 1]} : vector<8x96xf32> to vector<8x8xf32>
    %197 = vector.extract_strided_slice %193 {offsets = [0, 8], sizes = [8, 8], strides = [1, 1]} : vector<8x96xf32> to vector<8x8xf32>
    %198 = vector.extract_strided_slice %193 {offsets = [0, 40], sizes = [8, 8], strides = [1, 1]} : vector<8x96xf32> to vector<8x8xf32>
    %199 = vector.extract_strided_slice %193 {offsets = [0, 72], sizes = [8, 8], strides = [1, 1]} : vector<8x96xf32> to vector<8x8xf32>
    %200 = vector.extract_strided_slice %193 {offsets = [0, 16], sizes = [8, 8], strides = [1, 1]} : vector<8x96xf32> to vector<8x8xf32>
    %201 = vector.extract_strided_slice %193 {offsets = [0, 48], sizes = [8, 8], strides = [1, 1]} : vector<8x96xf32> to vector<8x8xf32>
    %202 = vector.extract_strided_slice %193 {offsets = [0, 80], sizes = [8, 8], strides = [1, 1]} : vector<8x96xf32> to vector<8x8xf32>
    %203 = vector.extract_strided_slice %193 {offsets = [0, 24], sizes = [8, 8], strides = [1, 1]} : vector<8x96xf32> to vector<8x8xf32>
    %204 = vector.extract_strided_slice %193 {offsets = [0, 56], sizes = [8, 8], strides = [1, 1]} : vector<8x96xf32> to vector<8x8xf32>
    %205 = vector.extract_strided_slice %193 {offsets = [0, 88], sizes = [8, 8], strides = [1, 1]} : vector<8x96xf32> to vector<8x8xf32>
    %206 = vector.extract_strided_slice %192 {offsets = [8, 0], sizes = [8, 96], strides = [1, 1]} : vector<16x96xf32> to vector<8x96xf32>
    %207 = vector.extract_strided_slice %206 {offsets = [0, 0], sizes = [8, 8], strides = [1, 1]} : vector<8x96xf32> to vector<8x8xf32>
    %208 = vector.extract_strided_slice %206 {offsets = [0, 32], sizes = [8, 8], strides = [1, 1]} : vector<8x96xf32> to vector<8x8xf32>
    %209 = vector.extract_strided_slice %206 {offsets = [0, 64], sizes = [8, 8], strides = [1, 1]} : vector<8x96xf32> to vector<8x8xf32>
    %210 = vector.extract_strided_slice %206 {offsets = [0, 8], sizes = [8, 8], strides = [1, 1]} : vector<8x96xf32> to vector<8x8xf32>
    %211 = vector.extract_strided_slice %206 {offsets = [0, 40], sizes = [8, 8], strides = [1, 1]} : vector<8x96xf32> to vector<8x8xf32>
    %212 = vector.extract_strided_slice %206 {offsets = [0, 72], sizes = [8, 8], strides = [1, 1]} : vector<8x96xf32> to vector<8x8xf32>
    %213 = vector.extract_strided_slice %206 {offsets = [0, 16], sizes = [8, 8], strides = [1, 1]} : vector<8x96xf32> to vector<8x8xf32>
    %214 = vector.extract_strided_slice %206 {offsets = [0, 48], sizes = [8, 8], strides = [1, 1]} : vector<8x96xf32> to vector<8x8xf32>
    %215 = vector.extract_strided_slice %206 {offsets = [0, 80], sizes = [8, 8], strides = [1, 1]} : vector<8x96xf32> to vector<8x8xf32>
    %216 = vector.extract_strided_slice %206 {offsets = [0, 24], sizes = [8, 8], strides = [1, 1]} : vector<8x96xf32> to vector<8x8xf32>
    %217 = vector.extract_strided_slice %206 {offsets = [0, 56], sizes = [8, 8], strides = [1, 1]} : vector<8x96xf32> to vector<8x8xf32>
    %218 = vector.extract_strided_slice %206 {offsets = [0, 88], sizes = [8, 8], strides = [1, 1]} : vector<8x96xf32> to vector<8x8xf32>
    %219 = vector.shape_cast %194 : vector<8x8xf32> to vector<1x8x8xf32>
    %220 = vector.shape_cast %197 : vector<8x8xf32> to vector<1x8x8xf32>
    %221 = vector.shape_cast %200 : vector<8x8xf32> to vector<1x8x8xf32>
    %222 = vector.shape_cast %203 : vector<8x8xf32> to vector<1x8x8xf32>
    %223 = vector.shape_cast %207 : vector<8x8xf32> to vector<1x8x8xf32>
    %224 = vector.shape_cast %210 : vector<8x8xf32> to vector<1x8x8xf32>
    %225 = vector.shape_cast %213 : vector<8x8xf32> to vector<1x8x8xf32>
    %226 = vector.shape_cast %216 : vector<8x8xf32> to vector<1x8x8xf32>
    %227 = tpu.concatenate %219, %220, %221, %222, %223, %224, %225, %226 in 0 : vector<1x8x8xf32>, vector<1x8x8xf32>, vector<1x8x8xf32>, vector<1x8x8xf32>, vector<1x8x8xf32>, vector<1x8x8xf32>, vector<1x8x8xf32>, vector<1x8x8xf32> -> vector<8x8x8xf32>
    %228 = vector.shape_cast %195 : vector<8x8xf32> to vector<1x8x8xf32>
    %229 = vector.shape_cast %198 : vector<8x8xf32> to vector<1x8x8xf32>
    %230 = vector.shape_cast %201 : vector<8x8xf32> to vector<1x8x8xf32>
    %231 = vector.shape_cast %204 : vector<8x8xf32> to vector<1x8x8xf32>
    %232 = vector.shape_cast %208 : vector<8x8xf32> to vector<1x8x8xf32>
    %233 = vector.shape_cast %211 : vector<8x8xf32> to vector<1x8x8xf32>
    %234 = vector.shape_cast %214 : vector<8x8xf32> to vector<1x8x8xf32>
    %235 = vector.shape_cast %217 : vector<8x8xf32> to vector<1x8x8xf32>
    %236 = tpu.concatenate %228, %229, %230, %231, %232, %233, %234, %235 in 0 : vector<1x8x8xf32>, vector<1x8x8xf32>, vector<1x8x8xf32>, vector<1x8x8xf32>, vector<1x8x8xf32>, vector<1x8x8xf32>, vector<1x8x8xf32>, vector<1x8x8xf32> -> vector<8x8x8xf32>
    %237 = vector.shape_cast %196 : vector<8x8xf32> to vector<1x8x8xf32>
    %238 = vector.shape_cast %199 : vector<8x8xf32> to vector<1x8x8xf32>
    %239 = vector.shape_cast %202 : vector<8x8xf32> to vector<1x8x8xf32>
    %240 = vector.shape_cast %205 : vector<8x8xf32> to vector<1x8x8xf32>
    %241 = vector.shape_cast %209 : vector<8x8xf32> to vector<1x8x8xf32>
    %242 = vector.shape_cast %212 : vector<8x8xf32> to vector<1x8x8xf32>
    %243 = vector.shape_cast %215 : vector<8x8xf32> to vector<1x8x8xf32>
    %244 = vector.shape_cast %218 : vector<8x8xf32> to vector<1x8x8xf32>
    %245 = tpu.concatenate %237, %238, %239, %240, %241, %242, %243, %244 in 0 : vector<1x8x8xf32>, vector<1x8x8xf32>, vector<1x8x8xf32>, vector<1x8x8xf32>, vector<1x8x8xf32>, vector<1x8x8xf32>, vector<1x8x8xf32>, vector<1x8x8xf32> -> vector<8x8x8xf32>
    "tpu.trace_start"() <{level = 10 : i32, message = "hqd,hkd->hqk"}> : () -> ()
    %cst_67 = arith.constant dense<0.000000e+00> : vector<8x8x8xf32>
    %246 = tpu.matmul %227, %236, %cst_67 {dimension_numbers = #tpu.dot_dimension_numbers<[2], [2], [1], [1], [0, 0, 0, 1, 1, 1], [0], [0]>} : vector<8x8x8xf32>, vector<8x8x8xf32>, vector<8x8x8xf32> -> vector<8x8x8xf32>
    "tpu.trace_stop"() : () -> ()
    %cst_68 = arith.constant 0.353553385 : f32
    %247 = vector.broadcast %cst_68 : f32 to vector<8x8x8xf32>
    %248 = arith.mulf %246, %247 : vector<8x8x8xf32>
    %cst_69 = arith.constant -1.000000e+04 : f32
    %249 = vector.shape_cast %10 : vector<8x1x8xi1> to vector<8x1x8xi1>
    %250 = vector.broadcast %249 : vector<8x1x8xi1> to vector<8x8x8xi1>
    %251 = vector.broadcast %cst_69 : f32 to vector<8x8x8xf32>
    %252 = arith.select %250, %248, %251 : vector<8x8x8xi1>, vector<8x8x8xf32>
    %cst_70 = arith.constant dense<0xFF800000> : vector<8x8xf32>
    %253 = vector.multi_reduction <maximumf>, %252, %cst_70 [2] : vector<8x8x8xf32> to vector<8x8xf32>
    %254 = vector.shape_cast %253 : vector<8x8xf32> to vector<8x8x1xf32>
    %255 = vector.broadcast %254 : vector<8x8x1xf32> to vector<8x8x8xf32>
    %256 = arith.subf %252, %255 : vector<8x8x8xf32>
    %257 = math.exp %256 : vector<8x8x8xf32>
    %cst_71 = arith.constant dense<0.000000e+00> : vector<8x8xf32>
    %258 = vector.multi_reduction <add>, %257, %cst_71 [2] : vector<8x8x8xf32> to vector<8x8xf32>
    %259 = vector.shape_cast %258 : vector<8x8xf32> to vector<8x8x1xf32>
    %260 = vector.broadcast %259 : vector<8x8x1xf32> to vector<8x8x8xf32>
    %261 = arith.divf %257, %260 : vector<8x8x8xf32>
    "tpu.trace_start"() <{level = 10 : i32, message = "hqk,hkd->hqd"}> : () -> ()
    %cst_72 = arith.constant dense<0.000000e+00> : vector<8x8x8xf32>
    %262 = tpu.matmul %261, %245, %cst_72 {dimension_numbers = #tpu.dot_dimension_numbers<[2], [1], [1], [2], [0, 0, 0, 1, 1, 2], [0], [0]>} : vector<8x8x8xf32>, vector<8x8x8xf32>, vector<8x8x8xf32> -> vector<8x8x8xf32>
    "tpu.trace_stop"() : () -> ()
    %263 = vector.extract_strided_slice %262 {offsets = [0, 0, 0], sizes = [1, 8, 8], strides = [1, 1, 1]} : vector<8x8x8xf32> to vector<1x8x8xf32>
    %264 = vector.shape_cast %263 : vector<1x8x8xf32> to vector<8x8xf32>
    %265 = vector.extract_strided_slice %262 {offsets = [1, 0, 0], sizes = [1, 8, 8], strides = [1, 1, 1]} : vector<8x8x8xf32> to vector<1x8x8xf32>
    %266 = vector.shape_cast %265 : vector<1x8x8xf32> to vector<8x8xf32>
    %267 = vector.extract_strided_slice %262 {offsets = [2, 0, 0], sizes = [1, 8, 8], strides = [1, 1, 1]} : vector<8x8x8xf32> to vector<1x8x8xf32>
    %268 = vector.shape_cast %267 : vector<1x8x8xf32> to vector<8x8xf32>
    %269 = vector.extract_strided_slice %262 {offsets = [3, 0, 0], sizes = [1, 8, 8], strides = [1, 1, 1]} : vector<8x8x8xf32> to vector<1x8x8xf32>
    %270 = vector.shape_cast %269 : vector<1x8x8xf32> to vector<8x8xf32>
    %271 = tpu.concatenate %264, %266, %268, %270 in 1 : vector<8x8xf32>, vector<8x8xf32>, vector<8x8xf32>, vector<8x8xf32> -> vector<8x32xf32>
    %272 = vector.extract_strided_slice %262 {offsets = [4, 0, 0], sizes = [1, 8, 8], strides = [1, 1, 1]} : vector<8x8x8xf32> to vector<1x8x8xf32>
    %273 = vector.shape_cast %272 : vector<1x8x8xf32> to vector<8x8xf32>
    %274 = vector.extract_strided_slice %262 {offsets = [5, 0, 0], sizes = [1, 8, 8], strides = [1, 1, 1]} : vector<8x8x8xf32> to vector<1x8x8xf32>
    %275 = vector.shape_cast %274 : vector<1x8x8xf32> to vector<8x8xf32>
    %276 = vector.extract_strided_slice %262 {offsets = [6, 0, 0], sizes = [1, 8, 8], strides = [1, 1, 1]} : vector<8x8x8xf32> to vector<1x8x8xf32>
    %277 = vector.shape_cast %276 : vector<1x8x8xf32> to vector<8x8xf32>
    %278 = vector.extract_strided_slice %262 {offsets = [7, 0, 0], sizes = [1, 8, 8], strides = [1, 1, 1]} : vector<8x8x8xf32> to vector<1x8x8xf32>
    %279 = vector.shape_cast %278 : vector<1x8x8xf32> to vector<8x8xf32>
    %280 = tpu.concatenate %273, %275, %277, %279 in 1 : vector<8x8xf32>, vector<8x8xf32>, vector<8x8xf32>, vector<8x8xf32> -> vector<8x32xf32>
    %281 = tpu.concatenate %271, %280 in 0 : vector<8x32xf32>, vector<8x32xf32> -> vector<16x32xf32>
    %cst_73 = arith.constant dense<0.000000e+00> : vector<16x32xf32>
    %282 = tpu.matmul %281, %181, %cst_73 {dimension_numbers = #tpu.dot_dimension_numbers<[1], [0], [0], [1], [0, 0, 1, 1], [], []>} : vector<16x32xf32>, vector<32x32xf32>, vector<16x32xf32> -> vector<16x32xf32>
    %283 = vector.extract_strided_slice %189 {offsets = [0, 0], sizes = [1, 32], strides = [1, 1]} : vector<6x32xf32> to vector<1x32xf32>
    %284 = vector.broadcast %283 : vector<1x32xf32> to vector<16x32xf32>
    %285 = arith.addf %282, %284 : vector<16x32xf32>
    %286 = arith.addf %285, %175 : vector<16x32xf32>
    %287 = vector.extract_strided_slice %189 {offsets = [1, 0], sizes = [1, 32], strides = [1, 1]} : vector<6x32xf32> to vector<1x32xf32>
    %288 = vector.extract_strided_slice %189 {offsets = [2, 0], sizes = [1, 32], strides = [1, 1]} : vector<6x32xf32> to vector<1x32xf32>
    %cst_74 = arith.constant dense<0.000000e+00> : vector<16xf32>
    %289 = vector.multi_reduction <add>, %286, %cst_74 [1] : vector<16x32xf32> to vector<16xf32>
    %290 = vector.shape_cast %289 : vector<16xf32> to vector<16x1xf32>
    %cst_75 = arith.constant 3.200000e+01 : f32
    %291 = vector.broadcast %cst_75 : f32 to vector<16x1xf32>
    %292 = arith.divf %290, %291 : vector<16x1xf32>
    %293 = vector.broadcast %292 : vector<16x1xf32> to vector<16x32xf32>
    %294 = arith.subf %286, %293 : vector<16x32xf32>
    %295 = arith.mulf %294, %294 : vector<16x32xf32>
    %cst_76 = arith.constant dense<0.000000e+00> : vector<16xf32>
    %296 = vector.multi_reduction <add>, %295, %cst_76 [1] : vector<16x32xf32> to vector<16xf32>
    %297 = vector.shape_cast %296 : vector<16xf32> to vector<16x1xf32>
    %cst_77 = arith.constant 3.200000e+01 : f32
    %298 = vector.broadcast %cst_77 : f32 to vector<16x1xf32>
    %299 = arith.divf %297, %298 : vector<16x1xf32>
    %300 = vector.broadcast %287 : vector<1x32xf32> to vector<16x32xf32>
    %301 = arith.mulf %300, %294 : vector<16x32xf32>
    %cst_78 = arith.constant 9.99999996E-13 : f32
    %302 = vector.broadcast %cst_78 : f32 to vector<16x1xf32>
    %303 = arith.addf %299, %302 : vector<16x1xf32>
    %304 = math.rsqrt %303 : vector<16x1xf32>
    %305 = vector.broadcast %304 : vector<16x1xf32> to vector<16x32xf32>
    %306 = arith.mulf %301, %305 : vector<16x32xf32>
    %307 = vector.broadcast %288 : vector<1x32xf32> to vector<16x32xf32>
    %308 = arith.addf %306, %307 : vector<16x32xf32>
    %cst_79 = arith.constant dense<0.000000e+00> : vector<16x64xf32>
    %309 = tpu.matmul %308, %183, %cst_79 {dimension_numbers = #tpu.dot_dimension_numbers<[1], [0], [0], [1], [0, 0, 1, 1], [], []>} : vector<16x32xf32>, vector<32x64xf32>, vector<16x64xf32> -> vector<16x64xf32>
    %310 = vector.broadcast %185 : vector<1x64xf32> to vector<16x64xf32>
    %311 = arith.addf %309, %310 : vector<16x64xf32>
    %cst_80 = arith.constant 0.000000e+00 : f32
    %312 = vector.broadcast %cst_80 : f32 to vector<16x64xf32>
    %313 = arith.maximumf %311, %312 : vector<16x64xf32>
    %cst_81 = arith.constant dense<0.000000e+00> : vector<16x32xf32>
    %314 = tpu.matmul %313, %187, %cst_81 {dimension_numbers = #tpu.dot_dimension_numbers<[1], [0], [0], [1], [0, 0, 1, 1], [], []>} : vector<16x64xf32>, vector<64x32xf32>, vector<16x32xf32> -> vector<16x32xf32>
    %315 = vector.extract_strided_slice %189 {offsets = [3, 0], sizes = [1, 32], strides = [1, 1]} : vector<6x32xf32> to vector<1x32xf32>
    %316 = vector.broadcast %315 : vector<1x32xf32> to vector<16x32xf32>
    %317 = arith.addf %314, %316 : vector<16x32xf32>
    %318 = arith.addf %317, %308 : vector<16x32xf32>
    %319 = vector.extract_strided_slice %189 {offsets = [4, 0], sizes = [1, 32], strides = [1, 1]} : vector<6x32xf32> to vector<1x32xf32>
    %320 = vector.extract_strided_slice %189 {offsets = [5, 0], sizes = [1, 32], strides = [1, 1]} : vector<6x32xf32> to vector<1x32xf32>
    %cst_82 = arith.constant dense<0.000000e+00> : vector<16xf32>
    %321 = vector.multi_reduction <add>, %318, %cst_82 [1] : vector<16x32xf32> to vector<16xf32>
    %322 = vector.shape_cast %321 : vector<16xf32> to vector<16x1xf32>
    %cst_83 = arith.constant 3.200000e+01 : f32
    %323 = vector.broadcast %cst_83 : f32 to vector<16x1xf32>
    %324 = arith.divf %322, %323 : vector<16x1xf32>
    %325 = vector.broadcast %324 : vector<16x1xf32> to vector<16x32xf32>
    %326 = arith.subf %318, %325 : vector<16x32xf32>
    %327 = arith.mulf %326, %326 : vector<16x32xf32>
    %cst_84 = arith.constant dense<0.000000e+00> : vector<16xf32>
    %328 = vector.multi_reduction <add>, %327, %cst_84 [1] : vector<16x32xf32> to vector<16xf32>
    %329 = vector.shape_cast %328 : vector<16xf32> to vector<16x1xf32>
    %cst_85 = arith.constant 3.200000e+01 : f32
    %330 = vector.broadcast %cst_85 : f32 to vector<16x1xf32>
    %331 = arith.divf %329, %330 : vector<16x1xf32>
    %332 = vector.broadcast %319 : vector<1x32xf32> to vector<16x32xf32>
    %333 = arith.mulf %332, %326 : vector<16x32xf32>
    %cst_86 = arith.constant 9.99999996E-13 : f32
    %334 = vector.broadcast %cst_86 : f32 to vector<16x1xf32>
    %335 = arith.addf %331, %334 : vector<16x1xf32>
    %336 = math.rsqrt %335 : vector<16x1xf32>
    %337 = vector.broadcast %336 : vector<16x1xf32> to vector<16x32xf32>
    %338 = arith.mulf %333, %337 : vector<16x32xf32>
    %339 = vector.broadcast %320 : vector<1x32xf32> to vector<16x32xf32>
    %340 = arith.addf %338, %339 : vector<16x32xf32>
    %c0_87 = arith.constant 0 : index
    %c0_88 = arith.constant 0 : index
    %341 = vector.load %arg10[%c0_87, %c0_88] : memref<16x32xf32, #tpu.memory_space<vmem>>, vector<16x32xf32>
    tpu.vector_store %arg10[%c0_87, %c0_88], %340 {strides = array<i32>} : memref<16x32xf32, #tpu.memory_space<vmem>>, vector<16x32xf32>,
    return
  }
  func.func @transform_0(%arg0: i32) -> (i32, i32) {
    %c0_i32 = arith.constant 0 : i32
    %c0_i32_0 = arith.constant 0 : i32
    %c0_i32_1 = arith.constant 0 : i32
    return %c0_i32, %c0_i32_0 : i32, i32
  }
  func.func @transform_1(%arg0: i32) -> (i32, i32, i32) {
    %c0_i32 = arith.constant 0 : i32
    %c0_i32_0 = arith.constant 0 : i32
    %c0_i32_1 = arith.constant 0 : i32
    %c0_i32_2 = arith.constant 0 : i32
    return %c0_i32, %c0_i32_0, %c0_i32_1 : i32, i32, i32
  }
  func.func @transform_2(%arg0: i32) -> (i32, i32, i32) {
    %c0_i32 = arith.constant 0 : i32
    %c0_i32_0 = arith.constant 0 : i32
    %c0_i32_1 = arith.constant 0 : i32
    %c0_i32_2 = arith.constant 0 : i32
    return %c0_i32, %c0_i32_0, %c0_i32_1 : i32, i32, i32
  }
  func.func @transform_3(%arg0: i32) -> (i32, i32, i32) {
    %c0_i32 = arith.constant 0 : i32
    %c0_i32_0 = arith.constant 0 : i32
    %c0_i32_1 = arith.constant 0 : i32
    %c0_i32_2 = arith.constant 0 : i32
    return %c0_i32, %c0_i32_0, %c0_i32_1 : i32, i32, i32
  }
  func.func @transform_4(%arg0: i32) -> (i32, i32, i32) {
    %c0_i32 = arith.constant 0 : i32
    %c0_i32_0 = arith.constant 0 : i32
    %c0_i32_1 = arith.constant 0 : i32
    %c0_i32_2 = arith.constant 0 : i32
    return %c0_i32, %c0_i32_0, %c0_i32_1 : i32, i32, i32
  }
  func.func @transform_5(%arg0: i32) -> (i32, i32, i32) {
    %c0_i32 = arith.constant 0 : i32
    %c0_i32_0 = arith.constant 0 : i32
    %c0_i32_1 = arith.constant 0 : i32
    %c0_i32_2 = arith.constant 0 : i32
    return %c0_i32, %c0_i32_0, %c0_i32_1 : i32, i32, i32
  }
  func.func @transform_6(%arg0: i32) -> (i32, i32, i32) {
    %c0_i32 = arith.constant 0 : i32
    %c0_i32_0 = arith.constant 0 : i32
    %c0_i32_1 = arith.constant 0 : i32
    %c0_i32_2 = arith.constant 0 : i32
    return %c0_i32, %c0_i32_0, %c0_i32_1 : i32, i32, i32
  }
  func.func @transform_7(%arg0: i32) -> (i32, i32, i32) {
    %c0_i32 = arith.constant 0 : i32
    %c0_i32_0 = arith.constant 0 : i32
    %c0_i32_1 = arith.constant 0 : i32
    %c0_i32_2 = arith.constant 0 : i32
    return %c0_i32, %c0_i32_0, %c0_i32_1 : i32, i32, i32
  }
  func.func @transform_8(%arg0: i32) -> (i32, i32, i32) {
    %c0_i32 = arith.constant 0 : i32
    %c0_i32_0 = arith.constant 0 : i32
    %c0_i32_1 = arith.constant 0 : i32
    %c0_i32_2 = arith.constant 0 : i32
    return %c0_i32, %c0_i32_0, %c0_i32_1 : i32, i32, i32
  }
  func.func @transform_9(%arg0: i32) -> (i32, i32) {
    %c0_i32 = arith.constant 0 : i32
    %c0_i32_0 = arith.constant 0 : i32
    %c0_i32_1 = arith.constant 0 : i32
    return %c0_i32, %c0_i32_0 : i32, i32
  }
}

</mosaic_0001>

<llo_original>
// kernel: tpu_custom_call.1
$region0: #{tpu_custom_call.1}
  #allocation0 [shape = 'u32[]', space=smem, size = 0x4, offset = 0x4, fixed_abs, tag = 'smem constant byte address 0x4 - core index']
  #allocation1 [shape = 'u32[144,128]{1,0:T(1,128)}', space=vmem, size = 0x12000, scoped, tag = 'internal scratch']
  %s0 = inlined_call_operand.vmem [shape: f32[16,32], index: 0, kind: input, shape index: {}]
  %s1 = inlined_call_operand.vmem [shape: f32[2,1,8], index: 1, kind: input, shape index: {}]
  %s2 = inlined_call_operand.vmem [shape: f32[2,32,96], index: 2, kind: input, shape index: {}]
  %s3 = inlined_call_operand.vmem [shape: f32[2,1,96], index: 3, kind: input, shape index: {}]
  %s4 = inlined_call_operand.vmem [shape: f32[2,32,32], index: 4, kind: input, shape index: {}]
  %s5 = inlined_call_operand.vmem [shape: f32[2,32,64], index: 5, kind: input, shape index: {}]
  %s6 = inlined_call_operand.vmem [shape: f32[2,1,64], index: 6, kind: input, shape index: {}]
  %s7 = inlined_call_operand.vmem [shape: f32[2,64,32], index: 7, kind: input, shape index: {}]
  %s8 = inlined_call_operand.vmem [shape: f32[2,6,32], index: 8, kind: input, shape index: {}]
  %s9 = inlined_call_operand.hbm [shape: f32[16,32], index: 9, kind: output, shape index: {}]
  %s10 = sld [smem:[#allocation0]]
  $region46: #{tpu_custom_call.1} parent=0
    _
  %s12 = ssub.s32 1, %s10
  %s13 = scalar_select 0, %s12, %s10
  $region1: #{tpu_custom_call.1} parent=0
    #allocation2 [shape = 'u8[8192]{0}', space=vmem, size = 0x2000, scoped, tag = 'output window, operand 0, single buffered']
    #allocation3 [shape = 's32[1]{0}', space=sflag, size = 0x4, scoped, tag = 'scoped memory for tpu_custom_call.1']
    %14 = vsyncpa [#allocation3], 0
    // Predicated region
    $region2: #{tpu_custom_call.1} parent=1 // pred_check
      _
    $region3: #{tpu_custom_call.1} parent=1 // pred_check_branch
      %16 = sbr.rel (0) target = $region5
    $region4: #{tpu_custom_call.1} parent=1 // pred_region
      _
    $region5: #{tpu_custom_call.1} parent=1 // pred_fallthru
      _
    // Predicated region
    $region6: #{tpu_custom_call.1} parent=1 // pred_check
      _
    $region7: #{tpu_custom_call.1} parent=1 // pred_check_branch
      %18 = sbr.rel (0) target = $region9
    $region8: #{tpu_custom_call.1} parent=1 // pred_region
      _
    $region9: #{tpu_custom_call.1} parent=1 // pred_fallthru
      _
    // Predicated region
    $region10: #{tpu_custom_call.1} parent=1 // pred_check
      _
    $region11: #{tpu_custom_call.1} parent=1 // pred_check_branch
      %20 = sbr.rel (0) target = $region13
    $region12: #{tpu_custom_call.1} parent=1 // pred_region
      _
    $region13: #{tpu_custom_call.1} parent=1 // pred_fallthru
      _
    // Predicated region
    $region14: #{tpu_custom_call.1} parent=1 // pred_check
      _
    $region15: #{tpu_custom_call.1} parent=1 // pred_check_branch
      %22 = sbr.rel (0) target = $region17
    $region16: #{tpu_custom_call.1} parent=1 // pred_region
      _
    $region17: #{tpu_custom_call.1} parent=1 // pred_fallthru
      _
    // Predicated region
    $region18: #{tpu_custom_call.1} parent=1 // pred_check
      _
    $region19: #{tpu_custom_call.1} parent=1 // pred_check_branch
      %24 = sbr.rel (0) target = $region21
    $region20: #{tpu_custom_call.1} parent=1 // pred_region
      _
    $region21: #{tpu_custom_call.1} parent=1 // pred_fallthru
      _
    // Predicated region
    $region22: #{tpu_custom_call.1} parent=1 // pred_check
      _
    $region23: #{tpu_custom_call.1} parent=1 // pred_check_branch
      %26 = sbr.rel (0) target = $region25
    $region24: #{tpu_custom_call.1} parent=1 // pred_region
      _
    $region25: #{tpu_custom_call.1} parent=1 // pred_fallthru
      _
    // Predicated region
    $region26: #{tpu_custom_call.1} parent=1 // pred_check
      _
    $region27: #{tpu_custom_call.1} parent=1 // pred_check_branch
      %28 = sbr.rel (0) target = $region29
    $region28: #{tpu_custom_call.1} parent=1 // pred_region
      _
    $region29: #{tpu_custom_call.1} parent=1 // pred_fallthru
      _
    // Predicated region
    $region30: #{tpu_custom_call.1} parent=1 // pred_check
      _
    $region31: #{tpu_custom_call.1} parent=1 // pred_check_branch
      %30 = sbr.rel (0) target = $region33
    $region32: #{tpu_custom_call.1} parent=1 // pred_region
      _
    $region33: #{tpu_custom_call.1} parent=1 // pred_fallthru
      _
    // Predicated region
    $region34: #{tpu_custom_call.1} parent=1 // pred_check
      _
    $region35: #{tpu_custom_call.1} parent=1 // pred_check_branch
      %32 = sbr.rel (0) target = $region37
    $region36: #{tpu_custom_call.1} parent=1 // pred_region
      _
    $region37: #{tpu_custom_call.1} parent=1 // pred_fallthru
      _
    %v33 = vld [vmem:[%s0] sm:$0xff]
    %v34 = vld [vmem:[%s0 + $0x8] sm:$0xff]
    %v35 = vld [vmem:[%s1] sm:$0x1]
    %v36 = vld [vmem:[%s1 + $0x1] sm:$0x1]
    %vm37 = vcmp.ne.f32.partialorder %v35, 0.0
    %vm38 = vcmp.ne.f32.partialorder %v36, 0.0
    %v39 = vsel %vm37, 1, 0
    %vm40 = vcmp.eq.s32.totalorder %v39, 1
    %v41 = vsel %vm38, 1, 0
    %vm42 = vcmp.eq.s32.totalorder %v41, 1
    %v43 = vld [vmem:[%s2] sm:$0xff]
    %v44 = vld [vmem:[%s2 + $0x8] sm:$0xff]
    %v45 = vld [vmem:[%s2 + $0x10] sm:$0xff]
    %v46 = vld [vmem:[%s2 + $0x18] sm:$0xff]
    %v47 = vld [vmem:[%s3] sm:$0x1]
    %v48 = vld [vmem:[%s4] sm:$0xff]
    %v49 = vld [vmem:[%s4 + $0x8] sm:$0xff]
    %v50 = vld [vmem:[%s4 + $0x10] sm:$0xff]
    %v51 = vld [vmem:[%s4 + $0x18] sm:$0xff]
    %v52 = vld [vmem:[%s5] sm:$0xff]
    %v53 = vld [vmem:[%s5 + $0x8] sm:$0xff]
    %v54 = vld [vmem:[%s5 + $0x10] sm:$0xff]
    %v55 = vld [vmem:[%s5 + $0x18] sm:$0xff]
    %v56 = vld [vmem:[%s6] sm:$0x1]
    %v57 = vld [vmem:[%s7] sm:$0xff]
    %v58 = vld [vmem:[%s7 + $0x8] sm:$0xff]
    %v59 = vld [vmem:[%s7 + $0x10] sm:$0xff]
    %v60 = vld [vmem:[%s7 + $0x18] sm:$0xff]
    %v61 = vld [vmem:[%s7 + $0x20] sm:$0xff]
    %v62 = vld [vmem:[%s7 + $0x28] sm:$0xff]
    %v63 = vld [vmem:[%s7 + $0x30] sm:$0xff]
    %v64 = vld [vmem:[%s7 + $0x38] sm:$0xff]
    %v65 = vld [vmem:[%s8] sm:$0x3f]
    %v67 = vlaneseq
    %v68 = vshrl.u32 %v67, 7
    %v69 = vsub.s32 0, %v68
    %v70 = vrot.slane %v47, %v69
    %vm72 = vcmask 261120
    %v74 = vsel %vm72, %v33, 0
    %v77 = vsel %vm72, %v34, 0
    %79 = vmatprep.subr.mxu0 0.0
    %80 = vmatpush1.msra.mxu0 0.0
    %81 = vmatprep.subr.mxu0 0.0
    %82 = vmatpush1.msra.mxu0 0.0
    %83 = vmatprep.subr.mxu0 0.0
    %84 = vmatpush1.msra.mxu0 0.0
    %85 = vmatprep.subr.mxu0 0.0
    %86 = vmatpush1.msra.mxu0 0.0
    %87 = vmatprep.subr.mxu0 0.0
    %88 = vmatpush1.msra.mxu0 0.0
    %89 = vmatprep.subr.mxu0 0.0
    %90 = vmatpush1.msra.mxu0 0.0
    %91 = vmatprep.subr.mxu0 0.0
    %92 = vmatpush1.msra.mxu0 0.0
    %93 = vmatprep.subr.mxu0 0.0
    %94 = vmatpush1.msra.mxu0 0.0
    %95 = vmatprep.subr.mxu0 0.0
    %96 = vmatpush1.msra.mxu0 0.0
    %97 = vmatprep.subr.mxu0 0.0
    %98 = vmatpush1.msra.mxu0 0.0
    %99 = vmatprep.subr.mxu0 0.0
    %100 = vmatpush1.msra.mxu0 0.0
    %101 = vmatprep.subr.mxu0 0.0
    %102 = vmatpush1.msra.mxu0 0.0
    %103 = vmatprep.subr.mxu0 0.0
    %104 = vmatpush1.msra.mxu0 %v46
    %105 = vmatprep.subr.mxu0 0.0
    %106 = vmatpush1.msra.mxu0 %v45
    %107 = vmatprep.subr.mxu0 0.0
    %108 = vmatpush1.msra.mxu0 %v44
    %109 = vmatprep.subr.mxu0 0.0
    %110 = vmatpush1.msra.mxu0 %v43
    %111 = vmatprep.subr.mxu0 0.0
    %112 = vmatpush2.msra.mxu0 0.0
    %113 = vmatprep.subr.mxu0 0.0
    %114 = vmatpush2.msra.mxu0 0.0
    %115 = vmatprep.subr.mxu0 0.0
    %116 = vmatpush2.msra.mxu0 0.0
    %117 = vmatprep.subr.mxu0 0.0
    %118 = vmatpush2.msra.mxu0 0.0
    %119 = vmatprep.subr.mxu0 0.0
    %120 = vmatpush2.msra.mxu0 0.0
    %121 = vmatprep.subr.mxu0 0.0
    %122 = vmatpush2.msra.mxu0 0.0
    %123 = vmatprep.subr.mxu0 0.0
    %124 = vmatpush2.msra.mxu0 0.0
    %125 = vmatprep.subr.mxu0 0.0
    %126 = vmatpush2.msra.mxu0 0.0
    %127 = vmatprep.subr.mxu0 0.0
    %128 = vmatpush2.msra.mxu0 0.0
    %129 = vmatprep.subr.mxu0 0.0
    %130 = vmatpush2.msra.mxu0 0.0
    %131 = vmatprep.subr.mxu0 0.0
    %132 = vmatpush2.msra.mxu0 0.0
    %133 = vmatprep.subr.mxu0 0.0
    %134 = vmatpush2.msra.mxu0 0.0
    %135 = vmatprep.subr.mxu0 0.0
    %136 = vmatpush2.msra.mxu0 0.0
    %137 = vmatprep.subr.mxu0 0.0
    %138 = vmatpush2.msra.mxu0 0.0
    %139 = vmatprep.subr.mxu0 0.0
    %140 = vmatpush2.msra.mxu0 0.0
    %141 = vmatprep.subr.mxu0 0.0
    %142 = vmatpush2.msra.mxu0 0.0
    %143 = vmatprep.mubr.f32.mxu0 0.0
    %144 = vmatmul.mubr.f32.gmra.mxu0 %v74
    %v145 = vpop.f32.mrf.mxu0
    %v146 = vadd.f32 %v70, %v145
    %v147 = vpop.f32.mrf.mxu0
    %148 = vmatprep.mubr.f32.mxu0 0.0
    %149 = vmatmul.mubr.f32.gmra.mxu0 %v77
    %v150 = vpop.f32.mrf.mxu0
    %v151 = vadd.f32 %v70, %v150
    %v152 = vpop.f32.mrf.mxu0
    %153 = vdwg.mxu0
    %155 = vrot.lane.b32.xlu0 %v146, 120
    %v156 = vpop.permute.xlu0 %155
    %157 = vrot.lane.b32.xlu0 %v146, 112
    %v158 = vpop.permute.xlu0 %157
    %159 = vrot.lane.b32.xlu0 %v146, 104
    %v160 = vpop.permute.xlu0 %159
    %162 = vrot.lane.b32.xlu0 %v151, 120
    %v163 = vpop.permute.xlu0 %162
    %164 = vrot.lane.b32.xlu0 %v151, 112
    %v165 = vpop.permute.xlu0 %164
    %166 = vrot.lane.b32.xlu0 %v151, 104
    %v167 = vpop.permute.xlu0 %166
    %168 = vrot.lane.b32.xlu0 %v146, 96
    %v169 = vpop.permute.xlu0 %168
    %vm170 = vcmask 64512
    %v171 = vsel %vm170, %v146, 0
    %v173 = vsel %vm170, %v169, 0
    %175 = vmatprep.subr.mxu0 0.0
    %176 = vmatpush1.xpose.msra.mxu0 0.0
    %177 = vmatprep.subr.mxu0 0.0
    %178 = vmatpush1.xpose.msra.mxu0 0.0
    %179 = vmatprep.subr.mxu0 0.0
    %180 = vmatpush1.xpose.msra.mxu0 0.0
    %181 = vmatprep.subr.mxu0 0.0
    %182 = vmatpush1.xpose.msra.mxu0 0.0
    %183 = vmatprep.subr.mxu0 0.0
    %184 = vmatpush1.xpose.msra.mxu0 0.0
    %185 = vmatprep.subr.mxu0 0.0
    %186 = vmatpush1.xpose.msra.mxu0 0.0
    %187 = vmatprep.subr.mxu0 0.0
    %188 = vmatpush1.xpose.msra.mxu0 0.0
    %189 = vmatprep.subr.mxu0 0.0
    %190 = vmatpush1.xpose.msra.mxu0 0.0
    %191 = vmatprep.subr.mxu0 0.0
    %192 = vmatpush1.xpose.msra.mxu0 0.0
    %193 = vmatprep.subr.mxu0 0.0
    %194 = vmatpush1.xpose.msra.mxu0 0.0
    %195 = vmatprep.subr.mxu0 0.0
    %196 = vmatpush1.xpose.msra.mxu0 0.0
    %197 = vmatprep.subr.mxu0 0.0
    %198 = vmatpush1.xpose.msra.mxu0 0.0
    %199 = vmatprep.subr.mxu0 0.0
    %200 = vmatpush1.xpose.msra.mxu0 0.0
    %201 = vmatprep.subr.mxu0 0.0
    %202 = vmatpush1.xpose.msra.mxu0 0.0
    %203 = vmatprep.subr.mxu0 0.0
    %204 = vmatpush1.xpose.msra.mxu0 0.0
    %205 = vmatprep.subr.mxu0 0.0
    %206 = vmatpush1.xpose.msra.mxu0 %v173
    %207 = vmatprep.subr.mxu0 0.0
    %208 = vmatpush2.xpose.msra.mxu0 0.0
    %209 = vmatprep.subr.mxu0 0.0
    %210 = vmatpush2.xpose.msra.mxu0 0.0
    %211 = vmatprep.subr.mxu0 0.0
    %212 = vmatpush2.xpose.msra.mxu0 0.0
    %213 = vmatprep.subr.mxu0 0.0
    %214 = vmatpush2.xpose.msra.mxu0 0.0
    %215 = vmatprep.subr.mxu0 0.0
    %216 = vmatpush2.xpose.msra.mxu0 0.0
    %217 = vmatprep.subr.mxu0 0.0
    %218 = vmatpush2.xpose.msra.mxu0 0.0
    %219 = vmatprep.subr.mxu0 0.0
    %220 = vmatpush2.xpose.msra.mxu0 0.0
    %221 = vmatprep.subr.mxu0 0.0
    %222 = vmatpush2.xpose.msra.mxu0 0.0
    %223 = vmatprep.subr.mxu0 0.0
    %224 = vmatpush2.xpose.msra.mxu0 0.0
    %225 = vmatprep.subr.mxu0 0.0
    %226 = vmatpush2.xpose.msra.mxu0 0.0
    %227 = vmatprep.subr.mxu0 0.0
    %228 = vmatpush2.xpose.msra.mxu0 0.0
    %229 = vmatprep.subr.mxu0 0.0
    %230 = vmatpush2.xpose.msra.mxu0 0.0
    %231 = vmatprep.subr.mxu0 0.0
    %232 = vmatpush2.xpose.msra.mxu0 0.0
    %233 = vmatprep.subr.mxu0 0.0
    %234 = vmatpush2.xpose.msra.mxu0 0.0
    %235 = vmatprep.subr.mxu0 0.0
    %236 = vmatpush2.xpose.msra.mxu0 0.0
    %237 = vmatprep.subr.mxu0 0.0
    %238 = vmatpush2.xpose.msra.mxu0 0.0
    %239 = vmatprep.mubr.f32.mxu0 0.0
    %240 = vmatmul.mubr.f32.gmra.mxu0 %v171
    %v241 = vpop.f32.mrf.mxu0
    %v242 = vadd.f32 0.0, %v241
    %v243 = vpop.f32.mrf.mxu0
    %244 = vdwg.mxu0
    %245 = vrot.lane.b32.xlu0 %v156, 96
    %v246 = vpop.permute.xlu0 %245
    %v247 = vsel %vm170, %v156, 0
    %v249 = vsel %vm170, %v246, 0
    %251 = vmatprep.subr.mxu0 0.0
    %252 = vmatpush1.xpose.msra.mxu0 0.0
    %253 = vmatprep.subr.mxu0 0.0
    %254 = vmatpush1.xpose.msra.mxu0 0.0
    %255 = vmatprep.subr.mxu0 0.0
    %256 = vmatpush1.xpose.msra.mxu0 0.0
    %257 = vmatprep.subr.mxu0 0.0
    %258 = vmatpush1.xpose.msra.mxu0 0.0
    %259 = vmatprep.subr.mxu0 0.0
    %260 = vmatpush1.xpose.msra.mxu0 0.0
    %261 = vmatprep.subr.mxu0 0.0
    %262 = vmatpush1.xpose.msra.mxu0 0.0
    %263 = vmatprep.subr.mxu0 0.0
    %264 = vmatpush1.xpose.msra.mxu0 0.0
    %265 = vmatprep.subr.mxu0 0.0
    %266 = vmatpush1.xpose.msra.mxu0 0.0
    %267 = vmatprep.subr.mxu0 0.0
    %268 = vmatpush1.xpose.msra.mxu0 0.0
    %269 = vmatprep.subr.mxu0 0.0
    %270 = vmatpush1.xpose.msra.mxu0 0.0
    %271 = vmatprep.subr.mxu0 0.0
    %272 = vmatpush1.xpose.msra.mxu0 0.0
    %273 = vmatprep.subr.mxu0 0.0
    %274 = vmatpush1.xpose.msra.mxu0 0.0
    %275 = vmatprep.subr.mxu0 0.0
    %276 = vmatpush1.xpose.msra.mxu0 0.0
    %277 = vmatprep.subr.mxu0 0.0
    %278 = vmatpush1.xpose.msra.mxu0 0.0
    %279 = vmatprep.subr.mxu0 0.0
    %280 = vmatpush1.xpose.msra.mxu0 0.0
    %281 = vmatprep.subr.mxu0 0.0
    %282 = vmatpush1.xpose.msra.mxu0 %v249
    %283 = vmatprep.subr.mxu0 0.0
    %284 = vmatpush2.xpose.msra.mxu0 0.0
    %285 = vmatprep.subr.mxu0 0.0
    %286 = vmatpush2.xpose.msra.mxu0 0.0
    %287 = vmatprep.subr.mxu0 0.0
    %288 = vmatpush2.xpose.msra.mxu0 0.0
    %289 = vmatprep.subr.mxu0 0.0
    %290 = vmatpush2.xpose.msra.mxu0 0.0
    %291 = vmatprep.subr.mxu0 0.0
    %292 = vmatpush2.xpose.msra.mxu0 0.0
    %293 = vmatprep.subr.mxu0 0.0
    %294 = vmatpush2.xpose.msra.mxu0 0.0
    %295 = vmatprep.subr.mxu0 0.0
    %296 = vmatpush2.xpose.msra.mxu0 0.0
    %297 = vmatprep.subr.mxu0 0.0
    %298 = vmatpush2.xpose.msra.mxu0 0.0
    %299 = vmatprep.subr.mxu0 0.0
    %300 = vmatpush2.xpose.msra.mxu0 0.0
    %301 = vmatprep.subr.mxu0 0.0
    %302 = vmatpush2.xpose.msra.mxu0 0.0
    %303 = vmatprep.subr.mxu0 0.0
    %304 = vmatpush2.xpose.msra.mxu0 0.0
    %305 = vmatprep.subr.mxu0 0.0
    %306 = vmatpush2.xpose.msra.mxu0 0.0
    %307 = vmatprep.subr.mxu0 0.0
    %308 = vmatpush2.xpose.msra.mxu0 0.0
    %309 = vmatprep.subr.mxu0 0.0
    %310 = vmatpush2.xpose.msra.mxu0 0.0
    %311 = vmatprep.subr.mxu0 0.0
    %312 = vmatpush2.xpose.msra.mxu0 0.0
    %313 = vmatprep.subr.mxu0 0.0
    %314 = vmatpush2.xpose.msra.mxu0 0.0
    %315 = vmatprep.mubr.f32.mxu0 0.0
    %316 = vmatmul.mubr.f32.gmra.mxu0 %v247
    %v317 = vpop.f32.mrf.mxu0
    %v318 = vadd.f32 0.0, %v317
    %v319 = vpop.f32.mrf.mxu0
    %320 = vdwg.mxu0
    %321 = vrot.lane.b32.xlu0 %v158, 96
    %v322 = vpop.permute.xlu0 %321
    %v323 = vsel %vm170, %v158, 0
    %v325 = vsel %vm170, %v322, 0
    %327 = vmatprep.subr.mxu0 0.0
    %328 = vmatpush1.xpose.msra.mxu0 0.0
    %329 = vmatprep.subr.mxu0 0.0
    %330 = vmatpush1.xpose.msra.mxu0 0.0
    %331 = vmatprep.subr.mxu0 0.0
    %332 = vmatpush1.xpose.msra.mxu0 0.0
    %333 = vmatprep.subr.mxu0 0.0
    %334 = vmatpush1.xpose.msra.mxu0 0.0
    %335 = vmatprep.subr.mxu0 0.0
    %336 = vmatpush1.xpose.msra.mxu0 0.0
    %337 = vmatprep.subr.mxu0 0.0
    %338 = vmatpush1.xpose.msra.mxu0 0.0
    %339 = vmatprep.subr.mxu0 0.0
    %340 = vmatpush1.xpose.msra.mxu0 0.0
    %341 = vmatprep.subr.mxu0 0.0
    %342 = vmatpush1.xpose.msra.mxu0 0.0
    %343 = vmatprep.subr.mxu0 0.0
    %344 = vmatpush1.xpose.msra.mxu0 0.0
    %345 = vmatprep.subr.mxu0 0.0
    %346 = vmatpush1.xpose.msra.mxu0 0.0
    %347 = vmatprep.subr.mxu0 0.0
    %348 = vmatpush1.xpose.msra.mxu0 0.0
    %349 = vmatprep.subr.mxu0 0.0
    %350 = vmatpush1.xpose.msra.mxu0 0.0
    %351 = vmatprep.subr.mxu0 0.0
    %352 = vmatpush1.xpose.msra.mxu0 0.0
    %353 = vmatprep.subr.mxu0 0.0
    %354 = vmatpush1.xpose.msra.mxu0 0.0
    %355 = vmatprep.subr.mxu0 0.0
    %356 = vmatpush1.xpose.msra.mxu0 0.0
    %357 = vmatprep.subr.mxu0 0.0
    %358 = vmatpush1.xpose.msra.mxu0 %v325
    %359 = vmatprep.subr.mxu0 0.0
    %360 = vmatpush2.xpose.msra.mxu0 0.0
    %361 = vmatprep.subr.mxu0 0.0
    %362 = vmatpush2.xpose.msra.mxu0 0.0
    %363 = vmatprep.subr.mxu0 0.0
    %364 = vmatpush2.xpose.msra.mxu0 0.0
    %365 = vmatprep.subr.mxu0 0.0
    %366 = vmatpush2.xpose.msra.mxu0 0.0
    %367 = vmatprep.subr.mxu0 0.0
    %368 = vmatpush2.xpose.msra.mxu0 0.0
    %369 = vmatprep.subr.mxu0 0.0
    %370 = vmatpush2.xpose.msra.mxu0 0.0
    %371 = vmatprep.subr.mxu0 0.0
    %372 = vmatpush2.xpose.msra.mxu0 0.0
    %373 = vmatprep.subr.mxu0 0.0
    %374 = vmatpush2.xpose.msra.mxu0 0.0
    %375 = vmatprep.subr.mxu0 0.0
    %376 = vmatpush2.xpose.msra.mxu0 0.0
    %377 = vmatprep.subr.mxu0 0.0
    %378 = vmatpush2.xpose.msra.mxu0 0.0
    %379 = vmatprep.subr.mxu0 0.0
    %380 = vmatpush2.xpose.msra.mxu0 0.0
    %381 = vmatprep.subr.mxu0 0.0
    %382 = vmatpush2.xpose.msra.mxu0 0.0
    %383 = vmatprep.subr.mxu0 0.0
    %384 = vmatpush2.xpose.msra.mxu0 0.0
    %385 = vmatprep.subr.mxu0 0.0
    %386 = vmatpush2.xpose.msra.mxu0 0.0
    %387 = vmatprep.subr.mxu0 0.0
    %388 = vmatpush2.xpose.msra.mxu0 0.0
    %389 = vmatprep.subr.mxu0 0.0
    %390 = vmatpush2.xpose.msra.mxu0 0.0
    %391 = vmatprep.mubr.f32.mxu0 0.0
    %392 = vmatmul.mubr.f32.gmra.mxu0 %v323
    %v393 = vpop.f32.mrf.mxu0
    %v394 = vadd.f32 0.0, %v393
    %v395 = vpop.f32.mrf.mxu0
    %396 = vdwg.mxu0
    %397 = vrot.lane.b32.xlu0 %v160, 96
    %v398 = vpop.permute.xlu0 %397
    %v399 = vsel %vm170, %v160, 0
    %v401 = vsel %vm170, %v398, 0
    %403 = vmatprep.subr.mxu0 0.0
    %404 = vmatpush1.xpose.msra.mxu0 0.0
    %405 = vmatprep.subr.mxu0 0.0
    %406 = vmatpush1.xpose.msra.mxu0 0.0
    %407 = vmatprep.subr.mxu0 0.0
    %408 = vmatpush1.xpose.msra.mxu0 0.0
    %409 = vmatprep.subr.mxu0 0.0
    %410 = vmatpush1.xpose.msra.mxu0 0.0
    %411 = vmatprep.subr.mxu0 0.0
    %412 = vmatpush1.xpose.msra.mxu0 0.0
    %413 = vmatprep.subr.mxu0 0.0
    %414 = vmatpush1.xpose.msra.mxu0 0.0
    %415 = vmatprep.subr.mxu0 0.0
    %416 = vmatpush1.xpose.msra.mxu0 0.0
    %417 = vmatprep.subr.mxu0 0.0
    %418 = vmatpush1.xpose.msra.mxu0 0.0
    %419 = vmatprep.subr.mxu0 0.0
    %420 = vmatpush1.xpose.msra.mxu0 0.0
    %421 = vmatprep.subr.mxu0 0.0
    %422 = vmatpush1.xpose.msra.mxu0 0.0
    %423 = vmatprep.subr.mxu0 0.0
    %424 = vmatpush1.xpose.msra.mxu0 0.0
    %425 = vmatprep.subr.mxu0 0.0
    %426 = vmatpush1.xpose.msra.mxu0 0.0
    %427 = vmatprep.subr.mxu0 0.0
    %428 = vmatpush1.xpose.msra.mxu0 0.0
    %429 = vmatprep.subr.mxu0 0.0
    %430 = vmatpush1.xpose.msra.mxu0 0.0
    %431 = vmatprep.subr.mxu0 0.0
    %432 = vmatpush1.xpose.msra.mxu0 0.0
    %433 = vmatprep.subr.mxu0 0.0
    %434 = vmatpush1.xpose.msra.mxu0 %v401
    %435 = vmatprep.subr.mxu0 0.0
    %436 = vmatpush2.xpose.msra.mxu0 0.0
    %437 = vmatprep.subr.mxu0 0.0
    %438 = vmatpush2.xpose.msra.mxu0 0.0
    %439 = vmatprep.subr.mxu0 0.0
    %440 = vmatpush2.xpose.msra.mxu0 0.0
    %441 = vmatprep.subr.mxu0 0.0
    %442 = vmatpush2.xpose.msra.mxu0 0.0
    %443 = vmatprep.subr.mxu0 0.0
    %444 = vmatpush2.xpose.msra.mxu0 0.0
    %445 = vmatprep.subr.mxu0 0.0
    %446 = vmatpush2.xpose.msra.mxu0 0.0
    %447 = vmatprep.subr.mxu0 0.0
    %448 = vmatpush2.xpose.msra.mxu0 0.0
    %449 = vmatprep.subr.mxu0 0.0
    %450 = vmatpush2.xpose.msra.mxu0 0.0
    %451 = vmatprep.subr.mxu0 0.0
    %452 = vmatpush2.xpose.msra.mxu0 0.0
    %453 = vmatprep.subr.mxu0 0.0
    %454 = vmatpush2.xpose.msra.mxu0 0.0
    %455 = vmatprep.subr.mxu0 0.0
    %456 = vmatpush2.xpose.msra.mxu0 0.0
    %457 = vmatprep.subr.mxu0 0.0
    %458 = vmatpush2.xpose.msra.mxu0 0.0
    %459 = vmatprep.subr.mxu0 0.0
    %460 = vmatpush2.xpose.msra.mxu0 0.0
    %461 = vmatprep.subr.mxu0 0.0
    %462 = vmatpush2.xpose.msra.mxu0 0.0
    %463 = vmatprep.subr.mxu0 0.0
    %464 = vmatpush2.xpose.msra.mxu0 0.0
    %465 = vmatprep.subr.mxu0 0.0
    %466 = vmatpush2.xpose.msra.mxu0 0.0
    %467 = vmatprep.mubr.f32.mxu0 0.0
    %468 = vmatmul.mubr.f32.gmra.mxu0 %v399
    %v469 = vpop.f32.mrf.mxu0
    %v470 = vadd.f32 0.0, %v469
    %v471 = vpop.f32.mrf.mxu0
    %472 = vdwg.mxu0
    %473 = vrot.lane.b32.xlu0 %v151, 96
    %v474 = vpop.permute.xlu0 %473
    %v475 = vsel %vm170, %v151, 0
    %v477 = vsel %vm170, %v474, 0
    %479 = vmatprep.subr.mxu0 0.0
    %480 = vmatpush1.xpose.msra.mxu0 0.0
    %481 = vmatprep.subr.mxu0 0.0
    %482 = vmatpush1.xpose.msra.mxu0 0.0
    %483 = vmatprep.subr.mxu0 0.0
    %484 = vmatpush1.xpose.msra.mxu0 0.0
    %485 = vmatprep.subr.mxu0 0.0
    %486 = vmatpush1.xpose.msra.mxu0 0.0
    %487 = vmatprep.subr.mxu0 0.0
    %488 = vmatpush1.xpose.msra.mxu0 0.0
    %489 = vmatprep.subr.mxu0 0.0
    %490 = vmatpush1.xpose.msra.mxu0 0.0
    %491 = vmatprep.subr.mxu0 0.0
    %492 = vmatpush1.xpose.msra.mxu0 0.0
    %493 = vmatprep.subr.mxu0 0.0
    %494 = vmatpush1.xpose.msra.mxu0 0.0
    %495 = vmatprep.subr.mxu0 0.0
    %496 = vmatpush1.xpose.msra.mxu0 0.0
    %497 = vmatprep.subr.mxu0 0.0
    %498 = vmatpush1.xpose.msra.mxu0 0.0
    %499 = vmatprep.subr.mxu0 0.0
    %500 = vmatpush1.xpose.msra.mxu0 0.0
    %501 = vmatprep.subr.mxu0 0.0
    %502 = vmatpush1.xpose.msra.mxu0 0.0
    %503 = vmatprep.subr.mxu0 0.0
    %504 = vmatpush1.xpose.msra.mxu0 0.0
    %505 = vmatprep.subr.mxu0 0.0
    %506 = vmatpush1.xpose.msra.mxu0 0.0
    %507 = vmatprep.subr.mxu0 0.0
    %508 = vmatpush1.xpose.msra.mxu0 0.0
    %509 = vmatprep.subr.mxu0 0.0
    %510 = vmatpush1.xpose.msra.mxu0 %v477
    %511 = vmatprep.subr.mxu0 0.0
    %512 = vmatpush2.xpose.msra.mxu0 0.0
    %513 = vmatprep.subr.mxu0 0.0
    %514 = vmatpush2.xpose.msra.mxu0 0.0
    %515 = vmatprep.subr.mxu0 0.0
    %516 = vmatpush2.xpose.msra.mxu0 0.0
    %517 = vmatprep.subr.mxu0 0.0
    %518 = vmatpush2.xpose.msra.mxu0 0.0
    %519 = vmatprep.subr.mxu0 0.0
    %520 = vmatpush2.xpose.msra.mxu0 0.0
    %521 = vmatprep.subr.mxu0 0.0
    %522 = vmatpush2.xpose.msra.mxu0 0.0
    %523 = vmatprep.subr.mxu0 0.0
    %524 = vmatpush2.xpose.msra.mxu0 0.0
    %525 = vmatprep.subr.mxu0 0.0
    %526 = vmatpush2.xpose.msra.mxu0 0.0
    %527 = vmatprep.subr.mxu0 0.0
    %528 = vmatpush2.xpose.msra.mxu0 0.0
    %529 = vmatprep.subr.mxu0 0.0
    %530 = vmatpush2.xpose.msra.mxu0 0.0
    %531 = vmatprep.subr.mxu0 0.0
    %532 = vmatpush2.xpose.msra.mxu0 0.0
    %533 = vmatprep.subr.mxu0 0.0
    %534 = vmatpush2.xpose.msra.mxu0 0.0
    %535 = vmatprep.subr.mxu0 0.0
    %536 = vmatpush2.xpose.msra.mxu0 0.0
    %537 = vmatprep.subr.mxu0 0.0
    %538 = vmatpush2.xpose.msra.mxu0 0.0
    %539 = vmatprep.subr.mxu0 0.0
    %540 = vmatpush2.xpose.msra.mxu0 0.0
    %541 = vmatprep.subr.mxu0 0.0
    %542 = vmatpush2.xpose.msra.mxu0 0.0
    %543 = vmatprep.mubr.f32.mxu0 0.0
    %544 = vmatmul.mubr.f32.gmra.mxu0 %v475
    %v545 = vpop.f32.mrf.mxu0
    %v546 = vadd.f32 0.0, %v545
    %v547 = vpop.f32.mrf.mxu0
    %548 = vdwg.mxu0
    %549 = vrot.lane.b32.xlu0 %v163, 96
    %v550 = vpop.permute.xlu0 %549
    %v551 = vsel %vm170, %v163, 0
    %v553 = vsel %vm170, %v550, 0
    %555 = vmatprep.subr.mxu0 0.0
    %556 = vmatpush1.xpose.msra.mxu0 0.0
    %557 = vmatprep.subr.mxu0 0.0
    %558 = vmatpush1.xpose.msra.mxu0 0.0
    %559 = vmatprep.subr.mxu0 0.0
    %560 = vmatpush1.xpose.msra.mxu0 0.0
    %561 = vmatprep.subr.mxu0 0.0
    %562 = vmatpush1.xpose.msra.mxu0 0.0
    %563 = vmatprep.subr.mxu0 0.0
    %564 = vmatpush1.xpose.msra.mxu0 0.0
    %565 = vmatprep.subr.mxu0 0.0
    %566 = vmatpush1.xpose.msra.mxu0 0.0
    %567 = vmatprep.subr.mxu0 0.0
    %568 = vmatpush1.xpose.msra.mxu0 0.0
    %569 = vmatprep.subr.mxu0 0.0
    %570 = vmatpush1.xpose.msra.mxu0 0.0
    %571 = vmatprep.subr.mxu0 0.0
    %572 = vmatpush1.xpose.msra.mxu0 0.0
    %573 = vmatprep.subr.mxu0 0.0
    %574 = vmatpush1.xpose.msra.mxu0 0.0
    %575 = vmatprep.subr.mxu0 0.0
    %576 = vmatpush1.xpose.msra.mxu0 0.0
    %577 = vmatprep.subr.mxu0 0.0
    %578 = vmatpush1.xpose.msra.mxu0 0.0
    %579 = vmatprep.subr.mxu0 0.0
    %580 = vmatpush1.xpose.msra.mxu0 0.0
    %581 = vmatprep.subr.mxu0 0.0
    %582 = vmatpush1.xpose.msra.mxu0 0.0
    %583 = vmatprep.subr.mxu0 0.0
    %584 = vmatpush1.xpose.msra.mxu0 0.0
    %585 = vmatprep.subr.mxu0 0.0
    %586 = vmatpush1.xpose.msra.mxu0 %v553
    %587 = vmatprep.subr.mxu0 0.0
    %588 = vmatpush2.xpose.msra.mxu0 0.0
    %589 = vmatprep.subr.mxu0 0.0
    %590 = vmatpush2.xpose.msra.mxu0 0.0
    %591 = vmatprep.subr.mxu0 0.0
    %592 = vmatpush2.xpose.msra.mxu0 0.0
    %593 = vmatprep.subr.mxu0 0.0
    %594 = vmatpush2.xpose.msra.mxu0 0.0
    %595 = vmatprep.subr.mxu0 0.0
    %596 = vmatpush2.xpose.msra.mxu0 0.0
    %597 = vmatprep.subr.mxu0 0.0
    %598 = vmatpush2.xpose.msra.mxu0 0.0
    %599 = vmatprep.subr.mxu0 0.0
    %600 = vmatpush2.xpose.msra.mxu0 0.0
    %601 = vmatprep.subr.mxu0 0.0
    %602 = vmatpush2.xpose.msra.mxu0 0.0
    %603 = vmatprep.subr.mxu0 0.0
    %604 = vmatpush2.xpose.msra.mxu0 0.0
    %605 = vmatprep.subr.mxu0 0.0
    %606 = vmatpush2.xpose.msra.mxu0 0.0
    %607 = vmatprep.subr.mxu0 0.0
    %608 = vmatpush2.xpose.msra.mxu0 0.0
    %609 = vmatprep.subr.mxu0 0.0
    %610 = vmatpush2.xpose.msra.mxu0 0.0
    %611 = vmatprep.subr.mxu0 0.0
    %612 = vmatpush2.xpose.msra.mxu0 0.0
    %613 = vmatprep.subr.mxu0 0.0
    %614 = vmatpush2.xpose.msra.mxu0 0.0
    %615 = vmatprep.subr.mxu0 0.0
    %616 = vmatpush2.xpose.msra.mxu0 0.0
    %617 = vmatprep.subr.mxu0 0.0
    %618 = vmatpush2.xpose.msra.mxu0 0.0
    %619 = vmatprep.mubr.f32.mxu0 0.0
    %620 = vmatmul.mubr.f32.gmra.mxu0 %v551
    %v621 = vpop.f32.mrf.mxu0
    %v622 = vadd.f32 0.0, %v621
    %v623 = vpop.f32.mrf.mxu0
    %624 = vdwg.mxu0
    %625 = vrot.lane.b32.xlu0 %v165, 96
    %v626 = vpop.permute.xlu0 %625
    %v627 = vsel %vm170, %v165, 0
    %v629 = vsel %vm170, %v626, 0
    %631 = vmatprep.subr.mxu0 0.0
    %632 = vmatpush1.xpose.msra.mxu0 0.0
    %633 = vmatprep.subr.mxu0 0.0
    %634 = vmatpush1.xpose.msra.mxu0 0.0
    %635 = vmatprep.subr.mxu0 0.0
    %636 = vmatpush1.xpose.msra.mxu0 0.0
    %637 = vmatprep.subr.mxu0 0.0
    %638 = vmatpush1.xpose.msra.mxu0 0.0
    %639 = vmatprep.subr.mxu0 0.0
    %640 = vmatpush1.xpose.msra.mxu0 0.0
    %641 = vmatprep.subr.mxu0 0.0
    %642 = vmatpush1.xpose.msra.mxu0 0.0
    %643 = vmatprep.subr.mxu0 0.0
    %644 = vmatpush1.xpose.msra.mxu0 0.0
    %645 = vmatprep.subr.mxu0 0.0
    %646 = vmatpush1.xpose.msra.mxu0 0.0
    %647 = vmatprep.subr.mxu0 0.0
    %648 = vmatpush1.xpose.msra.mxu0 0.0
    %649 = vmatprep.subr.mxu0 0.0
    %650 = vmatpush1.xpose.msra.mxu0 0.0
    %651 = vmatprep.subr.mxu0 0.0
    %652 = vmatpush1.xpose.msra.mxu0 0.0
    %653 = vmatprep.subr.mxu0 0.0
    %654 = vmatpush1.xpose.msra.mxu0 0.0
    %655 = vmatprep.subr.mxu0 0.0
    %656 = vmatpush1.xpose.msra.mxu0 0.0
    %657 = vmatprep.subr.mxu0 0.0
    %658 = vmatpush1.xpose.msra.mxu0 0.0
    %659 = vmatprep.subr.mxu0 0.0
    %660 = vmatpush1.xpose.msra.mxu0 0.0
    %661 = vmatprep.subr.mxu0 0.0
    %662 = vmatpush1.xpose.msra.mxu0 %v629
    %663 = vmatprep.subr.mxu0 0.0
    %664 = vmatpush2.xpose.msra.mxu0 0.0
    %665 = vmatprep.subr.mxu0 0.0
    %666 = vmatpush2.xpose.msra.mxu0 0.0
    %667 = vmatprep.subr.mxu0 0.0
    %668 = vmatpush2.xpose.msra.mxu0 0.0
    %669 = vmatprep.subr.mxu0 0.0
    %670 = vmatpush2.xpose.msra.mxu0 0.0
    %671 = vmatprep.subr.mxu0 0.0
    %672 = vmatpush2.xpose.msra.mxu0 0.0
    %673 = vmatprep.subr.mxu0 0.0
    %674 = vmatpush2.xpose.msra.mxu0 0.0
    %675 = vmatprep.subr.mxu0 0.0
    %676 = vmatpush2.xpose.msra.mxu0 0.0
    %677 = vmatprep.subr.mxu0 0.0
    %678 = vmatpush2.xpose.msra.mxu0 0.0
    %679 = vmatprep.subr.mxu0 0.0
    %680 = vmatpush2.xpose.msra.mxu0 0.0
    %681 = vmatprep.subr.mxu0 0.0
    %682 = vmatpush2.xpose.msra.mxu0 0.0
    %683 = vmatprep.subr.mxu0 0.0
    %684 = vmatpush2.xpose.msra.mxu0 0.0
    %685 = vmatprep.subr.mxu0 0.0
    %686 = vmatpush2.xpose.msra.mxu0 0.0
    %687 = vmatprep.subr.mxu0 0.0
    %688 = vmatpush2.xpose.msra.mxu0 0.0
    %689 = vmatprep.subr.mxu0 0.0
    %690 = vmatpush2.xpose.msra.mxu0 0.0
    %691 = vmatprep.subr.mxu0 0.0
    %692 = vmatpush2.xpose.msra.mxu0 0.0
    %693 = vmatprep.subr.mxu0 0.0
    %694 = vmatpush2.xpose.msra.mxu0 0.0
    %695 = vmatprep.mubr.f32.mxu0 0.0
    %696 = vmatmul.mubr.f32.gmra.mxu0 %v627
    %v697 = vpop.f32.mrf.mxu0
    %v698 = vadd.f32 0.0, %v697
    %v699 = vpop.f32.mrf.mxu0
    %700 = vdwg.mxu0
    %701 = vrot.lane.b32.xlu0 %v167, 96
    %v702 = vpop.permute.xlu0 %701
    %v703 = vsel %vm170, %v167, 0
    %v705 = vsel %vm170, %v702, 0
    %707 = vmatprep.subr.mxu0 0.0
    %708 = vmatpush1.xpose.msra.mxu0 0.0
    %709 = vmatprep.subr.mxu0 0.0
    %710 = vmatpush1.xpose.msra.mxu0 0.0
    %711 = vmatprep.subr.mxu0 0.0
    %712 = vmatpush1.xpose.msra.mxu0 0.0
    %713 = vmatprep.subr.mxu0 0.0
    %714 = vmatpush1.xpose.msra.mxu0 0.0
    %715 = vmatprep.subr.mxu0 0.0
    %716 = vmatpush1.xpose.msra.mxu0 0.0
    %717 = vmatprep.subr.mxu0 0.0
    %718 = vmatpush1.xpose.msra.mxu0 0.0
    %719 = vmatprep.subr.mxu0 0.0
    %720 = vmatpush1.xpose.msra.mxu0 0.0
    %721 = vmatprep.subr.mxu0 0.0
    %722 = vmatpush1.xpose.msra.mxu0 0.0
    %723 = vmatprep.subr.mxu0 0.0
    %724 = vmatpush1.xpose.msra.mxu0 0.0
    %725 = vmatprep.subr.mxu0 0.0
    %726 = vmatpush1.xpose.msra.mxu0 0.0
    %727 = vmatprep.subr.mxu0 0.0
    %728 = vmatpush1.xpose.msra.mxu0 0.0
    %729 = vmatprep.subr.mxu0 0.0
    %730 = vmatpush1.xpose.msra.mxu0 0.0
    %731 = vmatprep.subr.mxu0 0.0
    %732 = vmatpush1.xpose.msra.mxu0 0.0
    %733 = vmatprep.subr.mxu0 0.0
    %734 = vmatpush1.xpose.msra.mxu0 0.0
    %735 = vmatprep.subr.mxu0 0.0
    %736 = vmatpush1.xpose.msra.mxu0 0.0
    %737 = vmatprep.subr.mxu0 0.0
    %738 = vmatpush1.xpose.msra.mxu0 %v705
    %739 = vmatprep.subr.mxu0 0.0
    %740 = vmatpush2.xpose.msra.mxu0 0.0
    %741 = vmatprep.subr.mxu0 0.0
    %742 = vmatpush2.xpose.msra.mxu0 0.0
    %743 = vmatprep.subr.mxu0 0.0
    %744 = vmatpush2.xpose.msra.mxu0 0.0
    %745 = vmatprep.subr.mxu0 0.0
    %746 = vmatpush2.xpose.msra.mxu0 0.0
    %747 = vmatprep.subr.mxu0 0.0
    %748 = vmatpush2.xpose.msra.mxu0 0.0
    %749 = vmatprep.subr.mxu0 0.0
    %750 = vmatpush2.xpose.msra.mxu0 0.0
    %751 = vmatprep.subr.mxu0 0.0
    %752 = vmatpush2.xpose.msra.mxu0 0.0
    %753 = vmatprep.subr.mxu0 0.0
    %754 = vmatpush2.xpose.msra.mxu0 0.0
    %755 = vmatprep.subr.mxu0 0.0
    %756 = vmatpush2.xpose.msra.mxu0 0.0
    %757 = vmatprep.subr.mxu0 0.0
    %758 = vmatpush2.xpose.msra.mxu0 0.0
    %759 = vmatprep.subr.mxu0 0.0
    %760 = vmatpush2.xpose.msra.mxu0 0.0
    %761 = vmatprep.subr.mxu0 0.0
    %762 = vmatpush2.xpose.msra.mxu0 0.0
    %763 = vmatprep.subr.mxu0 0.0
    %764 = vmatpush2.xpose.msra.mxu0 0.0
    %765 = vmatprep.subr.mxu0 0.0
    %766 = vmatpush2.xpose.msra.mxu0 0.0
    %767 = vmatprep.subr.mxu0 0.0
    %768 = vmatpush2.xpose.msra.mxu0 0.0
    %769 = vmatprep.subr.mxu0 0.0
    %770 = vmatpush2.xpose.msra.mxu0 0.0
    %771 = vmatprep.mubr.f32.mxu0 0.0
    %772 = vmatmul.mubr.f32.gmra.mxu0 %v703
    %v773 = vpop.f32.mrf.mxu0
    %v774 = vadd.f32 0.0, %v773
    %v775 = vpop.f32.mrf.mxu0
    %776 = vdwg.mxu0
    %v777 = vmul.f32 %v242, 0.35355338
    %v778 = vmul.f32 %v318, 0.35355338
    %v779 = vmul.f32 %v394, 0.35355338
    %v780 = vmul.f32 %v470, 0.35355338
    %v781 = vmul.f32 %v546, 0.35355338
    %v782 = vmul.f32 %v622, 0.35355338
    %v783 = vmul.f32 %v698, 0.35355338
    %v784 = vmul.f32 %v774, 0.35355338
    %v785 = vsel %vm40, 1, 0
    %v786 = vsel %vm42, 1, 0
    %v787 = vlaneseq
    %v788 = vshrl.u32 %v787, 7
    %v789 = vsub.s32 0, %v788
    %v790 = vrot.slane %v785, %v789
    %v791 = vlaneseq
    %v792 = vshrl.u32 %v791, 7
    %v793 = vsub.s32 0, %v792
    %v794 = vrot.slane %v786, %v793
    %vm795 = vcmp.eq.s32.totalorder %v790, 1
    %vm796 = vcmp.eq.s32.totalorder %v794, 1
    %v797 = vsel %vm795, %v777, -10000.0
    %v798 = vsel %vm795, %v778, -10000.0
    %v799 = vsel %vm795, %v779, -10000.0
    %v800 = vsel %vm795, %v780, -10000.0
    %v801 = vsel %vm796, %v781, -10000.0
    %v802 = vsel %vm796, %v782, -10000.0
    %v803 = vsel %vm796, %v783, -10000.0
    %v804 = vsel %vm796, %v784, -10000.0
    %v805 = vsel %vm170, %v797, -inf
    %806 = vmax.xlane.f32.xlu0 %v805
    %v807 = vpop.xlane.xlu0 %806
    %v808 = vsel %vm170, %v798, -inf
    %809 = vmax.xlane.f32.xlu0 %v808
    %v810 = vpop.xlane.xlu0 %809
    %v811 = vsel %vm170, %v799, -inf
    %812 = vmax.xlane.f32.xlu0 %v811
    %v813 = vpop.xlane.xlu0 %812
    %v814 = vsel %vm170, %v800, -inf
    %815 = vmax.xlane.f32.xlu0 %v814
    %v816 = vpop.xlane.xlu0 %815
    %v817 = vsel %vm170, %v801, -inf
    %818 = vmax.xlane.f32.xlu0 %v817
    %v819 = vpop.xlane.xlu0 %818
    %v820 = vsel %vm170, %v802, -inf
    %821 = vmax.xlane.f32.xlu0 %v820
    %v822 = vpop.xlane.xlu0 %821
    %v823 = vsel %vm170, %v803, -inf
    %824 = vmax.xlane.f32.xlu0 %v823
    %v825 = vpop.xlane.xlu0 %824
    %v826 = vsel %vm170, %v804, -inf
    %827 = vmax.xlane.f32.xlu0 %v826
    %v828 = vpop.xlane.xlu0 %827
    %v829 = vsub.f32 %v797, %v807
    %v830 = vsub.f32 %v798, %v810
    %v831 = vsub.f32 %v799, %v813
    %v832 = vsub.f32 %v800, %v816
    %v833 = vsub.f32 %v801, %v819
    %v834 = vsub.f32 %v802, %v822
    %v835 = vsub.f32 %v803, %v825
    %v836 = vsub.f32 %v804, %v828
    %v837 = vmul.f32 %v829, 1.442695
    %v838 = vpow.pop %v837
    %v839 = vmul.f32 %v830, 1.442695
    %v840 = vpow.pop %v839
    %v841 = vmul.f32 %v831, 1.442695
    %v842 = vpow.pop %v841
    %v843 = vmul.f32 %v832, 1.442695
    %v844 = vpow.pop %v843
    %v845 = vmul.f32 %v833, 1.442695
    %v846 = vpow.pop %v845
    %v847 = vmul.f32 %v834, 1.442695
    %v848 = vpow.pop %v847
    %v849 = vmul.f32 %v835, 1.442695
    %v850 = vpow.pop %v849
    %v851 = vmul.f32 %v836, 1.442695
    %v852 = vpow.pop %v851
    %v853 = vsel %vm170, %v838, 0.0
    %854 = vadd.xlane.f32.xlu0 %v853
    %v855 = vpop.xlane.xlu0 %854
    %v856 = vsel %vm170, %v840, 0.0
    %857 = vadd.xlane.f32.xlu0 %v856
    %v858 = vpop.xlane.xlu0 %857
    %v859 = vsel %vm170, %v842, 0.0
    %860 = vadd.xlane.f32.xlu0 %v859
    %v861 = vpop.xlane.xlu0 %860
    %v862 = vsel %vm170, %v844, 0.0
    %863 = vadd.xlane.f32.xlu0 %v862
    %v864 = vpop.xlane.xlu0 %863
    %v865 = vsel %vm170, %v846, 0.0
    %866 = vadd.xlane.f32.xlu0 %v865
    %v867 = vpop.xlane.xlu0 %866
    %v868 = vsel %vm170, %v848, 0.0
    %869 = vadd.xlane.f32.xlu0 %v868
    %v870 = vpop.xlane.xlu0 %869
    %v871 = vsel %vm170, %v850, 0.0
    %872 = vadd.xlane.f32.xlu0 %v871
    %v873 = vpop.xlane.xlu0 %872
    %v874 = vsel %vm170, %v852, 0.0
    %875 = vadd.xlane.f32.xlu0 %v874
    %v876 = vpop.xlane.xlu0 %875
    %v877 = vrcp.pop %v855
    %v878 = vmul.f32 %v838, %v877
    %v879 = vrcp.pop %v858
    %v880 = vmul.f32 %v840, %v879
    %v881 = vrcp.pop %v861
    %v882 = vmul.f32 %v842, %v881
    %v883 = vrcp.pop %v864
    %v884 = vmul.f32 %v844, %v883
    %v885 = vrcp.pop %v867
    %v886 = vmul.f32 %v846, %v885
    %v887 = vrcp.pop %v870
    %v888 = vmul.f32 %v848, %v887
    %v889 = vrcp.pop %v873
    %v890 = vmul.f32 %v850, %v889
    %v891 = vrcp.pop %v876
    %v892 = vmul.f32 %v852, %v891
    %893 = vrot.lane.b32.xlu0 %v146, 64
    %v894 = vpop.permute.xlu0 %893
    %v897 = vsel %vm170, %v878, 0
    %899 = vmatprep.subr.mxu0 0.0
    %900 = vmatpush1.msra.mxu0 0.0
    %901 = vmatprep.subr.mxu0 0.0
    %902 = vmatpush1.msra.mxu0 0.0
    %903 = vmatprep.subr.mxu0 0.0
    %904 = vmatpush1.msra.mxu0 0.0
    %905 = vmatprep.subr.mxu0 0.0
    %906 = vmatpush1.msra.mxu0 0.0
    %907 = vmatprep.subr.mxu0 0.0
    %908 = vmatpush1.msra.mxu0 0.0
    %909 = vmatprep.subr.mxu0 0.0
    %910 = vmatpush1.msra.mxu0 0.0
    %911 = vmatprep.subr.mxu0 0.0
    %912 = vmatpush1.msra.mxu0 0.0
    %913 = vmatprep.subr.mxu0 0.0
    %914 = vmatpush1.msra.mxu0 0.0
    %915 = vmatprep.subr.mxu0 0.0
    %916 = vmatpush1.msra.mxu0 0.0
    %917 = vmatprep.subr.mxu0 0.0
    %918 = vmatpush1.msra.mxu0 0.0
    %919 = vmatprep.subr.mxu0 0.0
    %920 = vmatpush1.msra.mxu0 0.0
    %921 = vmatprep.subr.mxu0 0.0
    %922 = vmatpush1.msra.mxu0 0.0
    %923 = vmatprep.subr.mxu0 0.0
    %924 = vmatpush1.msra.mxu0 0.0
    %925 = vmatprep.subr.mxu0 0.0
    %926 = vmatpush1.msra.mxu0 0.0
    %927 = vmatprep.subr.mxu0 0.0
    %928 = vmatpush1.msra.mxu0 0.0
    %929 = vmatprep.subr.mxu0 0.0
    %930 = vmatpush1.msra.mxu0 %v894
    %931 = vmatprep.subr.mxu0 0.0
    %932 = vmatpush2.msra.mxu0 0.0
    %933 = vmatprep.subr.mxu0 0.0
    %934 = vmatpush2.msra.mxu0 0.0
    %935 = vmatprep.subr.mxu0 0.0
    %936 = vmatpush2.msra.mxu0 0.0
    %937 = vmatprep.subr.mxu0 0.0
    %938 = vmatpush2.msra.mxu0 0.0
    %939 = vmatprep.subr.mxu0 0.0
    %940 = vmatpush2.msra.mxu0 0.0
    %941 = vmatprep.subr.mxu0 0.0
    %942 = vmatpush2.msra.mxu0 0.0
    %943 = vmatprep.subr.mxu0 0.0
    %944 = vmatpush2.msra.mxu0 0.0
    %945 = vmatprep.subr.mxu0 0.0
    %946 = vmatpush2.msra.mxu0 0.0
    %947 = vmatprep.subr.mxu0 0.0
    %948 = vmatpush2.msra.mxu0 0.0
    %949 = vmatprep.subr.mxu0 0.0
    %950 = vmatpush2.msra.mxu0 0.0
    %951 = vmatprep.subr.mxu0 0.0
    %952 = vmatpush2.msra.mxu0 0.0
    %953 = vmatprep.subr.mxu0 0.0
    %954 = vmatpush2.msra.mxu0 0.0
    %955 = vmatprep.subr.mxu0 0.0
    %956 = vmatpush2.msra.mxu0 0.0
    %957 = vmatprep.subr.mxu0 0.0
    %958 = vmatpush2.msra.mxu0 0.0
    %959 = vmatprep.subr.mxu0 0.0
    %960 = vmatpush2.msra.mxu0 0.0
    %961 = vmatprep.subr.mxu0 0.0
    %962 = vmatpush2.msra.mxu0 0.0
    %963 = vmatprep.mubr.f32.mxu0 0.0
    %964 = vmatmul.mubr.f32.gmra.mxu0 %v897
    %v965 = vpop.f32.mrf.mxu0
    %v966 = vadd.f32 0.0, %v965
    %v967 = vpop.f32.mrf.mxu0
    %968 = vdwg.mxu0
    %969 = vrot.lane.b32.xlu0 %v156, 64
    %v970 = vpop.permute.xlu0 %969
    %v973 = vsel %vm170, %v880, 0
    %975 = vmatprep.subr.mxu0 0.0
    %976 = vmatpush1.msra.mxu0 0.0
    %977 = vmatprep.subr.mxu0 0.0
    %978 = vmatpush1.msra.mxu0 0.0
    %979 = vmatprep.subr.mxu0 0.0
    %980 = vmatpush1.msra.mxu0 0.0
    %981 = vmatprep.subr.mxu0 0.0
    %982 = vmatpush1.msra.mxu0 0.0
    %983 = vmatprep.subr.mxu0 0.0
    %984 = vmatpush1.msra.mxu0 0.0
    %985 = vmatprep.subr.mxu0 0.0
    %986 = vmatpush1.msra.mxu0 0.0
    %987 = vmatprep.subr.mxu0 0.0
    %988 = vmatpush1.msra.mxu0 0.0
    %989 = vmatprep.subr.mxu0 0.0
    %990 = vmatpush1.msra.mxu0 0.0
    %991 = vmatprep.subr.mxu0 0.0
    %992 = vmatpush1.msra.mxu0 0.0
    %993 = vmatprep.subr.mxu0 0.0
    %994 = vmatpush1.msra.mxu0 0.0
    %995 = vmatprep.subr.mxu0 0.0
    %996 = vmatpush1.msra.mxu0 0.0
    %997 = vmatprep.subr.mxu0 0.0
    %998 = vmatpush1.msra.mxu0 0.0
    %999 = vmatprep.subr.mxu0 0.0
    %1000 = vmatpush1.msra.mxu0 0.0
    %1001 = vmatprep.subr.mxu0 0.0
    %1002 = vmatpush1.msra.mxu0 0.0
    %1003 = vmatprep.subr.mxu0 0.0
    %1004 = vmatpush1.msra.mxu0 0.0
    %1005 = vmatprep.subr.mxu0 0.0
    %1006 = vmatpush1.msra.mxu0 %v970
    %1007 = vmatprep.subr.mxu0 0.0
    %1008 = vmatpush2.msra.mxu0 0.0
    %1009 = vmatprep.subr.mxu0 0.0
    %1010 = vmatpush2.msra.mxu0 0.0
    %1011 = vmatprep.subr.mxu0 0.0
    %1012 = vmatpush2.msra.mxu0 0.0
    %1013 = vmatprep.subr.mxu0 0.0
    %1014 = vmatpush2.msra.mxu0 0.0
    %1015 = vmatprep.subr.mxu0 0.0
    %1016 = vmatpush2.msra.mxu0 0.0
    %1017 = vmatprep.subr.mxu0 0.0
    %1018 = vmatpush2.msra.mxu0 0.0
    %1019 = vmatprep.subr.mxu0 0.0
    %1020 = vmatpush2.msra.mxu0 0.0
    %1021 = vmatprep.subr.mxu0 0.0
    %1022 = vmatpush2.msra.mxu0 0.0
    %1023 = vmatprep.subr.mxu0 0.0
    %1024 = vmatpush2.msra.mxu0 0.0
    %1025 = vmatprep.subr.mxu0 0.0
    %1026 = vmatpush2.msra.mxu0 0.0
    %1027 = vmatprep.subr.mxu0 0.0
    %1028 = vmatpush2.msra.mxu0 0.0
    %1029 = vmatprep.subr.mxu0 0.0
    %1030 = vmatpush2.msra.mxu0 0.0
    %1031 = vmatprep.subr.mxu0 0.0
    %1032 = vmatpush2.msra.mxu0 0.0
    %1033 = vmatprep.subr.mxu0 0.0
    %1034 = vmatpush2.msra.mxu0 0.0
    %1035 = vmatprep.subr.mxu0 0.0
    %1036 = vmatpush2.msra.mxu0 0.0
    %1037 = vmatprep.subr.mxu0 0.0
    %1038 = vmatpush2.msra.mxu0 0.0
    %1039 = vmatprep.mubr.f32.mxu0 0.0
    %1040 = vmatmul.mubr.f32.gmra.mxu0 %v973
    %v1041 = vpop.f32.mrf.mxu0
    %v1042 = vadd.f32 0.0, %v1041
    %v1043 = vpop.f32.mrf.mxu0
    %1044 = vdwg.mxu0
    %1045 = vrot.lane.b32.xlu0 %v158, 64
    %v1046 = vpop.permute.xlu0 %1045
    %v1049 = vsel %vm170, %v882, 0
    %1051 = vmatprep.subr.mxu0 0.0
    %1052 = vmatpush1.msra.mxu0 0.0
    %1053 = vmatprep.subr.mxu0 0.0
    %1054 = vmatpush1.msra.mxu0 0.0
    %1055 = vmatprep.subr.mxu0 0.0
    %1056 = vmatpush1.msra.mxu0 0.0
    %1057 = vmatprep.subr.mxu0 0.0
    %1058 = vmatpush1.msra.mxu0 0.0
    %1059 = vmatprep.subr.mxu0 0.0
    %1060 = vmatpush1.msra.mxu0 0.0
    %1061 = vmatprep.subr.mxu0 0.0
    %1062 = vmatpush1.msra.mxu0 0.0
    %1063 = vmatprep.subr.mxu0 0.0
    %1064 = vmatpush1.msra.mxu0 0.0
    %1065 = vmatprep.subr.mxu0 0.0
    %1066 = vmatpush1.msra.mxu0 0.0
    %1067 = vmatprep.subr.mxu0 0.0
    %1068 = vmatpush1.msra.mxu0 0.0
    %1069 = vmatprep.subr.mxu0 0.0
    %1070 = vmatpush1.msra.mxu0 0.0
    %1071 = vmatprep.subr.mxu0 0.0
    %1072 = vmatpush1.msra.mxu0 0.0
    %1073 = vmatprep.subr.mxu0 0.0
    %1074 = vmatpush1.msra.mxu0 0.0
    %1075 = vmatprep.subr.mxu0 0.0
    %1076 = vmatpush1.msra.mxu0 0.0
    %1077 = vmatprep.subr.mxu0 0.0
    %1078 = vmatpush1.msra.mxu0 0.0
    %1079 = vmatprep.subr.mxu0 0.0
    %1080 = vmatpush1.msra.mxu0 0.0
    %1081 = vmatprep.subr.mxu0 0.0
    %1082 = vmatpush1.msra.mxu0 %v1046
    %1083 = vmatprep.subr.mxu0 0.0
    %1084 = vmatpush2.msra.mxu0 0.0
    %1085 = vmatprep.subr.mxu0 0.0
    %1086 = vmatpush2.msra.mxu0 0.0
    %1087 = vmatprep.subr.mxu0 0.0
    %1088 = vmatpush2.msra.mxu0 0.0
    %1089 = vmatprep.subr.mxu0 0.0
    %1090 = vmatpush2.msra.mxu0 0.0
    %1091 = vmatprep.subr.mxu0 0.0
    %1092 = vmatpush2.msra.mxu0 0.0
    %1093 = vmatprep.subr.mxu0 0.0
    %1094 = vmatpush2.msra.mxu0 0.0
    %1095 = vmatprep.subr.mxu0 0.0
    %1096 = vmatpush2.msra.mxu0 0.0
    %1097 = vmatprep.subr.mxu0 0.0
    %1098 = vmatpush2.msra.mxu0 0.0
    %1099 = vmatprep.subr.mxu0 0.0
    %1100 = vmatpush2.msra.mxu0 0.0
    %1101 = vmatprep.subr.mxu0 0.0
    %1102 = vmatpush2.msra.mxu0 0.0
    %1103 = vmatprep.subr.mxu0 0.0
    %1104 = vmatpush2.msra.mxu0 0.0
    %1105 = vmatprep.subr.mxu0 0.0
    %1106 = vmatpush2.msra.mxu0 0.0
    %1107 = vmatprep.subr.mxu0 0.0
    %1108 = vmatpush2.msra.mxu0 0.0
    %1109 = vmatprep.subr.mxu0 0.0
    %1110 = vmatpush2.msra.mxu0 0.0
    %1111 = vmatprep.subr.mxu0 0.0
    %1112 = vmatpush2.msra.mxu0 0.0
    %1113 = vmatprep.subr.mxu0 0.0
    %1114 = vmatpush2.msra.mxu0 0.0
    %1115 = vmatprep.mubr.f32.mxu0 0.0
    %1116 = vmatmul.mubr.f32.gmra.mxu0 %v1049
    %v1117 = vpop.f32.mrf.mxu0
    %v1118 = vadd.f32 0.0, %v1117
    %v1119 = vpop.f32.mrf.mxu0
    %1120 = vdwg.mxu0
    %1121 = vrot.lane.b32.xlu0 %v160, 64
    %v1122 = vpop.permute.xlu0 %1121
    %v1125 = vsel %vm170, %v884, 0
    %1127 = vmatprep.subr.mxu0 0.0
    %1128 = vmatpush1.msra.mxu0 0.0
    %1129 = vmatprep.subr.mxu0 0.0
    %1130 = vmatpush1.msra.mxu0 0.0
    %1131 = vmatprep.subr.mxu0 0.0
    %1132 = vmatpush1.msra.mxu0 0.0
    %1133 = vmatprep.subr.mxu0 0.0
    %1134 = vmatpush1.msra.mxu0 0.0
    %1135 = vmatprep.subr.mxu0 0.0
    %1136 = vmatpush1.msra.mxu0 0.0
    %1137 = vmatprep.subr.mxu0 0.0
    %1138 = vmatpush1.msra.mxu0 0.0
    %1139 = vmatprep.subr.mxu0 0.0
    %1140 = vmatpush1.msra.mxu0 0.0
    %1141 = vmatprep.subr.mxu0 0.0
    %1142 = vmatpush1.msra.mxu0 0.0
    %1143 = vmatprep.subr.mxu0 0.0
    %1144 = vmatpush1.msra.mxu0 0.0
    %1145 = vmatprep.subr.mxu0 0.0
    %1146 = vmatpush1.msra.mxu0 0.0
    %1147 = vmatprep.subr.mxu0 0.0
    %1148 = vmatpush1.msra.mxu0 0.0
    %1149 = vmatprep.subr.mxu0 0.0
    %1150 = vmatpush1.msra.mxu0 0.0
    %1151 = vmatprep.subr.mxu0 0.0
    %1152 = vmatpush1.msra.mxu0 0.0
    %1153 = vmatprep.subr.mxu0 0.0
    %1154 = vmatpush1.msra.mxu0 0.0
    %1155 = vmatprep.subr.mxu0 0.0
    %1156 = vmatpush1.msra.mxu0 0.0
    %1157 = vmatprep.subr.mxu0 0.0
    %1158 = vmatpush1.msra.mxu0 %v1122
    %1159 = vmatprep.subr.mxu0 0.0
    %1160 = vmatpush2.msra.mxu0 0.0
    %1161 = vmatprep.subr.mxu0 0.0
    %1162 = vmatpush2.msra.mxu0 0.0
    %1163 = vmatprep.subr.mxu0 0.0
    %1164 = vmatpush2.msra.mxu0 0.0
    %1165 = vmatprep.subr.mxu0 0.0
    %1166 = vmatpush2.msra.mxu0 0.0
    %1167 = vmatprep.subr.mxu0 0.0
    %1168 = vmatpush2.msra.mxu0 0.0
    %1169 = vmatprep.subr.mxu0 0.0
    %1170 = vmatpush2.msra.mxu0 0.0
    %1171 = vmatprep.subr.mxu0 0.0
    %1172 = vmatpush2.msra.mxu0 0.0
    %1173 = vmatprep.subr.mxu0 0.0
    %1174 = vmatpush2.msra.mxu0 0.0
    %1175 = vmatprep.subr.mxu0 0.0
    %1176 = vmatpush2.msra.mxu0 0.0
    %1177 = vmatprep.subr.mxu0 0.0
    %1178 = vmatpush2.msra.mxu0 0.0
    %1179 = vmatprep.subr.mxu0 0.0
    %1180 = vmatpush2.msra.mxu0 0.0
    %1181 = vmatprep.subr.mxu0 0.0
    %1182 = vmatpush2.msra.mxu0 0.0
    %1183 = vmatprep.subr.mxu0 0.0
    %1184 = vmatpush2.msra.mxu0 0.0
    %1185 = vmatprep.subr.mxu0 0.0
    %1186 = vmatpush2.msra.mxu0 0.0
    %1187 = vmatprep.subr.mxu0 0.0
    %1188 = vmatpush2.msra.mxu0 0.0
    %1189 = vmatprep.subr.mxu0 0.0
    %1190 = vmatpush2.msra.mxu0 0.0
    %1191 = vmatprep.mubr.f32.mxu0 0.0
    %1192 = vmatmul.mubr.f32.gmra.mxu0 %v1125
    %v1193 = vpop.f32.mrf.mxu0
    %v1194 = vadd.f32 0.0, %v1193
    %v1195 = vpop.f32.mrf.mxu0
    %1196 = vdwg.mxu0
    %1197 = vrot.lane.b32.xlu0 %v151, 64
    %v1198 = vpop.permute.xlu0 %1197
    %v1201 = vsel %vm170, %v886, 0
    %1203 = vmatprep.subr.mxu0 0.0
    %1204 = vmatpush1.msra.mxu0 0.0
    %1205 = vmatprep.subr.mxu0 0.0
    %1206 = vmatpush1.msra.mxu0 0.0
    %1207 = vmatprep.subr.mxu0 0.0
    %1208 = vmatpush1.msra.mxu0 0.0
    %1209 = vmatprep.subr.mxu0 0.0
    %1210 = vmatpush1.msra.mxu0 0.0
    %1211 = vmatprep.subr.mxu0 0.0
    %1212 = vmatpush1.msra.mxu0 0.0
    %1213 = vmatprep.subr.mxu0 0.0
    %1214 = vmatpush1.msra.mxu0 0.0
    %1215 = vmatprep.subr.mxu0 0.0
    %1216 = vmatpush1.msra.mxu0 0.0
    %1217 = vmatprep.subr.mxu0 0.0
    %1218 = vmatpush1.msra.mxu0 0.0
    %1219 = vmatprep.subr.mxu0 0.0
    %1220 = vmatpush1.msra.mxu0 0.0
    %1221 = vmatprep.subr.mxu0 0.0
    %1222 = vmatpush1.msra.mxu0 0.0
    %1223 = vmatprep.subr.mxu0 0.0
    %1224 = vmatpush1.msra.mxu0 0.0
    %1225 = vmatprep.subr.mxu0 0.0
    %1226 = vmatpush1.msra.mxu0 0.0
    %1227 = vmatprep.subr.mxu0 0.0
    %1228 = vmatpush1.msra.mxu0 0.0
    %1229 = vmatprep.subr.mxu0 0.0
    %1230 = vmatpush1.msra.mxu0 0.0
    %1231 = vmatprep.subr.mxu0 0.0
    %1232 = vmatpush1.msra.mxu0 0.0
    %1233 = vmatprep.subr.mxu0 0.0
    %1234 = vmatpush1.msra.mxu0 %v1198
    %1235 = vmatprep.subr.mxu0 0.0
    %1236 = vmatpush2.msra.mxu0 0.0
    %1237 = vmatprep.subr.mxu0 0.0
    %1238 = vmatpush2.msra.mxu0 0.0
    %1239 = vmatprep.subr.mxu0 0.0
    %1240 = vmatpush2.msra.mxu0 0.0
    %1241 = vmatprep.subr.mxu0 0.0
    %1242 = vmatpush2.msra.mxu0 0.0
    %1243 = vmatprep.subr.mxu0 0.0
    %1244 = vmatpush2.msra.mxu0 0.0
    %1245 = vmatprep.subr.mxu0 0.0
    %1246 = vmatpush2.msra.mxu0 0.0
    %1247 = vmatprep.subr.mxu0 0.0
    %1248 = vmatpush2.msra.mxu0 0.0
    %1249 = vmatprep.subr.mxu0 0.0
    %1250 = vmatpush2.msra.mxu0 0.0
    %1251 = vmatprep.subr.mxu0 0.0
    %1252 = vmatpush2.msra.mxu0 0.0
    %1253 = vmatprep.subr.mxu0 0.0
    %1254 = vmatpush2.msra.mxu0 0.0
    %1255 = vmatprep.subr.mxu0 0.0
    %1256 = vmatpush2.msra.mxu0 0.0
    %1257 = vmatprep.subr.mxu0 0.0
    %1258 = vmatpush2.msra.mxu0 0.0
    %1259 = vmatprep.subr.mxu0 0.0
    %1260 = vmatpush2.msra.mxu0 0.0
    %1261 = vmatprep.subr.mxu0 0.0
    %1262 = vmatpush2.msra.mxu0 0.0
    %1263 = vmatprep.subr.mxu0 0.0
    %1264 = vmatpush2.msra.mxu0 0.0
    %1265 = vmatprep.subr.mxu0 0.0
    %1266 = vmatpush2.msra.mxu0 0.0
    %1267 = vmatprep.mubr.f32.mxu0 0.0
    %1268 = vmatmul.mubr.f32.gmra.mxu0 %v1201
    %v1269 = vpop.f32.mrf.mxu0
    %v1270 = vadd.f32 0.0, %v1269
    %v1271 = vpop.f32.mrf.mxu0
    %1272 = vdwg.mxu0
    %1273 = vrot.lane.b32.xlu0 %v163, 64
    %v1274 = vpop.permute.xlu0 %1273
    %v1277 = vsel %vm170, %v888, 0
    %1279 = vmatprep.subr.mxu0 0.0
    %1280 = vmatpush1.msra.mxu0 0.0
    %1281 = vmatprep.subr.mxu0 0.0
    %1282 = vmatpush1.msra.mxu0 0.0
    %1283 = vmatprep.subr.mxu0 0.0
    %1284 = vmatpush1.msra.mxu0 0.0
    %1285 = vmatprep.subr.mxu0 0.0
    %1286 = vmatpush1.msra.mxu0 0.0
    %1287 = vmatprep.subr.mxu0 0.0
    %1288 = vmatpush1.msra.mxu0 0.0
    %1289 = vmatprep.subr.mxu0 0.0
    %1290 = vmatpush1.msra.mxu0 0.0
    %1291 = vmatprep.subr.mxu0 0.0
    %1292 = vmatpush1.msra.mxu0 0.0
    %1293 = vmatprep.subr.mxu0 0.0
    %1294 = vmatpush1.msra.mxu0 0.0
    %1295 = vmatprep.subr.mxu0 0.0
    %1296 = vmatpush1.msra.mxu0 0.0
    %1297 = vmatprep.subr.mxu0 0.0
    %1298 = vmatpush1.msra.mxu0 0.0
    %1299 = vmatprep.subr.mxu0 0.0
    %1300 = vmatpush1.msra.mxu0 0.0
    %1301 = vmatprep.subr.mxu0 0.0
    %1302 = vmatpush1.msra.mxu0 0.0
    %1303 = vmatprep.subr.mxu0 0.0
    %1304 = vmatpush1.msra.mxu0 0.0
    %1305 = vmatprep.subr.mxu0 0.0
    %1306 = vmatpush1.msra.mxu0 0.0
    %1307 = vmatprep.subr.mxu0 0.0
    %1308 = vmatpush1.msra.mxu0 0.0
    %1309 = vmatprep.subr.mxu0 0.0
    %1310 = vmatpush1.msra.mxu0 %v1274
    %1311 = vmatprep.subr.mxu0 0.0
    %1312 = vmatpush2.msra.mxu0 0.0
    %1313 = vmatprep.subr.mxu0 0.0
    %1314 = vmatpush2.msra.mxu0 0.0
    %1315 = vmatprep.subr.mxu0 0.0
    %1316 = vmatpush2.msra.mxu0 0.0
    %1317 = vmatprep.subr.mxu0 0.0
    %1318 = vmatpush2.msra.mxu0 0.0
    %1319 = vmatprep.subr.mxu0 0.0
    %1320 = vmatpush2.msra.mxu0 0.0
    %1321 = vmatprep.subr.mxu0 0.0
    %1322 = vmatpush2.msra.mxu0 0.0
    %1323 = vmatprep.subr.mxu0 0.0
    %1324 = vmatpush2.msra.mxu0 0.0
    %1325 = vmatprep.subr.mxu0 0.0
    %1326 = vmatpush2.msra.mxu0 0.0
    %1327 = vmatprep.subr.mxu0 0.0
    %1328 = vmatpush2.msra.mxu0 0.0
    %1329 = vmatprep.subr.mxu0 0.0
    %1330 = vmatpush2.msra.mxu0 0.0
    %1331 = vmatprep.subr.mxu0 0.0
    %1332 = vmatpush2.msra.mxu0 0.0
    %1333 = vmatprep.subr.mxu0 0.0
    %1334 = vmatpush2.msra.mxu0 0.0
    %1335 = vmatprep.subr.mxu0 0.0
    %1336 = vmatpush2.msra.mxu0 0.0
    %1337 = vmatprep.subr.mxu0 0.0
    %1338 = vmatpush2.msra.mxu0 0.0
    %1339 = vmatprep.subr.mxu0 0.0
    %1340 = vmatpush2.msra.mxu0 0.0
    %1341 = vmatprep.subr.mxu0 0.0
    %1342 = vmatpush2.msra.mxu0 0.0
    %1343 = vmatprep.mubr.f32.mxu0 0.0
    %1344 = vmatmul.mubr.f32.gmra.mxu0 %v1277
    %v1345 = vpop.f32.mrf.mxu0
    %v1346 = vadd.f32 0.0, %v1345
    %v1347 = vpop.f32.mrf.mxu0
    %1348 = vdwg.mxu0
    %1349 = vrot.lane.b32.xlu0 %v165, 64
    %v1350 = vpop.permute.xlu0 %1349
    %v1353 = vsel %vm170, %v890, 0
    %1355 = vmatprep.subr.mxu0 0.0
    %1356 = vmatpush1.msra.mxu0 0.0
    %1357 = vmatprep.subr.mxu0 0.0
    %1358 = vmatpush1.msra.mxu0 0.0
    %1359 = vmatprep.subr.mxu0 0.0
    %1360 = vmatpush1.msra.mxu0 0.0
    %1361 = vmatprep.subr.mxu0 0.0
    %1362 = vmatpush1.msra.mxu0 0.0
    %1363 = vmatprep.subr.mxu0 0.0
    %1364 = vmatpush1.msra.mxu0 0.0
    %1365 = vmatprep.subr.mxu0 0.0
    %1366 = vmatpush1.msra.mxu0 0.0
    %1367 = vmatprep.subr.mxu0 0.0
    %1368 = vmatpush1.msra.mxu0 0.0
    %1369 = vmatprep.subr.mxu0 0.0
    %1370 = vmatpush1.msra.mxu0 0.0
    %1371 = vmatprep.subr.mxu0 0.0
    %1372 = vmatpush1.msra.mxu0 0.0
    %1373 = vmatprep.subr.mxu0 0.0
    %1374 = vmatpush1.msra.mxu0 0.0
    %1375 = vmatprep.subr.mxu0 0.0
    %1376 = vmatpush1.msra.mxu0 0.0
    %1377 = vmatprep.subr.mxu0 0.0
    %1378 = vmatpush1.msra.mxu0 0.0
    %1379 = vmatprep.subr.mxu0 0.0
    %1380 = vmatpush1.msra.mxu0 0.0
    %1381 = vmatprep.subr.mxu0 0.0
    %1382 = vmatpush1.msra.mxu0 0.0
    %1383 = vmatprep.subr.mxu0 0.0
    %1384 = vmatpush1.msra.mxu0 0.0
    %1385 = vmatprep.subr.mxu0 0.0
    %1386 = vmatpush1.msra.mxu0 %v1350
    %1387 = vmatprep.subr.mxu0 0.0
    %1388 = vmatpush2.msra.mxu0 0.0
    %1389 = vmatprep.subr.mxu0 0.0
    %1390 = vmatpush2.msra.mxu0 0.0
    %1391 = vmatprep.subr.mxu0 0.0
    %1392 = vmatpush2.msra.mxu0 0.0
    %1393 = vmatprep.subr.mxu0 0.0
    %1394 = vmatpush2.msra.mxu0 0.0
    %1395 = vmatprep.subr.mxu0 0.0
    %1396 = vmatpush2.msra.mxu0 0.0
    %1397 = vmatprep.subr.mxu0 0.0
    %1398 = vmatpush2.msra.mxu0 0.0
    %1399 = vmatprep.subr.mxu0 0.0
    %1400 = vmatpush2.msra.mxu0 0.0
    %1401 = vmatprep.subr.mxu0 0.0
    %1402 = vmatpush2.msra.mxu0 0.0
    %1403 = vmatprep.subr.mxu0 0.0
    %1404 = vmatpush2.msra.mxu0 0.0
    %1405 = vmatprep.subr.mxu0 0.0
    %1406 = vmatpush2.msra.mxu0 0.0
    %1407 = vmatprep.subr.mxu0 0.0
    %1408 = vmatpush2.msra.mxu0 0.0
    %1409 = vmatprep.subr.mxu0 0.0
    %1410 = vmatpush2.msra.mxu0 0.0
    %1411 = vmatprep.subr.mxu0 0.0
    %1412 = vmatpush2.msra.mxu0 0.0
    %1413 = vmatprep.subr.mxu0 0.0
    %1414 = vmatpush2.msra.mxu0 0.0
    %1415 = vmatprep.subr.mxu0 0.0
    %1416 = vmatpush2.msra.mxu0 0.0
    %1417 = vmatprep.subr.mxu0 0.0
    %1418 = vmatpush2.msra.mxu0 0.0
    %1419 = vmatprep.mubr.f32.mxu0 0.0
    %1420 = vmatmul.mubr.f32.gmra.mxu0 %v1353
    %v1421 = vpop.f32.mrf.mxu0
    %v1422 = vadd.f32 0.0, %v1421
    %v1423 = vpop.f32.mrf.mxu0
    %1424 = vdwg.mxu0
    %1425 = vrot.lane.b32.xlu0 %v167, 64
    %v1426 = vpop.permute.xlu0 %1425
    %v1429 = vsel %vm170, %v892, 0
    %1431 = vmatprep.subr.mxu0 0.0
    %1432 = vmatpush1.msra.mxu0 0.0
    %1433 = vmatprep.subr.mxu0 0.0
    %1434 = vmatpush1.msra.mxu0 0.0
    %1435 = vmatprep.subr.mxu0 0.0
    %1436 = vmatpush1.msra.mxu0 0.0
    %1437 = vmatprep.subr.mxu0 0.0
    %1438 = vmatpush1.msra.mxu0 0.0
    %1439 = vmatprep.subr.mxu0 0.0
    %1440 = vmatpush1.msra.mxu0 0.0
    %1441 = vmatprep.subr.mxu0 0.0
    %1442 = vmatpush1.msra.mxu0 0.0
    %1443 = vmatprep.subr.mxu0 0.0
    %1444 = vmatpush1.msra.mxu0 0.0
    %1445 = vmatprep.subr.mxu0 0.0
    %1446 = vmatpush1.msra.mxu0 0.0
    %1447 = vmatprep.subr.mxu0 0.0
    %1448 = vmatpush1.msra.mxu0 0.0
    %1449 = vmatprep.subr.mxu0 0.0
    %1450 = vmatpush1.msra.mxu0 0.0
    %1451 = vmatprep.subr.mxu0 0.0
    %1452 = vmatpush1.msra.mxu0 0.0
    %1453 = vmatprep.subr.mxu0 0.0
    %1454 = vmatpush1.msra.mxu0 0.0
    %1455 = vmatprep.subr.mxu0 0.0
    %1456 = vmatpush1.msra.mxu0 0.0
    %1457 = vmatprep.subr.mxu0 0.0
    %1458 = vmatpush1.msra.mxu0 0.0
    %1459 = vmatprep.subr.mxu0 0.0
    %1460 = vmatpush1.msra.mxu0 0.0
    %1461 = vmatprep.subr.mxu0 0.0
    %1462 = vmatpush1.msra.mxu0 %v1426
    %1463 = vmatprep.subr.mxu0 0.0
    %1464 = vmatpush2.msra.mxu0 0.0
    %1465 = vmatprep.subr.mxu0 0.0
    %1466 = vmatpush2.msra.mxu0 0.0
    %1467 = vmatprep.subr.mxu0 0.0
    %1468 = vmatpush2.msra.mxu0 0.0
    %1469 = vmatprep.subr.mxu0 0.0
    %1470 = vmatpush2.msra.mxu0 0.0
    %1471 = vmatprep.subr.mxu0 0.0
    %1472 = vmatpush2.msra.mxu0 0.0
    %1473 = vmatprep.subr.mxu0 0.0
    %1474 = vmatpush2.msra.mxu0 0.0
    %1475 = vmatprep.subr.mxu0 0.0
    %1476 = vmatpush2.msra.mxu0 0.0
    %1477 = vmatprep.subr.mxu0 0.0
    %1478 = vmatpush2.msra.mxu0 0.0
    %1479 = vmatprep.subr.mxu0 0.0
    %1480 = vmatpush2.msra.mxu0 0.0
    %1481 = vmatprep.subr.mxu0 0.0
    %1482 = vmatpush2.msra.mxu0 0.0
    %1483 = vmatprep.subr.mxu0 0.0
    %1484 = vmatpush2.msra.mxu0 0.0
    %1485 = vmatprep.subr.mxu0 0.0
    %1486 = vmatpush2.msra.mxu0 0.0
    %1487 = vmatprep.subr.mxu0 0.0
    %1488 = vmatpush2.msra.mxu0 0.0
    %1489 = vmatprep.subr.mxu0 0.0
    %1490 = vmatpush2.msra.mxu0 0.0
    %1491 = vmatprep.subr.mxu0 0.0
    %1492 = vmatpush2.msra.mxu0 0.0
    %1493 = vmatprep.subr.mxu0 0.0
    %1494 = vmatpush2.msra.mxu0 0.0
    %1495 = vmatprep.mubr.f32.mxu0 0.0
    %1496 = vmatmul.mubr.f32.gmra.mxu0 %v1429
    %v1497 = vpop.f32.mrf.mxu0
    %v1498 = vadd.f32 0.0, %v1497
    %v1499 = vpop.f32.mrf.mxu0
    %1500 = vdwg.mxu0
    %1502 = vrot.lane.b32.xlu0 %v1042, 8
    %v1503 = vpop.permute.xlu0 %1502
    %1506 = vrot.lane.b32.xlu0 %v1118, 16
    %v1507 = vpop.permute.xlu0 %1506
    %1510 = vrot.lane.b32.xlu0 %v1194, 24
    %v1511 = vpop.permute.xlu0 %1510
    %v1513 = vsel %vm170, %v966, %v1503
    %vm1514 = vcmask 130048
    %v1515 = vsel %vm1514, %v1513, %v1507
    %vm1516 = vcmask 195584
    %v1517 = vsel %vm1516, %v1515, %v1511
    %1519 = vrot.lane.b32.xlu0 %v1346, 8
    %v1520 = vpop.permute.xlu0 %1519
    %1523 = vrot.lane.b32.xlu0 %v1422, 16
    %v1524 = vpop.permute.xlu0 %1523
    %1527 = vrot.lane.b32.xlu0 %v1498, 24
    %v1528 = vpop.permute.xlu0 %1527
    %v1530 = vsel %vm170, %v1270, %v1520
    %v1531 = vsel %vm1514, %v1530, %v1524
    %v1532 = vsel %vm1516, %v1531, %v1528
    %v1533 = vlaneseq
    %v1534 = vshrl.u32 %v1533, 7
    %v1535 = vsub.s32 0, %v1534
    %v1536 = vrot.slane %v65, %v1535
    %v1538 = vsel %vm72, %v1517, 0
    %v1541 = vsel %vm72, %v1532, 0
    %1543 = vmatprep.subr.mxu0 0.0
    %1544 = vmatpush1.msra.mxu0 0.0
    %1545 = vmatprep.subr.mxu0 0.0
    %1546 = vmatpush1.msra.mxu0 0.0
    %1547 = vmatprep.subr.mxu0 0.0
    %1548 = vmatpush1.msra.mxu0 0.0
    %1549 = vmatprep.subr.mxu0 0.0
    %1550 = vmatpush1.msra.mxu0 0.0
    %1551 = vmatprep.subr.mxu0 0.0
    %1552 = vmatpush1.msra.mxu0 0.0
    %1553 = vmatprep.subr.mxu0 0.0
    %1554 = vmatpush1.msra.mxu0 0.0
    %1555 = vmatprep.subr.mxu0 0.0
    %1556 = vmatpush1.msra.mxu0 0.0
    %1557 = vmatprep.subr.mxu0 0.0
    %1558 = vmatpush1.msra.mxu0 0.0
    %1559 = vmatprep.subr.mxu0 0.0
    %1560 = vmatpush1.msra.mxu0 0.0
    %1561 = vmatprep.subr.mxu0 0.0
    %1562 = vmatpush1.msra.mxu0 0.0
    %1563 = vmatprep.subr.mxu0 0.0
    %1564 = vmatpush1.msra.mxu0 0.0
    %1565 = vmatprep.subr.mxu0 0.0
    %1566 = vmatpush1.msra.mxu0 0.0
    %1567 = vmatprep.subr.mxu0 0.0
    %1568 = vmatpush1.msra.mxu0 %v51
    %1569 = vmatprep.subr.mxu0 0.0
    %1570 = vmatpush1.msra.mxu0 %v50
    %1571 = vmatprep.subr.mxu0 0.0
    %1572 = vmatpush1.msra.mxu0 %v49
    %1573 = vmatprep.subr.mxu0 0.0
    %1574 = vmatpush1.msra.mxu0 %v48
    %1575 = vmatprep.subr.mxu0 0.0
    %1576 = vmatpush2.msra.mxu0 0.0
    %1577 = vmatprep.subr.mxu0 0.0
    %1578 = vmatpush2.msra.mxu0 0.0
    %1579 = vmatprep.subr.mxu0 0.0
    %1580 = vmatpush2.msra.mxu0 0.0
    %1581 = vmatprep.subr.mxu0 0.0
    %1582 = vmatpush2.msra.mxu0 0.0
    %1583 = vmatprep.subr.mxu0 0.0
    %1584 = vmatpush2.msra.mxu0 0.0
    %1585 = vmatprep.subr.mxu0 0.0
    %1586 = vmatpush2.msra.mxu0 0.0
    %1587 = vmatprep.subr.mxu0 0.0
    %1588 = vmatpush2.msra.mxu0 0.0
    %1589 = vmatprep.subr.mxu0 0.0
    %1590 = vmatpush2.msra.mxu0 0.0
    %1591 = vmatprep.subr.mxu0 0.0
    %1592 = vmatpush2.msra.mxu0 0.0
    %1593 = vmatprep.subr.mxu0 0.0
    %1594 = vmatpush2.msra.mxu0 0.0
    %1595 = vmatprep.subr.mxu0 0.0
    %1596 = vmatpush2.msra.mxu0 0.0
    %1597 = vmatprep.subr.mxu0 0.0
    %1598 = vmatpush2.msra.mxu0 0.0
    %1599 = vmatprep.subr.mxu0 0.0
    %1600 = vmatpush2.msra.mxu0 0.0
    %1601 = vmatprep.subr.mxu0 0.0
    %1602 = vmatpush2.msra.mxu0 0.0
    %1603 = vmatprep.subr.mxu0 0.0
    %1604 = vmatpush2.msra.mxu0 0.0
    %1605 = vmatprep.subr.mxu0 0.0
    %1606 = vmatpush2.msra.mxu0 0.0
    %1607 = vmatprep.mubr.f32.mxu0 0.0
    %1608 = vmatmul.mubr.f32.gmra.mxu0 %v1538
    %v1609 = vpop.f32.mrf.mxu0
    %v1610 = vadd.f32 %v1536, %v1609
    %v1611 = vpop.f32.mrf.mxu0
    %1612 = vmatprep.mubr.f32.mxu0 0.0
    %1613 = vmatmul.mubr.f32.gmra.mxu0 %v1541
    %v1614 = vpop.f32.mrf.mxu0
    %v1615 = vadd.f32 %v1536, %v1614
    %v1616 = vpop.f32.mrf.mxu0
    %1617 = vdwg.mxu0
    %v1618 = vadd.f32 %v1610, %v33
    %v1619 = vadd.f32 %v1615, %v34
    %v1620 = vsel %vm72, %v1618, 0.0
    %1621 = vadd.xlane.f32.xlu0 %v1620
    %v1622 = vpop.xlane.xlu0 %1621
    %v1623 = vsel %vm72, %v1619, 0.0
    %1624 = vadd.xlane.f32.xlu0 %v1623
    %v1625 = vpop.xlane.xlu0 %1624
    %v1626 = vrcp.pop 32.0
    %v1627 = vmul.f32 %v1622, %v1626
    %v1628 = vmul.f32 %v1625, %v1626
    %v1629 = vsub.f32 %v1618, %v1627
    %v1630 = vsub.f32 %v1619, %v1628
    %v1631 = vmul.f32 %v1629, %v1629
    %v1632 = vmul.f32 %v1630, %v1630
    %v1633 = vsel %vm72, %v1631, 0.0
    %1634 = vadd.xlane.f32.xlu0 %v1633
    %v1635 = vpop.xlane.xlu0 %1634
    %v1636 = vsel %vm72, %v1632, 0.0
    %1637 = vadd.xlane.f32.xlu0 %v1636
    %v1638 = vpop.xlane.xlu0 %1637
    %v1639 = vmul.f32 %v1635, %v1626
    %v1640 = vmul.f32 %v1638, %v1626
    %v1641 = vlaneseq
    %v1642 = vshrl.u32 %v1641, 7
    %v1643 = vsub.s32 1, %v1642
    %v1644 = vrot.slane %v65, %v1643
    %v1645 = vmul.f32 %v1644, %v1629
    %v1646 = vmul.f32 %v1644, %v1630
    %v1647 = vadd.f32 %v1639, 1e-12
    %v1648 = vadd.f32 %v1640, 1e-12
    %v1649 = vrsqrt.pop %v1647
    %v1650 = vrsqrt.pop %v1648
    %v1651 = vmul.f32 %v1645, %v1649
    %v1652 = vmul.f32 %v1646, %v1650
    %v1653 = vlaneseq
    %v1654 = vshrl.u32 %v1653, 7
    %v1655 = vsub.s32 2, %v1654
    %v1656 = vrot.slane %v65, %v1655
    %v1657 = vadd.f32 %v1651, %v1656
    %v1658 = vadd.f32 %v1652, %v1656
    %v1660 = vlaneseq
    %v1661 = vshrl.u32 %v1660, 7
    %v1662 = vsub.s32 0, %v1661
    %v1663 = vrot.slane %v56, %v1662
    %v1666 = vsel %vm72, %v1657, 0
    %v1669 = vsel %vm72, %v1658, 0
    %1671 = vmatprep.subr.mxu0 0.0
    %1672 = vmatpush1.msra.mxu0 0.0
    %1673 = vmatprep.subr.mxu0 0.0
    %1674 = vmatpush1.msra.mxu0 0.0
    %1675 = vmatprep.subr.mxu0 0.0
    %1676 = vmatpush1.msra.mxu0 0.0
    %1677 = vmatprep.subr.mxu0 0.0
    %1678 = vmatpush1.msra.mxu0 0.0
    %1679 = vmatprep.subr.mxu0 0.0
    %1680 = vmatpush1.msra.mxu0 0.0
    %1681 = vmatprep.subr.mxu0 0.0
    %1682 = vmatpush1.msra.mxu0 0.0
    %1683 = vmatprep.subr.mxu0 0.0
    %1684 = vmatpush1.msra.mxu0 0.0
    %1685 = vmatprep.subr.mxu0 0.0
    %1686 = vmatpush1.msra.mxu0 0.0
    %1687 = vmatprep.subr.mxu0 0.0
    %1688 = vmatpush1.msra.mxu0 0.0
    %1689 = vmatprep.subr.mxu0 0.0
    %1690 = vmatpush1.msra.mxu0 0.0
    %1691 = vmatprep.subr.mxu0 0.0
    %1692 = vmatpush1.msra.mxu0 0.0
    %1693 = vmatprep.subr.mxu0 0.0
    %1694 = vmatpush1.msra.mxu0 0.0
    %1695 = vmatprep.subr.mxu0 0.0
    %1696 = vmatpush1.msra.mxu0 %v55
    %1697 = vmatprep.subr.mxu0 0.0
    %1698 = vmatpush1.msra.mxu0 %v54
    %1699 = vmatprep.subr.mxu0 0.0
    %1700 = vmatpush1.msra.mxu0 %v53
    %1701 = vmatprep.subr.mxu0 0.0
    %1702 = vmatpush1.msra.mxu0 %v52
    %1703 = vmatprep.subr.mxu0 0.0
    %1704 = vmatpush2.msra.mxu0 0.0
    %1705 = vmatprep.subr.mxu0 0.0
    %1706 = vmatpush2.msra.mxu0 0.0
    %1707 = vmatprep.subr.mxu0 0.0
    %1708 = vmatpush2.msra.mxu0 0.0
    %1709 = vmatprep.subr.mxu0 0.0
    %1710 = vmatpush2.msra.mxu0 0.0
    %1711 = vmatprep.subr.mxu0 0.0
    %1712 = vmatpush2.msra.mxu0 0.0
    %1713 = vmatprep.subr.mxu0 0.0
    %1714 = vmatpush2.msra.mxu0 0.0
    %1715 = vmatprep.subr.mxu0 0.0
    %1716 = vmatpush2.msra.mxu0 0.0
    %1717 = vmatprep.subr.mxu0 0.0
    %1718 = vmatpush2.msra.mxu0 0.0
    %1719 = vmatprep.subr.mxu0 0.0
    %1720 = vmatpush2.msra.mxu0 0.0
    %1721 = vmatprep.subr.mxu0 0.0
    %1722 = vmatpush2.msra.mxu0 0.0
    %1723 = vmatprep.subr.mxu0 0.0
    %1724 = vmatpush2.msra.mxu0 0.0
    %1725 = vmatprep.subr.mxu0 0.0
    %1726 = vmatpush2.msra.mxu0 0.0
    %1727 = vmatprep.subr.mxu0 0.0
    %1728 = vmatpush2.msra.mxu0 0.0
    %1729 = vmatprep.subr.mxu0 0.0
    %1730 = vmatpush2.msra.mxu0 0.0
    %1731 = vmatprep.subr.mxu0 0.0
    %1732 = vmatpush2.msra.mxu0 0.0
    %1733 = vmatprep.subr.mxu0 0.0
    %1734 = vmatpush2.msra.mxu0 0.0
    %1735 = vmatprep.mubr.f32.mxu0 0.0
    %1736 = vmatmul.mubr.f32.gmra.mxu0 %v1666
    %v1737 = vpop.f32.mrf.mxu0
    %v1738 = vadd.f32 %v1663, %v1737
    %v1739 = vpop.f32.mrf.mxu0
    %1740 = vmatprep.mubr.f32.mxu0 0.0
    %1741 = vmatmul.mubr.f32.gmra.mxu0 %v1669
    %v1742 = vpop.f32.mrf.mxu0
    %v1743 = vadd.f32 %v1663, %v1742
    %v1744 = vpop.f32.mrf.mxu0
    %1745 = vdwg.mxu0
    %v1746 = vmax.f32 %v1738, 0.0
    %v1747 = vmax.f32 %v1743, 0.0
    %v1748 = vlaneseq
    %v1749 = vshrl.u32 %v1748, 7
    %v1750 = vsub.s32 3, %v1749
    %v1751 = vrot.slane %v65, %v1750
    %vm1752 = vcmask 523264
    %v1754 = vsel %vm1752, %v1746, 0
    %v1757 = vsel %vm1752, %v1747, 0
    %1759 = vmatprep.subr.mxu0 0.0
    %1760 = vmatpush1.msra.mxu0 0.0
    %1761 = vmatprep.subr.mxu0 0.0
    %1762 = vmatpush1.msra.mxu0 0.0
    %1763 = vmatprep.subr.mxu0 0.0
    %1764 = vmatpush1.msra.mxu0 0.0
    %1765 = vmatprep.subr.mxu0 0.0
    %1766 = vmatpush1.msra.mxu0 0.0
    %1767 = vmatprep.subr.mxu0 0.0
    %1768 = vmatpush1.msra.mxu0 0.0
    %1769 = vmatprep.subr.mxu0 0.0
    %1770 = vmatpush1.msra.mxu0 0.0
    %1771 = vmatprep.subr.mxu0 0.0
    %1772 = vmatpush1.msra.mxu0 0.0
    %1773 = vmatprep.subr.mxu0 0.0
    %1774 = vmatpush1.msra.mxu0 0.0
    %1775 = vmatprep.subr.mxu0 0.0
    %1776 = vmatpush1.msra.mxu0 %v64
    %1777 = vmatprep.subr.mxu0 0.0
    %1778 = vmatpush1.msra.mxu0 %v63
    %1779 = vmatprep.subr.mxu0 0.0
    %1780 = vmatpush1.msra.mxu0 %v62
    %1781 = vmatprep.subr.mxu0 0.0
    %1782 = vmatpush1.msra.mxu0 %v61
    %1783 = vmatprep.subr.mxu0 0.0
    %1784 = vmatpush1.msra.mxu0 %v60
    %1785 = vmatprep.subr.mxu0 0.0
    %1786 = vmatpush1.msra.mxu0 %v59
    %1787 = vmatprep.subr.mxu0 0.0
    %1788 = vmatpush1.msra.mxu0 %v58
    %1789 = vmatprep.subr.mxu0 0.0
    %1790 = vmatpush1.msra.mxu0 %v57
    %1791 = vmatprep.subr.mxu0 0.0
    %1792 = vmatpush2.msra.mxu0 0.0
    %1793 = vmatprep.subr.mxu0 0.0
    %1794 = vmatpush2.msra.mxu0 0.0
    %1795 = vmatprep.subr.mxu0 0.0
    %1796 = vmatpush2.msra.mxu0 0.0
    %1797 = vmatprep.subr.mxu0 0.0
    %1798 = vmatpush2.msra.mxu0 0.0
    %1799 = vmatprep.subr.mxu0 0.0
    %1800 = vmatpush2.msra.mxu0 0.0
    %1801 = vmatprep.subr.mxu0 0.0
    %1802 = vmatpush2.msra.mxu0 0.0
    %1803 = vmatprep.subr.mxu0 0.0
    %1804 = vmatpush2.msra.mxu0 0.0
    %1805 = vmatprep.subr.mxu0 0.0
    %1806 = vmatpush2.msra.mxu0 0.0
    %1807 = vmatprep.subr.mxu0 0.0
    %1808 = vmatpush2.msra.mxu0 0.0
    %1809 = vmatprep.subr.mxu0 0.0
    %1810 = vmatpush2.msra.mxu0 0.0
    %1811 = vmatprep.subr.mxu0 0.0
    %1812 = vmatpush2.msra.mxu0 0.0
    %1813 = vmatprep.subr.mxu0 0.0
    %1814 = vmatpush2.msra.mxu0 0.0
    %1815 = vmatprep.subr.mxu0 0.0
    %1816 = vmatpush2.msra.mxu0 0.0
    %1817 = vmatprep.subr.mxu0 0.0
    %1818 = vmatpush2.msra.mxu0 0.0
    %1819 = vmatprep.subr.mxu0 0.0
    %1820 = vmatpush2.msra.mxu0 0.0
    %1821 = vmatprep.subr.mxu0 0.0
    %1822 = vmatpush2.msra.mxu0 0.0
    %1823 = vmatprep.mubr.f32.mxu0 0.0
    %1824 = vmatmul.mubr.f32.gmra.mxu0 %v1754
    %v1825 = vpop.f32.mrf.mxu0
    %v1826 = vadd.f32 %v1751, %v1825
    %v1827 = vpop.f32.mrf.mxu0
    %1828 = vmatprep.mubr.f32.mxu0 0.0
    %1829 = vmatmul.mubr.f32.gmra.mxu0 %v1757
    %v1830 = vpop.f32.mrf.mxu0
    %v1831 = vadd.f32 %v1751, %v1830
    %v1832 = vpop.f32.mrf.mxu0
    %1833 = vdwg.mxu0
    %v1834 = vadd.f32 %v1826, %v1657
    %v1835 = vadd.f32 %v1831, %v1658
    %v1836 = vsel %vm72, %v1834, 0.0
    %1837 = vadd.xlane.f32.xlu0 %v1836
    %v1838 = vpop.xlane.xlu0 %1837
    %v1839 = vsel %vm72, %v1835, 0.0
    %1840 = vadd.xlane.f32.xlu0 %v1839
    %v1841 = vpop.xlane.xlu0 %1840
    %v1842 = vmul.f32 %v1838, %v1626
    %v1843 = vmul.f32 %v1841, %v1626
    %v1844 = vsub.f32 %v1834, %v1842
    %v1845 = vsub.f32 %v1835, %v1843
    %v1846 = vmul.f32 %v1844, %v1844
    %v1847 = vmul.f32 %v1845, %v1845
    %v1848 = vsel %vm72, %v1846, 0.0
    %1849 = vadd.xlane.f32.xlu0 %v1848
    %v1850 = vpop.xlane.xlu0 %1849
    %v1851 = vsel %vm72, %v1847, 0.0
    %1852 = vadd.xlane.f32.xlu0 %v1851
    %v1853 = vpop.xlane.xlu0 %1852
    %v1854 = vmul.f32 %v1850, %v1626
    %v1855 = vmul.f32 %v1853, %v1626
    %v1856 = vlaneseq
    %v1857 = vshrl.u32 %v1856, 7
    %v1858 = vsub.s32 4, %v1857
    %v1859 = vrot.slane %v65, %v1858
    %v1860 = vmul.f32 %v1859, %v1844
    %v1861 = vmul.f32 %v1859, %v1845
    %v1862 = vadd.f32 %v1854, 1e-12
    %v1863 = vadd.f32 %v1855, 1e-12
    %v1864 = vrsqrt.pop %v1862
    %v1865 = vrsqrt.pop %v1863
    %v1866 = vmul.f32 %v1860, %v1864
    %v1867 = vmul.f32 %v1861, %v1865
    %v1868 = vlaneseq
    %v1869 = vshrl.u32 %v1868, 7
    %v1870 = vsub.s32 5, %v1869
    %v1871 = vrot.slane %v65, %v1870
    %v1872 = vadd.f32 %v1866, %v1871
    %v1873 = vadd.f32 %v1867, %v1871
    %s1874 = scalar_lea.vmem %s2, 32
    %v1875 = vld [vmem:[%s1874] sm:$0xff]
    %v1876 = vld [vmem:[%s1874 + $0x8] sm:$0xff]
    %v1877 = vld [vmem:[%s1874 + $0x10] sm:$0xff]
    %v1878 = vld [vmem:[%s1874 + $0x18] sm:$0xff]
    %s1879 = scalar_lea.vmem %s3, 1
    %v1880 = vld [vmem:[%s1879] sm:$0x1]
    %s1881 = scalar_lea.vmem %s4, 32
    %v1882 = vld [vmem:[%s1881] sm:$0xff]
    %v1883 = vld [vmem:[%s1881 + $0x8] sm:$0xff]
    %v1884 = vld [vmem:[%s1881 + $0x10] sm:$0xff]
    %v1885 = vld [vmem:[%s1881 + $0x18] sm:$0xff]
    %s1886 = scalar_lea.vmem %s5, 32
    %v1887 = vld [vmem:[%s1886] sm:$0xff]
    %v1888 = vld [vmem:[%s1886 + $0x8] sm:$0xff]
    %v1889 = vld [vmem:[%s1886 + $0x10] sm:$0xff]
    %v1890 = vld [vmem:[%s1886 + $0x18] sm:$0xff]
    %s1891 = scalar_lea.vmem %s6, 1
    %v1892 = vld [vmem:[%s1891] sm:$0x1]
    %s1893 = scalar_lea.vmem %s7, 64
    %v1894 = vld [vmem:[%s1893] sm:$0xff]
    %v1895 = vld [vmem:[%s1893 + $0x8] sm:$0xff]
    %v1896 = vld [vmem:[%s1893 + $0x10] sm:$0xff]
    %v1897 = vld [vmem:[%s1893 + $0x18] sm:$0xff]
    %v1898 = vld [vmem:[%s1893 + $0x20] sm:$0xff]
    %v1899 = vld [vmem:[%s1893 + $0x28] sm:$0xff]
    %v1900 = vld [vmem:[%s1893 + $0x30] sm:$0xff]
    %v1901 = vld [vmem:[%s1893 + $0x38] sm:$0xff]
    %s1902 = scalar_lea.vmem %s8, 8
    %v1903 = vld [vmem:[%s1902] sm:$0x3f]
    %v1905 = vlaneseq
    %v1906 = vshrl.u32 %v1905, 7
    %v1907 = vsub.s32 0, %v1906
    %v1908 = vrot.slane %v1880, %v1907
    %v1911 = vsel %vm72, %v1872, 0
    %v1914 = vsel %vm72, %v1873, 0
    %1916 = vmatprep.subr.mxu0 0.0
    %1917 = vmatpush1.msra.mxu0 0.0
    %1918 = vmatprep.subr.mxu0 0.0
    %1919 = vmatpush1.msra.mxu0 0.0
    %1920 = vmatprep.subr.mxu0 0.0
    %1921 = vmatpush1.msra.mxu0 0.0
    %1922 = vmatprep.subr.mxu0 0.0
    %1923 = vmatpush1.msra.mxu0 0.0
    %1924 = vmatprep.subr.mxu0 0.0
    %1925 = vmatpush1.msra.mxu0 0.0
    %1926 = vmatprep.subr.mxu0 0.0
    %1927 = vmatpush1.msra.mxu0 0.0
    %1928 = vmatprep.subr.mxu0 0.0
    %1929 = vmatpush1.msra.mxu0 0.0
    %1930 = vmatprep.subr.mxu0 0.0
    %1931 = vmatpush1.msra.mxu0 0.0
    %1932 = vmatprep.subr.mxu0 0.0
    %1933 = vmatpush1.msra.mxu0 0.0
    %1934 = vmatprep.subr.mxu0 0.0
    %1935 = vmatpush1.msra.mxu0 0.0
    %1936 = vmatprep.subr.mxu0 0.0
    %1937 = vmatpush1.msra.mxu0 0.0
    %1938 = vmatprep.subr.mxu0 0.0
    %1939 = vmatpush1.msra.mxu0 0.0
    %1940 = vmatprep.subr.mxu0 0.0
    %1941 = vmatpush1.msra.mxu0 %v1878
    %1942 = vmatprep.subr.mxu0 0.0
    %1943 = vmatpush1.msra.mxu0 %v1877
    %1944 = vmatprep.subr.mxu0 0.0
    %1945 = vmatpush1.msra.mxu0 %v1876
    %1946 = vmatprep.subr.mxu0 0.0
    %1947 = vmatpush1.msra.mxu0 %v1875
    %1948 = vmatprep.subr.mxu0 0.0
    %1949 = vmatpush2.msra.mxu0 0.0
    %1950 = vmatprep.subr.mxu0 0.0
    %1951 = vmatpush2.msra.mxu0 0.0
    %1952 = vmatprep.subr.mxu0 0.0
    %1953 = vmatpush2.msra.mxu0 0.0
    %1954 = vmatprep.subr.mxu0 0.0
    %1955 = vmatpush2.msra.mxu0 0.0
    %1956 = vmatprep.subr.mxu0 0.0
    %1957 = vmatpush2.msra.mxu0 0.0
    %1958 = vmatprep.subr.mxu0 0.0
    %1959 = vmatpush2.msra.mxu0 0.0
    %1960 = vmatprep.subr.mxu0 0.0
    %1961 = vmatpush2.msra.mxu0 0.0
    %1962 = vmatprep.subr.mxu0 0.0
    %1963 = vmatpush2.msra.mxu0 0.0
    %1964 = vmatprep.subr.mxu0 0.0
    %1965 = vmatpush2.msra.mxu0 0.0
    %1966 = vmatprep.subr.mxu0 0.0
    %1967 = vmatpush2.msra.mxu0 0.0
    %1968 = vmatprep.subr.mxu0 0.0
    %1969 = vmatpush2.msra.mxu0 0.0
    %1970 = vmatprep.subr.mxu0 0.0
    %1971 = vmatpush2.msra.mxu0 0.0
    %1972 = vmatprep.subr.mxu0 0.0
    %1973 = vmatpush2.msra.mxu0 0.0
    %1974 = vmatprep.subr.mxu0 0.0
    %1975 = vmatpush2.msra.mxu0 0.0
    %1976 = vmatprep.subr.mxu0 0.0
    %1977 = vmatpush2.msra.mxu0 0.0
    %1978 = vmatprep.subr.mxu0 0.0
    %1979 = vmatpush2.msra.mxu0 0.0
    %1980 = vmatprep.mubr.f32.mxu0 0.0
    %1981 = vmatmul.mubr.f32.gmra.mxu0 %v1911
    %v1982 = vpop.f32.mrf.mxu0
    %v1983 = vadd.f32 %v1908, %v1982
    %v1984 = vpop.f32.mrf.mxu0
    %1985 = vmatprep.mubr.f32.mxu0 0.0
    %1986 = vmatmul.mubr.f32.gmra.mxu0 %v1914
    %v1987 = vpop.f32.mrf.mxu0
    %v1988 = vadd.f32 %v1908, %v1987
    %v1989 = vpop.f32.mrf.mxu0
    %1990 = vdwg.mxu0
    %1992 = vrot.lane.b32.xlu0 %v1983, 120
    %v1993 = vpop.permute.xlu0 %1992
    %1994 = vrot.lane.b32.xlu0 %v1983, 112
    %v1995 = vpop.permute.xlu0 %1994
    %1996 = vrot.lane.b32.xlu0 %v1983, 104
    %v1997 = vpop.permute.xlu0 %1996
    %1999 = vrot.lane.b32.xlu0 %v1988, 120
    %v2000 = vpop.permute.xlu0 %1999
    %2001 = vrot.lane.b32.xlu0 %v1988, 112
    %v2002 = vpop.permute.xlu0 %2001
    %2003 = vrot.lane.b32.xlu0 %v1988, 104
    %v2004 = vpop.permute.xlu0 %2003
    %2005 = vrot.lane.b32.xlu0 %v1983, 96
    %v2006 = vpop.permute.xlu0 %2005
    %v2007 = vsel %vm170, %v1983, 0
    %v2009 = vsel %vm170, %v2006, 0
    %2011 = vmatprep.subr.mxu0 0.0
    %2012 = vmatpush1.xpose.msra.mxu0 0.0
    %2013 = vmatprep.subr.mxu0 0.0
    %2014 = vmatpush1.xpose.msra.mxu0 0.0
    %2015 = vmatprep.subr.mxu0 0.0
    %2016 = vmatpush1.xpose.msra.mxu0 0.0
    %2017 = vmatprep.subr.mxu0 0.0
    %2018 = vmatpush1.xpose.msra.mxu0 0.0
    %2019 = vmatprep.subr.mxu0 0.0
    %2020 = vmatpush1.xpose.msra.mxu0 0.0
    %2021 = vmatprep.subr.mxu0 0.0
    %2022 = vmatpush1.xpose.msra.mxu0 0.0
    %2023 = vmatprep.subr.mxu0 0.0
    %2024 = vmatpush1.xpose.msra.mxu0 0.0
    %2025 = vmatprep.subr.mxu0 0.0
    %2026 = vmatpush1.xpose.msra.mxu0 0.0
    %2027 = vmatprep.subr.mxu0 0.0
    %2028 = vmatpush1.xpose.msra.mxu0 0.0
    %2029 = vmatprep.subr.mxu0 0.0
    %2030 = vmatpush1.xpose.msra.mxu0 0.0
    %2031 = vmatprep.subr.mxu0 0.0
    %2032 = vmatpush1.xpose.msra.mxu0 0.0
    %2033 = vmatprep.subr.mxu0 0.0
    %2034 = vmatpush1.xpose.msra.mxu0 0.0
    %2035 = vmatprep.subr.mxu0 0.0
    %2036 = vmatpush1.xpose.msra.mxu0 0.0
    %2037 = vmatprep.subr.mxu0 0.0
    %2038 = vmatpush1.xpose.msra.mxu0 0.0
    %2039 = vmatprep.subr.mxu0 0.0
    %2040 = vmatpush1.xpose.msra.mxu0 0.0
    %2041 = vmatprep.subr.mxu0 0.0
    %2042 = vmatpush1.xpose.msra.mxu0 %v2009
    %2043 = vmatprep.subr.mxu0 0.0
    %2044 = vmatpush2.xpose.msra.mxu0 0.0
    %2045 = vmatprep.subr.mxu0 0.0
    %2046 = vmatpush2.xpose.msra.mxu0 0.0
    %2047 = vmatprep.subr.mxu0 0.0
    %2048 = vmatpush2.xpose.msra.mxu0 0.0
    %2049 = vmatprep.subr.mxu0 0.0
    %2050 = vmatpush2.xpose.msra.mxu0 0.0
    %2051 = vmatprep.subr.mxu0 0.0
    %2052 = vmatpush2.xpose.msra.mxu0 0.0
    %2053 = vmatprep.subr.mxu0 0.0
    %2054 = vmatpush2.xpose.msra.mxu0 0.0
    %2055 = vmatprep.subr.mxu0 0.0
    %2056 = vmatpush2.xpose.msra.mxu0 0.0
    %2057 = vmatprep.subr.mxu0 0.0
    %2058 = vmatpush2.xpose.msra.mxu0 0.0
    %2059 = vmatprep.subr.mxu0 0.0
    %2060 = vmatpush2.xpose.msra.mxu0 0.0
    %2061 = vmatprep.subr.mxu0 0.0
    %2062 = vmatpush2.xpose.msra.mxu0 0.0
    %2063 = vmatprep.subr.mxu0 0.0
    %2064 = vmatpush2.xpose.msra.mxu0 0.0
    %2065 = vmatprep.subr.mxu0 0.0
    %2066 = vmatpush2.xpose.msra.mxu0 0.0
    %2067 = vmatprep.subr.mxu0 0.0
    %2068 = vmatpush2.xpose.msra.mxu0 0.0
    %2069 = vmatprep.subr.mxu0 0.0
    %2070 = vmatpush2.xpose.msra.mxu0 0.0
    %2071 = vmatprep.subr.mxu0 0.0
    %2072 = vmatpush2.xpose.msra.mxu0 0.0
    %2073 = vmatprep.subr.mxu0 0.0
    %2074 = vmatpush2.xpose.msra.mxu0 0.0
    %2075 = vmatprep.mubr.f32.mxu0 0.0
    %2076 = vmatmul.mubr.f32.gmra.mxu0 %v2007
    %v2077 = vpop.f32.mrf.mxu0
    %v2078 = vadd.f32 0.0, %v2077
    %v2079 = vpop.f32.mrf.mxu0
    %2080 = vdwg.mxu0
    %2081 = vrot.lane.b32.xlu0 %v1993, 96
    %v2082 = vpop.permute.xlu0 %2081
    %v2083 = vsel %vm170, %v1993, 0
    %v2085 = vsel %vm170, %v2082, 0
    %2087 = vmatprep.subr.mxu0 0.0
    %2088 = vmatpush1.xpose.msra.mxu0 0.0
    %2089 = vmatprep.subr.mxu0 0.0
    %2090 = vmatpush1.xpose.msra.mxu0 0.0
    %2091 = vmatprep.subr.mxu0 0.0
    %2092 = vmatpush1.xpose.msra.mxu0 0.0
    %2093 = vmatprep.subr.mxu0 0.0
    %2094 = vmatpush1.xpose.msra.mxu0 0.0
    %2095 = vmatprep.subr.mxu0 0.0
    %2096 = vmatpush1.xpose.msra.mxu0 0.0
    %2097 = vmatprep.subr.mxu0 0.0
    %2098 = vmatpush1.xpose.msra.mxu0 0.0
    %2099 = vmatprep.subr.mxu0 0.0
    %2100 = vmatpush1.xpose.msra.mxu0 0.0
    %2101 = vmatprep.subr.mxu0 0.0
    %2102 = vmatpush1.xpose.msra.mxu0 0.0
    %2103 = vmatprep.subr.mxu0 0.0
    %2104 = vmatpush1.xpose.msra.mxu0 0.0
    %2105 = vmatprep.subr.mxu0 0.0
    %2106 = vmatpush1.xpose.msra.mxu0 0.0
    %2107 = vmatprep.subr.mxu0 0.0
    %2108 = vmatpush1.xpose.msra.mxu0 0.0
    %2109 = vmatprep.subr.mxu0 0.0
    %2110 = vmatpush1.xpose.msra.mxu0 0.0
    %2111 = vmatprep.subr.mxu0 0.0
    %2112 = vmatpush1.xpose.msra.mxu0 0.0
    %2113 = vmatprep.subr.mxu0 0.0
    %2114 = vmatpush1.xpose.msra.mxu0 0.0
    %2115 = vmatprep.subr.mxu0 0.0
    %2116 = vmatpush1.xpose.msra.mxu0 0.0
    %2117 = vmatprep.subr.mxu0 0.0
    %2118 = vmatpush1.xpose.msra.mxu0 %v2085
    %2119 = vmatprep.subr.mxu0 0.0
    %2120 = vmatpush2.xpose.msra.mxu0 0.0
    %2121 = vmatprep.subr.mxu0 0.0
    %2122 = vmatpush2.xpose.msra.mxu0 0.0
    %2123 = vmatprep.subr.mxu0 0.0
    %2124 = vmatpush2.xpose.msra.mxu0 0.0
    %2125 = vmatprep.subr.mxu0 0.0
    %2126 = vmatpush2.xpose.msra.mxu0 0.0
    %2127 = vmatprep.subr.mxu0 0.0
    %2128 = vmatpush2.xpose.msra.mxu0 0.0
    %2129 = vmatprep.subr.mxu0 0.0
    %2130 = vmatpush2.xpose.msra.mxu0 0.0
    %2131 = vmatprep.subr.mxu0 0.0
    %2132 = vmatpush2.xpose.msra.mxu0 0.0
    %2133 = vmatprep.subr.mxu0 0.0
    %2134 = vmatpush2.xpose.msra.mxu0 0.0
    %2135 = vmatprep.subr.mxu0 0.0
    %2136 = vmatpush2.xpose.msra.mxu0 0.0
    %2137 = vmatprep.subr.mxu0 0.0
    %2138 = vmatpush2.xpose.msra.mxu0 0.0
    %2139 = vmatprep.subr.mxu0 0.0
    %2140 = vmatpush2.xpose.msra.mxu0 0.0
    %2141 = vmatprep.subr.mxu0 0.0
    %2142 = vmatpush2.xpose.msra.mxu0 0.0
    %2143 = vmatprep.subr.mxu0 0.0
    %2144 = vmatpush2.xpose.msra.mxu0 0.0
    %2145 = vmatprep.subr.mxu0 0.0
    %2146 = vmatpush2.xpose.msra.mxu0 0.0
    %2147 = vmatprep.subr.mxu0 0.0
    %2148 = vmatpush2.xpose.msra.mxu0 0.0
    %2149 = vmatprep.subr.mxu0 0.0
    %2150 = vmatpush2.xpose.msra.mxu0 0.0
    %2151 = vmatprep.mubr.f32.mxu0 0.0
    %2152 = vmatmul.mubr.f32.gmra.mxu0 %v2083
    %v2153 = vpop.f32.mrf.mxu0
    %v2154 = vadd.f32 0.0, %v2153
    %v2155 = vpop.f32.mrf.mxu0
    %2156 = vdwg.mxu0
    %2157 = vrot.lane.b32.xlu0 %v1995, 96
    %v2158 = vpop.permute.xlu0 %2157
    %v2159 = vsel %vm170, %v1995, 0
    %v2161 = vsel %vm170, %v2158, 0
    %2163 = vmatprep.subr.mxu0 0.0
    %2164 = vmatpush1.xpose.msra.mxu0 0.0
    %2165 = vmatprep.subr.mxu0 0.0
    %2166 = vmatpush1.xpose.msra.mxu0 0.0
    %2167 = vmatprep.subr.mxu0 0.0
    %2168 = vmatpush1.xpose.msra.mxu0 0.0
    %2169 = vmatprep.subr.mxu0 0.0
    %2170 = vmatpush1.xpose.msra.mxu0 0.0
    %2171 = vmatprep.subr.mxu0 0.0
    %2172 = vmatpush1.xpose.msra.mxu0 0.0
    %2173 = vmatprep.subr.mxu0 0.0
    %2174 = vmatpush1.xpose.msra.mxu0 0.0
    %2175 = vmatprep.subr.mxu0 0.0
    %2176 = vmatpush1.xpose.msra.mxu0 0.0
    %2177 = vmatprep.subr.mxu0 0.0
    %2178 = vmatpush1.xpose.msra.mxu0 0.0
    %2179 = vmatprep.subr.mxu0 0.0
    %2180 = vmatpush1.xpose.msra.mxu0 0.0
    %2181 = vmatprep.subr.mxu0 0.0
    %2182 = vmatpush1.xpose.msra.mxu0 0.0
    %2183 = vmatprep.subr.mxu0 0.0
    %2184 = vmatpush1.xpose.msra.mxu0 0.0
    %2185 = vmatprep.subr.mxu0 0.0
    %2186 = vmatpush1.xpose.msra.mxu0 0.0
    %2187 = vmatprep.subr.mxu0 0.0
    %2188 = vmatpush1.xpose.msra.mxu0 0.0
    %2189 = vmatprep.subr.mxu0 0.0
    %2190 = vmatpush1.xpose.msra.mxu0 0.0
    %2191 = vmatprep.subr.mxu0 0.0
    %2192 = vmatpush1.xpose.msra.mxu0 0.0
    %2193 = vmatprep.subr.mxu0 0.0
    %2194 = vmatpush1.xpose.msra.mxu0 %v2161
    %2195 = vmatprep.subr.mxu0 0.0
    %2196 = vmatpush2.xpose.msra.mxu0 0.0
    %2197 = vmatprep.subr.mxu0 0.0
    %2198 = vmatpush2.xpose.msra.mxu0 0.0
    %2199 = vmatprep.subr.mxu0 0.0
    %2200 = vmatpush2.xpose.msra.mxu0 0.0
    %2201 = vmatprep.subr.mxu0 0.0
    %2202 = vmatpush2.xpose.msra.mxu0 0.0
    %2203 = vmatprep.subr.mxu0 0.0
    %2204 = vmatpush2.xpose.msra.mxu0 0.0
    %2205 = vmatprep.subr.mxu0 0.0
    %2206 = vmatpush2.xpose.msra.mxu0 0.0
    %2207 = vmatprep.subr.mxu0 0.0
    %2208 = vmatpush2.xpose.msra.mxu0 0.0
    %2209 = vmatprep.subr.mxu0 0.0
    %2210 = vmatpush2.xpose.msra.mxu0 0.0
    %2211 = vmatprep.subr.mxu0 0.0
    %2212 = vmatpush2.xpose.msra.mxu0 0.0
    %2213 = vmatprep.subr.mxu0 0.0
    %2214 = vmatpush2.xpose.msra.mxu0 0.0
    %2215 = vmatprep.subr.mxu0 0.0
    %2216 = vmatpush2.xpose.msra.mxu0 0.0
    %2217 = vmatprep.subr.mxu0 0.0
    %2218 = vmatpush2.xpose.msra.mxu0 0.0
    %2219 = vmatprep.subr.mxu0 0.0
    %2220 = vmatpush2.xpose.msra.mxu0 0.0
    %2221 = vmatprep.subr.mxu0 0.0
    %2222 = vmatpush2.xpose.msra.mxu0 0.0
    %2223 = vmatprep.subr.mxu0 0.0
    %2224 = vmatpush2.xpose.msra.mxu0 0.0
    %2225 = vmatprep.subr.mxu0 0.0
    %2226 = vmatpush2.xpose.msra.mxu0 0.0
    %2227 = vmatprep.mubr.f32.mxu0 0.0
    %2228 = vmatmul.mubr.f32.gmra.mxu0 %v2159
    %v2229 = vpop.f32.mrf.mxu0
    %v2230 = vadd.f32 0.0, %v2229
    %v2231 = vpop.f32.mrf.mxu0
    %2232 = vdwg.mxu0
    %2233 = vrot.lane.b32.xlu0 %v1997, 96
    %v2234 = vpop.permute.xlu0 %2233
    %v2235 = vsel %vm170, %v1997, 0
    %v2237 = vsel %vm170, %v2234, 0
    %2239 = vmatprep.subr.mxu0 0.0
    %2240 = vmatpush1.xpose.msra.mxu0 0.0
    %2241 = vmatprep.subr.mxu0 0.0
    %2242 = vmatpush1.xpose.msra.mxu0 0.0
    %2243 = vmatprep.subr.mxu0 0.0
    %2244 = vmatpush1.xpose.msra.mxu0 0.0
    %2245 = vmatprep.subr.mxu0 0.0
    %2246 = vmatpush1.xpose.msra.mxu0 0.0
    %2247 = vmatprep.subr.mxu0 0.0
    %2248 = vmatpush1.xpose.msra.mxu0 0.0
    %2249 = vmatprep.subr.mxu0 0.0
    %2250 = vmatpush1.xpose.msra.mxu0 0.0
    %2251 = vmatprep.subr.mxu0 0.0
    %2252 = vmatpush1.xpose.msra.mxu0 0.0
    %2253 = vmatprep.subr.mxu0 0.0
    %2254 = vmatpush1.xpose.msra.mxu0 0.0
    %2255 = vmatprep.subr.mxu0 0.0
    %2256 = vmatpush1.xpose.msra.mxu0 0.0
    %2257 = vmatprep.subr.mxu0 0.0
    %2258 = vmatpush1.xpose.msra.mxu0 0.0
    %2259 = vmatprep.subr.mxu0 0.0
    %2260 = vmatpush1.xpose.msra.mxu0 0.0
    %2261 = vmatprep.subr.mxu0 0.0
    %2262 = vmatpush1.xpose.msra.mxu0 0.0
    %2263 = vmatprep.subr.mxu0 0.0
    %2264 = vmatpush1.xpose.msra.mxu0 0.0
    %2265 = vmatprep.subr.mxu0 0.0
    %2266 = vmatpush1.xpose.msra.mxu0 0.0
    %2267 = vmatprep.subr.mxu0 0.0
    %2268 = vmatpush1.xpose.msra.mxu0 0.0
    %2269 = vmatprep.subr.mxu0 0.0
    %2270 = vmatpush1.xpose.msra.mxu0 %v2237
    %2271 = vmatprep.subr.mxu0 0.0
    %2272 = vmatpush2.xpose.msra.mxu0 0.0
    %2273 = vmatprep.subr.mxu0 0.0
    %2274 = vmatpush2.xpose.msra.mxu0 0.0
    %2275 = vmatprep.subr.mxu0 0.0
    %2276 = vmatpush2.xpose.msra.mxu0 0.0
    %2277 = vmatprep.subr.mxu0 0.0
    %2278 = vmatpush2.xpose.msra.mxu0 0.0
    %2279 = vmatprep.subr.mxu0 0.0
    %2280 = vmatpush2.xpose.msra.mxu0 0.0
    %2281 = vmatprep.subr.mxu0 0.0
    %2282 = vmatpush2.xpose.msra.mxu0 0.0
    %2283 = vmatprep.subr.mxu0 0.0
    %2284 = vmatpush2.xpose.msra.mxu0 0.0
    %2285 = vmatprep.subr.mxu0 0.0
    %2286 = vmatpush2.xpose.msra.mxu0 0.0
    %2287 = vmatprep.subr.mxu0 0.0
    %2288 = vmatpush2.xpose.msra.mxu0 0.0
    %2289 = vmatprep.subr.mxu0 0.0
    %2290 = vmatpush2.xpose.msra.mxu0 0.0
    %2291 = vmatprep.subr.mxu0 0.0
    %2292 = vmatpush2.xpose.msra.mxu0 0.0
    %2293 = vmatprep.subr.mxu0 0.0
    %2294 = vmatpush2.xpose.msra.mxu0 0.0
    %2295 = vmatprep.subr.mxu0 0.0
    %2296 = vmatpush2.xpose.msra.mxu0 0.0
    %2297 = vmatprep.subr.mxu0 0.0
    %2298 = vmatpush2.xpose.msra.mxu0 0.0
    %2299 = vmatprep.subr.mxu0 0.0
    %2300 = vmatpush2.xpose.msra.mxu0 0.0
    %2301 = vmatprep.subr.mxu0 0.0
    %2302 = vmatpush2.xpose.msra.mxu0 0.0
    %2303 = vmatprep.mubr.f32.mxu0 0.0
    %2304 = vmatmul.mubr.f32.gmra.mxu0 %v2235
    %v2305 = vpop.f32.mrf.mxu0
    %v2306 = vadd.f32 0.0, %v2305
    %v2307 = vpop.f32.mrf.mxu0
    %2308 = vdwg.mxu0
    %2309 = vrot.lane.b32.xlu0 %v1988, 96
    %v2310 = vpop.permute.xlu0 %2309
    %v2311 = vsel %vm170, %v1988, 0
    %v2313 = vsel %vm170, %v2310, 0
    %2315 = vmatprep.subr.mxu0 0.0
    %2316 = vmatpush1.xpose.msra.mxu0 0.0
    %2317 = vmatprep.subr.mxu0 0.0
    %2318 = vmatpush1.xpose.msra.mxu0 0.0
    %2319 = vmatprep.subr.mxu0 0.0
    %2320 = vmatpush1.xpose.msra.mxu0 0.0
    %2321 = vmatprep.subr.mxu0 0.0
    %2322 = vmatpush1.xpose.msra.mxu0 0.0
    %2323 = vmatprep.subr.mxu0 0.0
    %2324 = vmatpush1.xpose.msra.mxu0 0.0
    %2325 = vmatprep.subr.mxu0 0.0
    %2326 = vmatpush1.xpose.msra.mxu0 0.0
    %2327 = vmatprep.subr.mxu0 0.0
    %2328 = vmatpush1.xpose.msra.mxu0 0.0
    %2329 = vmatprep.subr.mxu0 0.0
    %2330 = vmatpush1.xpose.msra.mxu0 0.0
    %2331 = vmatprep.subr.mxu0 0.0
    %2332 = vmatpush1.xpose.msra.mxu0 0.0
    %2333 = vmatprep.subr.mxu0 0.0
    %2334 = vmatpush1.xpose.msra.mxu0 0.0
    %2335 = vmatprep.subr.mxu0 0.0
    %2336 = vmatpush1.xpose.msra.mxu0 0.0
    %2337 = vmatprep.subr.mxu0 0.0
    %2338 = vmatpush1.xpose.msra.mxu0 0.0
    %2339 = vmatprep.subr.mxu0 0.0
    %2340 = vmatpush1.xpose.msra.mxu0 0.0
    %2341 = vmatprep.subr.mxu0 0.0
    %2342 = vmatpush1.xpose.msra.mxu0 0.0
    %2343 = vmatprep.subr.mxu0 0.0
    %2344 = vmatpush1.xpose.msra.mxu0 0.0
    %2345 = vmatprep.subr.mxu0 0.0
    %2346 = vmatpush1.xpose.msra.mxu0 %v2313
    %2347 = vmatprep.subr.mxu0 0.0
    %2348 = vmatpush2.xpose.msra.mxu0 0.0
    %2349 = vmatprep.subr.mxu0 0.0
    %2350 = vmatpush2.xpose.msra.mxu0 0.0
    %2351 = vmatprep.subr.mxu0 0.0
    %2352 = vmatpush2.xpose.msra.mxu0 0.0
    %2353 = vmatprep.subr.mxu0 0.0
    %2354 = vmatpush2.xpose.msra.mxu0 0.0
    %2355 = vmatprep.subr.mxu0 0.0
    %2356 = vmatpush2.xpose.msra.mxu0 0.0
    %2357 = vmatprep.subr.mxu0 0.0
    %2358 = vmatpush2.xpose.msra.mxu0 0.0
    %2359 = vmatprep.subr.mxu0 0.0
    %2360 = vmatpush2.xpose.msra.mxu0 0.0
    %2361 = vmatprep.subr.mxu0 0.0
    %2362 = vmatpush2.xpose.msra.mxu0 0.0
    %2363 = vmatprep.subr.mxu0 0.0
    %2364 = vmatpush2.xpose.msra.mxu0 0.0
    %2365 = vmatprep.subr.mxu0 0.0
    %2366 = vmatpush2.xpose.msra.mxu0 0.0
    %2367 = vmatprep.subr.mxu0 0.0
    %2368 = vmatpush2.xpose.msra.mxu0 0.0
    %2369 = vmatprep.subr.mxu0 0.0
    %2370 = vmatpush2.xpose.msra.mxu0 0.0
    %2371 = vmatprep.subr.mxu0 0.0
    %2372 = vmatpush2.xpose.msra.mxu0 0.0
    %2373 = vmatprep.subr.mxu0 0.0
    %2374 = vmatpush2.xpose.msra.mxu0 0.0
    %2375 = vmatprep.subr.mxu0 0.0
    %2376 = vmatpush2.xpose.msra.mxu0 0.0
    %2377 = vmatprep.subr.mxu0 0.0
    %2378 = vmatpush2.xpose.msra.mxu0 0.0
    %2379 = vmatprep.mubr.f32.mxu0 0.0
    %2380 = vmatmul.mubr.f32.gmra.mxu0 %v2311
    %v2381 = vpop.f32.mrf.mxu0
    %v2382 = vadd.f32 0.0, %v2381
    %v2383 = vpop.f32.mrf.mxu0
    %2384 = vdwg.mxu0
    %2385 = vrot.lane.b32.xlu0 %v2000, 96
    %v2386 = vpop.permute.xlu0 %2385
    %v2387 = vsel %vm170, %v2000, 0
    %v2389 = vsel %vm170, %v2386, 0
    %2391 = vmatprep.subr.mxu0 0.0
    %2392 = vmatpush1.xpose.msra.mxu0 0.0
    %2393 = vmatprep.subr.mxu0 0.0
    %2394 = vmatpush1.xpose.msra.mxu0 0.0
    %2395 = vmatprep.subr.mxu0 0.0
    %2396 = vmatpush1.xpose.msra.mxu0 0.0
    %2397 = vmatprep.subr.mxu0 0.0
    %2398 = vmatpush1.xpose.msra.mxu0 0.0
    %2399 = vmatprep.subr.mxu0 0.0
    %2400 = vmatpush1.xpose.msra.mxu0 0.0
    %2401 = vmatprep.subr.mxu0 0.0
    %2402 = vmatpush1.xpose.msra.mxu0 0.0
    %2403 = vmatprep.subr.mxu0 0.0
    %2404 = vmatpush1.xpose.msra.mxu0 0.0
    %2405 = vmatprep.subr.mxu0 0.0
    %2406 = vmatpush1.xpose.msra.mxu0 0.0
    %2407 = vmatprep.subr.mxu0 0.0
    %2408 = vmatpush1.xpose.msra.mxu0 0.0
    %2409 = vmatprep.subr.mxu0 0.0
    %2410 = vmatpush1.xpose.msra.mxu0 0.0
    %2411 = vmatprep.subr.mxu0 0.0
    %2412 = vmatpush1.xpose.msra.mxu0 0.0
    %2413 = vmatprep.subr.mxu0 0.0
    %2414 = vmatpush1.xpose.msra.mxu0 0.0
    %2415 = vmatprep.subr.mxu0 0.0
    %2416 = vmatpush1.xpose.msra.mxu0 0.0
    %2417 = vmatprep.subr.mxu0 0.0
    %2418 = vmatpush1.xpose.msra.mxu0 0.0
    %2419 = vmatprep.subr.mxu0 0.0
    %2420 = vmatpush1.xpose.msra.mxu0 0.0
    %2421 = vmatprep.subr.mxu0 0.0
    %2422 = vmatpush1.xpose.msra.mxu0 %v2389
    %2423 = vmatprep.subr.mxu0 0.0
    %2424 = vmatpush2.xpose.msra.mxu0 0.0
    %2425 = vmatprep.subr.mxu0 0.0
    %2426 = vmatpush2.xpose.msra.mxu0 0.0
    %2427 = vmatprep.subr.mxu0 0.0
    %2428 = vmatpush2.xpose.msra.mxu0 0.0
    %2429 = vmatprep.subr.mxu0 0.0
    %2430 = vmatpush2.xpose.msra.mxu0 0.0
    %2431 = vmatprep.subr.mxu0 0.0
    %2432 = vmatpush2.xpose.msra.mxu0 0.0
    %2433 = vmatprep.subr.mxu0 0.0
    %2434 = vmatpush2.xpose.msra.mxu0 0.0
    %2435 = vmatprep.subr.mxu0 0.0
    %2436 = vmatpush2.xpose.msra.mxu0 0.0
    %2437 = vmatprep.subr.mxu0 0.0
    %2438 = vmatpush2.xpose.msra.mxu0 0.0
    %2439 = vmatprep.subr.mxu0 0.0
    %2440 = vmatpush2.xpose.msra.mxu0 0.0
    %2441 = vmatprep.subr.mxu0 0.0
    %2442 = vmatpush2.xpose.msra.mxu0 0.0
    %2443 = vmatprep.subr.mxu0 0.0
    %2444 = vmatpush2.xpose.msra.mxu0 0.0
    %2445 = vmatprep.subr.mxu0 0.0
    %2446 = vmatpush2.xpose.msra.mxu0 0.0
    %2447 = vmatprep.subr.mxu0 0.0
    %2448 = vmatpush2.xpose.msra.mxu0 0.0
    %2449 = vmatprep.subr.mxu0 0.0
    %2450 = vmatpush2.xpose.msra.mxu0 0.0
    %2451 = vmatprep.subr.mxu0 0.0
    %2452 = vmatpush2.xpose.msra.mxu0 0.0
    %2453 = vmatprep.subr.mxu0 0.0
    %2454 = vmatpush2.xpose.msra.mxu0 0.0
    %2455 = vmatprep.mubr.f32.mxu0 0.0
    %2456 = vmatmul.mubr.f32.gmra.mxu0 %v2387
    %v2457 = vpop.f32.mrf.mxu0
    %v2458 = vadd.f32 0.0, %v2457
    %v2459 = vpop.f32.mrf.mxu0
    %2460 = vdwg.mxu0
    %2461 = vrot.lane.b32.xlu0 %v2002, 96
    %v2462 = vpop.permute.xlu0 %2461
    %v2463 = vsel %vm170, %v2002, 0
    %v2465 = vsel %vm170, %v2462, 0
    %2467 = vmatprep.subr.mxu0 0.0
    %2468 = vmatpush1.xpose.msra.mxu0 0.0
    %2469 = vmatprep.subr.mxu0 0.0
    %2470 = vmatpush1.xpose.msra.mxu0 0.0
    %2471 = vmatprep.subr.mxu0 0.0
    %2472 = vmatpush1.xpose.msra.mxu0 0.0
    %2473 = vmatprep.subr.mxu0 0.0
    %2474 = vmatpush1.xpose.msra.mxu0 0.0
    %2475 = vmatprep.subr.mxu0 0.0
    %2476 = vmatpush1.xpose.msra.mxu0 0.0
    %2477 = vmatprep.subr.mxu0 0.0
    %2478 = vmatpush1.xpose.msra.mxu0 0.0
    %2479 = vmatprep.subr.mxu0 0.0
    %2480 = vmatpush1.xpose.msra.mxu0 0.0
    %2481 = vmatprep.subr.mxu0 0.0
    %2482 = vmatpush1.xpose.msra.mxu0 0.0
    %2483 = vmatprep.subr.mxu0 0.0
    %2484 = vmatpush1.xpose.msra.mxu0 0.0
    %2485 = vmatprep.subr.mxu0 0.0
    %2486 = vmatpush1.xpose.msra.mxu0 0.0
    %2487 = vmatprep.subr.mxu0 0.0
    %2488 = vmatpush1.xpose.msra.mxu0 0.0
    %2489 = vmatprep.subr.mxu0 0.0
    %2490 = vmatpush1.xpose.msra.mxu0 0.0
    %2491 = vmatprep.subr.mxu0 0.0
    %2492 = vmatpush1.xpose.msra.mxu0 0.0
    %2493 = vmatprep.subr.mxu0 0.0
    %2494 = vmatpush1.xpose.msra.mxu0 0.0
    %2495 = vmatprep.subr.mxu0 0.0
    %2496 = vmatpush1.xpose.msra.mxu0 0.0
    %2497 = vmatprep.subr.mxu0 0.0
    %2498 = vmatpush1.xpose.msra.mxu0 %v2465
    %2499 = vmatprep.subr.mxu0 0.0
    %2500 = vmatpush2.xpose.msra.mxu0 0.0
    %2501 = vmatprep.subr.mxu0 0.0
    %2502 = vmatpush2.xpose.msra.mxu0 0.0
    %2503 = vmatprep.subr.mxu0 0.0
    %2504 = vmatpush2.xpose.msra.mxu0 0.0
    %2505 = vmatprep.subr.mxu0 0.0
    %2506 = vmatpush2.xpose.msra.mxu0 0.0
    %2507 = vmatprep.subr.mxu0 0.0
    %2508 = vmatpush2.xpose.msra.mxu0 0.0
    %2509 = vmatprep.subr.mxu0 0.0
    %2510 = vmatpush2.xpose.msra.mxu0 0.0
    %2511 = vmatprep.subr.mxu0 0.0
    %2512 = vmatpush2.xpose.msra.mxu0 0.0
    %2513 = vmatprep.subr.mxu0 0.0
    %2514 = vmatpush2.xpose.msra.mxu0 0.0
    %2515 = vmatprep.subr.mxu0 0.0
    %2516 = vmatpush2.xpose.msra.mxu0 0.0
    %2517 = vmatprep.subr.mxu0 0.0
    %2518 = vmatpush2.xpose.msra.mxu0 0.0
    %2519 = vmatprep.subr.mxu0 0.0
    %2520 = vmatpush2.xpose.msra.mxu0 0.0
    %2521 = vmatprep.subr.mxu0 0.0
    %2522 = vmatpush2.xpose.msra.mxu0 0.0
    %2523 = vmatprep.subr.mxu0 0.0
    %2524 = vmatpush2.xpose.msra.mxu0 0.0
    %2525 = vmatprep.subr.mxu0 0.0
    %2526 = vmatpush2.xpose.msra.mxu0 0.0
    %2527 = vmatprep.subr.mxu0 0.0
    %2528 = vmatpush2.xpose.msra.mxu0 0.0
    %2529 = vmatprep.subr.mxu0 0.0
    %2530 = vmatpush2.xpose.msra.mxu0 0.0
    %2531 = vmatprep.mubr.f32.mxu0 0.0
    %2532 = vmatmul.mubr.f32.gmra.mxu0 %v2463
    %v2533 = vpop.f32.mrf.mxu0
    %v2534 = vadd.f32 0.0, %v2533
    %v2535 = vpop.f32.mrf.mxu0
    %2536 = vdwg.mxu0
    %2537 = vrot.lane.b32.xlu0 %v2004, 96
    %v2538 = vpop.permute.xlu0 %2537
    %v2539 = vsel %vm170, %v2004, 0
    %v2541 = vsel %vm170, %v2538, 0
    %2543 = vmatprep.subr.mxu0 0.0
    %2544 = vmatpush1.xpose.msra.mxu0 0.0
    %2545 = vmatprep.subr.mxu0 0.0
    %2546 = vmatpush1.xpose.msra.mxu0 0.0
    %2547 = vmatprep.subr.mxu0 0.0
    %2548 = vmatpush1.xpose.msra.mxu0 0.0
    %2549 = vmatprep.subr.mxu0 0.0
    %2550 = vmatpush1.xpose.msra.mxu0 0.0
    %2551 = vmatprep.subr.mxu0 0.0
    %2552 = vmatpush1.xpose.msra.mxu0 0.0
    %2553 = vmatprep.subr.mxu0 0.0
    %2554 = vmatpush1.xpose.msra.mxu0 0.0
    %2555 = vmatprep.subr.mxu0 0.0
    %2556 = vmatpush1.xpose.msra.mxu0 0.0
    %2557 = vmatprep.subr.mxu0 0.0
    %2558 = vmatpush1.xpose.msra.mxu0 0.0
    %2559 = vmatprep.subr.mxu0 0.0
    %2560 = vmatpush1.xpose.msra.mxu0 0.0
    %2561 = vmatprep.subr.mxu0 0.0
    %2562 = vmatpush1.xpose.msra.mxu0 0.0
    %2563 = vmatprep.subr.mxu0 0.0
    %2564 = vmatpush1.xpose.msra.mxu0 0.0
    %2565 = vmatprep.subr.mxu0 0.0
    %2566 = vmatpush1.xpose.msra.mxu0 0.0
    %2567 = vmatprep.subr.mxu0 0.0
    %2568 = vmatpush1.xpose.msra.mxu0 0.0
    %2569 = vmatprep.subr.mxu0 0.0
    %2570 = vmatpush1.xpose.msra.mxu0 0.0
    %2571 = vmatprep.subr.mxu0 0.0
    %2572 = vmatpush1.xpose.msra.mxu0 0.0
    %2573 = vmatprep.subr.mxu0 0.0
    %2574 = vmatpush1.xpose.msra.mxu0 %v2541
    %2575 = vmatprep.subr.mxu0 0.0
    %2576 = vmatpush2.xpose.msra.mxu0 0.0
    %2577 = vmatprep.subr.mxu0 0.0
    %2578 = vmatpush2.xpose.msra.mxu0 0.0
    %2579 = vmatprep.subr.mxu0 0.0
    %2580 = vmatpush2.xpose.msra.mxu0 0.0
    %2581 = vmatprep.subr.mxu0 0.0
    %2582 = vmatpush2.xpose.msra.mxu0 0.0
    %2583 = vmatprep.subr.mxu0 0.0
    %2584 = vmatpush2.xpose.msra.mxu0 0.0
    %2585 = vmatprep.subr.mxu0 0.0
    %2586 = vmatpush2.xpose.msra.mxu0 0.0
    %2587 = vmatprep.subr.mxu0 0.0
    %2588 = vmatpush2.xpose.msra.mxu0 0.0
    %2589 = vmatprep.subr.mxu0 0.0
    %2590 = vmatpush2.xpose.msra.mxu0 0.0
    %2591 = vmatprep.subr.mxu0 0.0
    %2592 = vmatpush2.xpose.msra.mxu0 0.0
    %2593 = vmatprep.subr.mxu0 0.0
    %2594 = vmatpush2.xpose.msra.mxu0 0.0
    %2595 = vmatprep.subr.mxu0 0.0
    %2596 = vmatpush2.xpose.msra.mxu0 0.0
    %2597 = vmatprep.subr.mxu0 0.0
    %2598 = vmatpush2.xpose.msra.mxu0 0.0
    %2599 = vmatprep.subr.mxu0 0.0
    %2600 = vmatpush2.xpose.msra.mxu0 0.0
    %2601 = vmatprep.subr.mxu0 0.0
    %2602 = vmatpush2.xpose.msra.mxu0 0.0
    %2603 = vmatprep.subr.mxu0 0.0
    %2604 = vmatpush2.xpose.msra.mxu0 0.0
    %2605 = vmatprep.subr.mxu0 0.0
    %2606 = vmatpush2.xpose.msra.mxu0 0.0
    %2607 = vmatprep.mubr.f32.mxu0 0.0
    %2608 = vmatmul.mubr.f32.gmra.mxu0 %v2539
    %v2609 = vpop.f32.mrf.mxu0
    %v2610 = vadd.f32 0.0, %v2609
    %v2611 = vpop.f32.mrf.mxu0
    %2612 = vdwg.mxu0
    %v2613 = vmul.f32 %v2078, 0.35355338
    %v2614 = vmul.f32 %v2154, 0.35355338
    %v2615 = vmul.f32 %v2230, 0.35355338
    %v2616 = vmul.f32 %v2306, 0.35355338
    %v2617 = vmul.f32 %v2382, 0.35355338
    %v2618 = vmul.f32 %v2458, 0.35355338
    %v2619 = vmul.f32 %v2534, 0.35355338
    %v2620 = vmul.f32 %v2610, 0.35355338
    %v2621 = vsel %vm795, %v2613, -10000.0
    %v2622 = vsel %vm795, %v2614, -10000.0
    %v2623 = vsel %vm795, %v2615, -10000.0
    %v2624 = vsel %vm795, %v2616, -10000.0
    %v2625 = vsel %vm796, %v2617, -10000.0
    %v2626 = vsel %vm796, %v2618, -10000.0
    %v2627 = vsel %vm796, %v2619, -10000.0
    %v2628 = vsel %vm796, %v2620, -10000.0
    %v2629 = vsel %vm170, %v2621, -inf
    %2630 = vmax.xlane.f32.xlu0 %v2629
    %v2631 = vpop.xlane.xlu0 %2630
    %v2632 = vsel %vm170, %v2622, -inf
    %2633 = vmax.xlane.f32.xlu0 %v2632
    %v2634 = vpop.xlane.xlu0 %2633
    %v2635 = vsel %vm170, %v2623, -inf
    %2636 = vmax.xlane.f32.xlu0 %v2635
    %v2637 = vpop.xlane.xlu0 %2636
    %v2638 = vsel %vm170, %v2624, -inf
    %2639 = vmax.xlane.f32.xlu0 %v2638
    %v2640 = vpop.xlane.xlu0 %2639
    %v2641 = vsel %vm170, %v2625, -inf
    %2642 = vmax.xlane.f32.xlu0 %v2641
    %v2643 = vpop.xlane.xlu0 %2642
    %v2644 = vsel %vm170, %v2626, -inf
    %2645 = vmax.xlane.f32.xlu0 %v2644
    %v2646 = vpop.xlane.xlu0 %2645
    %v2647 = vsel %vm170, %v2627, -inf
    %2648 = vmax.xlane.f32.xlu0 %v2647
    %v2649 = vpop.xlane.xlu0 %2648
    %v2650 = vsel %vm170, %v2628, -inf
    %2651 = vmax.xlane.f32.xlu0 %v2650
    %v2652 = vpop.xlane.xlu0 %2651
    %v2653 = vsub.f32 %v2621, %v2631
    %v2654 = vsub.f32 %v2622, %v2634
    %v2655 = vsub.f32 %v2623, %v2637
    %v2656 = vsub.f32 %v2624, %v2640
    %v2657 = vsub.f32 %v2625, %v2643
    %v2658 = vsub.f32 %v2626, %v2646
    %v2659 = vsub.f32 %v2627, %v2649
    %v2660 = vsub.f32 %v2628, %v2652
    %v2661 = vmul.f32 %v2653, 1.442695
    %v2662 = vpow.pop %v2661
    %v2663 = vmul.f32 %v2654, 1.442695
    %v2664 = vpow.pop %v2663
    %v2665 = vmul.f32 %v2655, 1.442695
    %v2666 = vpow.pop %v2665
    %v2667 = vmul.f32 %v2656, 1.442695
    %v2668 = vpow.pop %v2667
    %v2669 = vmul.f32 %v2657, 1.442695
    %v2670 = vpow.pop %v2669
    %v2671 = vmul.f32 %v2658, 1.442695
    %v2672 = vpow.pop %v2671
    %v2673 = vmul.f32 %v2659, 1.442695
    %v2674 = vpow.pop %v2673
    %v2675 = vmul.f32 %v2660, 1.442695
    %v2676 = vpow.pop %v2675
    %v2677 = vsel %vm170, %v2662, 0.0
    %2678 = vadd.xlane.f32.xlu0 %v2677
    %v2679 = vpop.xlane.xlu0 %2678
    %v2680 = vsel %vm170, %v2664, 0.0
    %2681 = vadd.xlane.f32.xlu0 %v2680
    %v2682 = vpop.xlane.xlu0 %2681
    %v2683 = vsel %vm170, %v2666, 0.0
    %2684 = vadd.xlane.f32.xlu0 %v2683
    %v2685 = vpop.xlane.xlu0 %2684
    %v2686 = vsel %vm170, %v2668, 0.0
    %2687 = vadd.xlane.f32.xlu0 %v2686
    %v2688 = vpop.xlane.xlu0 %2687
    %v2689 = vsel %vm170, %v2670, 0.0
    %2690 = vadd.xlane.f32.xlu0 %v2689
    %v2691 = vpop.xlane.xlu0 %2690
    %v2692 = vsel %vm170, %v2672, 0.0
    %2693 = vadd.xlane.f32.xlu0 %v2692
    %v2694 = vpop.xlane.xlu0 %2693
    %v2695 = vsel %vm170, %v2674, 0.0
    %2696 = vadd.xlane.f32.xlu0 %v2695
    %v2697 = vpop.xlane.xlu0 %2696
    %v2698 = vsel %vm170, %v2676, 0.0
    %2699 = vadd.xlane.f32.xlu0 %v2698
    %v2700 = vpop.xlane.xlu0 %2699
    %v2701 = vrcp.pop %v2679
    %v2702 = vmul.f32 %v2662, %v2701
    %v2703 = vrcp.pop %v2682
    %v2704 = vmul.f32 %v2664, %v2703
    %v2705 = vrcp.pop %v2685
    %v2706 = vmul.f32 %v2666, %v2705
    %v2707 = vrcp.pop %v2688
    %v2708 = vmul.f32 %v2668, %v2707
    %v2709 = vrcp.pop %v2691
    %v2710 = vmul.f32 %v2670, %v2709
    %v2711 = vrcp.pop %v2694
    %v2712 = vmul.f32 %v2672, %v2711
    %v2713 = vrcp.pop %v2697
    %v2714 = vmul.f32 %v2674, %v2713
    %v2715 = vrcp.pop %v2700
    %v2716 = vmul.f32 %v2676, %v2715
    %2717 = vrot.lane.b32.xlu0 %v1983, 64
    %v2718 = vpop.permute.xlu0 %2717
    %v2721 = vsel %vm170, %v2702, 0
    %2723 = vmatprep.subr.mxu0 0.0
    %2724 = vmatpush1.msra.mxu0 0.0
    %2725 = vmatprep.subr.mxu0 0.0
    %2726 = vmatpush1.msra.mxu0 0.0
    %2727 = vmatprep.subr.mxu0 0.0
    %2728 = vmatpush1.msra.mxu0 0.0
    %2729 = vmatprep.subr.mxu0 0.0
    %2730 = vmatpush1.msra.mxu0 0.0
    %2731 = vmatprep.subr.mxu0 0.0
    %2732 = vmatpush1.msra.mxu0 0.0
    %2733 = vmatprep.subr.mxu0 0.0
    %2734 = vmatpush1.msra.mxu0 0.0
    %2735 = vmatprep.subr.mxu0 0.0
    %2736 = vmatpush1.msra.mxu0 0.0
    %2737 = vmatprep.subr.mxu0 0.0
    %2738 = vmatpush1.msra.mxu0 0.0
    %2739 = vmatprep.subr.mxu0 0.0
    %2740 = vmatpush1.msra.mxu0 0.0
    %2741 = vmatprep.subr.mxu0 0.0
    %2742 = vmatpush1.msra.mxu0 0.0
    %2743 = vmatprep.subr.mxu0 0.0
    %2744 = vmatpush1.msra.mxu0 0.0
    %2745 = vmatprep.subr.mxu0 0.0
    %2746 = vmatpush1.msra.mxu0 0.0
    %2747 = vmatprep.subr.mxu0 0.0
    %2748 = vmatpush1.msra.mxu0 0.0
    %2749 = vmatprep.subr.mxu0 0.0
    %2750 = vmatpush1.msra.mxu0 0.0
    %2751 = vmatprep.subr.mxu0 0.0
    %2752 = vmatpush1.msra.mxu0 0.0
    %2753 = vmatprep.subr.mxu0 0.0
    %2754 = vmatpush1.msra.mxu0 %v2718
    %2755 = vmatprep.subr.mxu0 0.0
    %2756 = vmatpush2.msra.mxu0 0.0
    %2757 = vmatprep.subr.mxu0 0.0
    %2758 = vmatpush2.msra.mxu0 0.0
    %2759 = vmatprep.subr.mxu0 0.0
    %2760 = vmatpush2.msra.mxu0 0.0
    %2761 = vmatprep.subr.mxu0 0.0
    %2762 = vmatpush2.msra.mxu0 0.0
    %2763 = vmatprep.subr.mxu0 0.0
    %2764 = vmatpush2.msra.mxu0 0.0
    %2765 = vmatprep.subr.mxu0 0.0
    %2766 = vmatpush2.msra.mxu0 0.0
    %2767 = vmatprep.subr.mxu0 0.0
    %2768 = vmatpush2.msra.mxu0 0.0
    %2769 = vmatprep.subr.mxu0 0.0
    %2770 = vmatpush2.msra.mxu0 0.0
    %2771 = vmatprep.subr.mxu0 0.0
    %2772 = vmatpush2.msra.mxu0 0.0
    %2773 = vmatprep.subr.mxu0 0.0
    %2774 = vmatpush2.msra.mxu0 0.0
    %2775 = vmatprep.subr.mxu0 0.0
    %2776 = vmatpush2.msra.mxu0 0.0
    %2777 = vmatprep.subr.mxu0 0.0
    %2778 = vmatpush2.msra.mxu0 0.0
    %2779 = vmatprep.subr.mxu0 0.0
    %2780 = vmatpush2.msra.mxu0 0.0
    %2781 = vmatprep.subr.mxu0 0.0
    %2782 = vmatpush2.msra.mxu0 0.0
    %2783 = vmatprep.subr.mxu0 0.0
    %2784 = vmatpush2.msra.mxu0 0.0
    %2785 = vmatprep.subr.mxu0 0.0
    %2786 = vmatpush2.msra.mxu0 0.0
    %2787 = vmatprep.mubr.f32.mxu0 0.0
    %2788 = vmatmul.mubr.f32.gmra.mxu0 %v2721
    %v2789 = vpop.f32.mrf.mxu0
    %v2790 = vadd.f32 0.0, %v2789
    %v2791 = vpop.f32.mrf.mxu0
    %2792 = vdwg.mxu0
    %2793 = vrot.lane.b32.xlu0 %v1993, 64
    %v2794 = vpop.permute.xlu0 %2793
    %v2797 = vsel %vm170, %v2704, 0
    %2799 = vmatprep.subr.mxu0 0.0
    %2800 = vmatpush1.msra.mxu0 0.0
    %2801 = vmatprep.subr.mxu0 0.0
    %2802 = vmatpush1.msra.mxu0 0.0
    %2803 = vmatprep.subr.mxu0 0.0
    %2804 = vmatpush1.msra.mxu0 0.0
    %2805 = vmatprep.subr.mxu0 0.0
    %2806 = vmatpush1.msra.mxu0 0.0
    %2807 = vmatprep.subr.mxu0 0.0
    %2808 = vmatpush1.msra.mxu0 0.0
    %2809 = vmatprep.subr.mxu0 0.0
    %2810 = vmatpush1.msra.mxu0 0.0
    %2811 = vmatprep.subr.mxu0 0.0
    %2812 = vmatpush1.msra.mxu0 0.0
    %2813 = vmatprep.subr.mxu0 0.0
    %2814 = vmatpush1.msra.mxu0 0.0
    %2815 = vmatprep.subr.mxu0 0.0
    %2816 = vmatpush1.msra.mxu0 0.0
    %2817 = vmatprep.subr.mxu0 0.0
    %2818 = vmatpush1.msra.mxu0 0.0
    %2819 = vmatprep.subr.mxu0 0.0
    %2820 = vmatpush1.msra.mxu0 0.0
    %2821 = vmatprep.subr.mxu0 0.0
    %2822 = vmatpush1.msra.mxu0 0.0
    %2823 = vmatprep.subr.mxu0 0.0
    %2824 = vmatpush1.msra.mxu0 0.0
    %2825 = vmatprep.subr.mxu0 0.0
    %2826 = vmatpush1.msra.mxu0 0.0
    %2827 = vmatprep.subr.mxu0 0.0
    %2828 = vmatpush1.msra.mxu0 0.0
    %2829 = vmatprep.subr.mxu0 0.0
    %2830 = vmatpush1.msra.mxu0 %v2794
    %2831 = vmatprep.subr.mxu0 0.0
    %2832 = vmatpush2.msra.mxu0 0.0
    %2833 = vmatprep.subr.mxu0 0.0
    %2834 = vmatpush2.msra.mxu0 0.0
    %2835 = vmatprep.subr.mxu0 0.0
    %2836 = vmatpush2.msra.mxu0 0.0
    %2837 = vmatprep.subr.mxu0 0.0
    %2838 = vmatpush2.msra.mxu0 0.0
    %2839 = vmatprep.subr.mxu0 0.0
    %2840 = vmatpush2.msra.mxu0 0.0
    %2841 = vmatprep.subr.mxu0 0.0
    %2842 = vmatpush2.msra.mxu0 0.0
    %2843 = vmatprep.subr.mxu0 0.0
    %2844 = vmatpush2.msra.mxu0 0.0
    %2845 = vmatprep.subr.mxu0 0.0
    %2846 = vmatpush2.msra.mxu0 0.0
    %2847 = vmatprep.subr.mxu0 0.0
    %2848 = vmatpush2.msra.mxu0 0.0
    %2849 = vmatprep.subr.mxu0 0.0
    %2850 = vmatpush2.msra.mxu0 0.0
    %2851 = vmatprep.subr.mxu0 0.0
    %2852 = vmatpush2.msra.mxu0 0.0
    %2853 = vmatprep.subr.mxu0 0.0
    %2854 = vmatpush2.msra.mxu0 0.0
    %2855 = vmatprep.subr.mxu0 0.0
    %2856 = vmatpush2.msra.mxu0 0.0
    %2857 = vmatprep.subr.mxu0 0.0
    %2858 = vmatpush2.msra.mxu0 0.0
    %2859 = vmatprep.subr.mxu0 0.0
    %2860 = vmatpush2.msra.mxu0 0.0
    %2861 = vmatprep.subr.mxu0 0.0
    %2862 = vmatpush2.msra.mxu0 0.0
    %2863 = vmatprep.mubr.f32.mxu0 0.0
    %2864 = vmatmul.mubr.f32.gmra.mxu0 %v2797
    %v2865 = vpop.f32.mrf.mxu0
    %v2866 = vadd.f32 0.0, %v2865
    %v2867 = vpop.f32.mrf.mxu0
    %2868 = vdwg.mxu0
    %2869 = vrot.lane.b32.xlu0 %v1995, 64
    %v2870 = vpop.permute.xlu0 %2869
    %v2873 = vsel %vm170, %v2706, 0
    %2875 = vmatprep.subr.mxu0 0.0
    %2876 = vmatpush1.msra.mxu0 0.0
    %2877 = vmatprep.subr.mxu0 0.0
    %2878 = vmatpush1.msra.mxu0 0.0
    %2879 = vmatprep.subr.mxu0 0.0
    %2880 = vmatpush1.msra.mxu0 0.0
    %2881 = vmatprep.subr.mxu0 0.0
    %2882 = vmatpush1.msra.mxu0 0.0
    %2883 = vmatprep.subr.mxu0 0.0
    %2884 = vmatpush1.msra.mxu0 0.0
    %2885 = vmatprep.subr.mxu0 0.0
    %2886 = vmatpush1.msra.mxu0 0.0
    %2887 = vmatprep.subr.mxu0 0.0
    %2888 = vmatpush1.msra.mxu0 0.0
    %2889 = vmatprep.subr.mxu0 0.0
    %2890 = vmatpush1.msra.mxu0 0.0
    %2891 = vmatprep.subr.mxu0 0.0
    %2892 = vmatpush1.msra.mxu0 0.0
    %2893 = vmatprep.subr.mxu0 0.0
    %2894 = vmatpush1.msra.mxu0 0.0
    %2895 = vmatprep.subr.mxu0 0.0
    %2896 = vmatpush1.msra.mxu0 0.0
    %2897 = vmatprep.subr.mxu0 0.0
    %2898 = vmatpush1.msra.mxu0 0.0
    %2899 = vmatprep.subr.mxu0 0.0
    %2900 = vmatpush1.msra.mxu0 0.0
    %2901 = vmatprep.subr.mxu0 0.0
    %2902 = vmatpush1.msra.mxu0 0.0
    %2903 = vmatprep.subr.mxu0 0.0
    %2904 = vmatpush1.msra.mxu0 0.0
    %2905 = vmatprep.subr.mxu0 0.0
    %2906 = vmatpush1.msra.mxu0 %v2870
    %2907 = vmatprep.subr.mxu0 0.0
    %2908 = vmatpush2.msra.mxu0 0.0
    %2909 = vmatprep.subr.mxu0 0.0
    %2910 = vmatpush2.msra.mxu0 0.0
    %2911 = vmatprep.subr.mxu0 0.0
    %2912 = vmatpush2.msra.mxu0 0.0
    %2913 = vmatprep.subr.mxu0 0.0
    %2914 = vmatpush2.msra.mxu0 0.0
    %2915 = vmatprep.subr.mxu0 0.0
    %2916 = vmatpush2.msra.mxu0 0.0
    %2917 = vmatprep.subr.mxu0 0.0
    %2918 = vmatpush2.msra.mxu0 0.0
    %2919 = vmatprep.subr.mxu0 0.0
    %2920 = vmatpush2.msra.mxu0 0.0
    %2921 = vmatprep.subr.mxu0 0.0
    %2922 = vmatpush2.msra.mxu0 0.0
    %2923 = vmatprep.subr.mxu0 0.0
    %2924 = vmatpush2.msra.mxu0 0.0
    %2925 = vmatprep.subr.mxu0 0.0
    %2926 = vmatpush2.msra.mxu0 0.0
    %2927 = vmatprep.subr.mxu0 0.0
    %2928 = vmatpush2.msra.mxu0 0.0
    %2929 = vmatprep.subr.mxu0 0.0
    %2930 = vmatpush2.msra.mxu0 0.0
    %2931 = vmatprep.subr.mxu0 0.0
    %2932 = vmatpush2.msra.mxu0 0.0
    %2933 = vmatprep.subr.mxu0 0.0
    %2934 = vmatpush2.msra.mxu0 0.0
    %2935 = vmatprep.subr.mxu0 0.0
    %2936 = vmatpush2.msra.mxu0 0.0
    %2937 = vmatprep.subr.mxu0 0.0
    %2938 = vmatpush2.msra.mxu0 0.0
    %2939 = vmatprep.mubr.f32.mxu0 0.0
    %2940 = vmatmul.mubr.f32.gmra.mxu0 %v2873
    %v2941 = vpop.f32.mrf.mxu0
    %v2942 = vadd.f32 0.0, %v2941
    %v2943 = vpop.f32.mrf.mxu0
    %2944 = vdwg.mxu0
    %2945 = vrot.lane.b32.xlu0 %v1997, 64
    %v2946 = vpop.permute.xlu0 %2945
    %v2949 = vsel %vm170, %v2708, 0
    %2951 = vmatprep.subr.mxu0 0.0
    %2952 = vmatpush1.msra.mxu0 0.0
    %2953 = vmatprep.subr.mxu0 0.0
    %2954 = vmatpush1.msra.mxu0 0.0
    %2955 = vmatprep.subr.mxu0 0.0
    %2956 = vmatpush1.msra.mxu0 0.0
    %2957 = vmatprep.subr.mxu0 0.0
    %2958 = vmatpush1.msra.mxu0 0.0
    %2959 = vmatprep.subr.mxu0 0.0
    %2960 = vmatpush1.msra.mxu0 0.0
    %2961 = vmatprep.subr.mxu0 0.0
    %2962 = vmatpush1.msra.mxu0 0.0
    %2963 = vmatprep.subr.mxu0 0.0
    %2964 = vmatpush1.msra.mxu0 0.0
    %2965 = vmatprep.subr.mxu0 0.0
    %2966 = vmatpush1.msra.mxu0 0.0
    %2967 = vmatprep.subr.mxu0 0.0
    %2968 = vmatpush1.msra.mxu0 0.0
    %2969 = vmatprep.subr.mxu0 0.0
    %2970 = vmatpush1.msra.mxu0 0.0
    %2971 = vmatprep.subr.mxu0 0.0
    %2972 = vmatpush1.msra.mxu0 0.0
    %2973 = vmatprep.subr.mxu0 0.0
    %2974 = vmatpush1.msra.mxu0 0.0
    %2975 = vmatprep.subr.mxu0 0.0
    %2976 = vmatpush1.msra.mxu0 0.0
    %2977 = vmatprep.subr.mxu0 0.0
    %2978 = vmatpush1.msra.mxu0 0.0
    %2979 = vmatprep.subr.mxu0 0.0
    %2980 = vmatpush1.msra.mxu0 0.0
    %2981 = vmatprep.subr.mxu0 0.0
    %2982 = vmatpush1.msra.mxu0 %v2946
    %2983 = vmatprep.subr.mxu0 0.0
    %2984 = vmatpush2.msra.mxu0 0.0
    %2985 = vmatprep.subr.mxu0 0.0
    %2986 = vmatpush2.msra.mxu0 0.0
    %2987 = vmatprep.subr.mxu0 0.0
    %2988 = vmatpush2.msra.mxu0 0.0
    %2989 = vmatprep.subr.mxu0 0.0
    %2990 = vmatpush2.msra.mxu0 0.0
    %2991 = vmatprep.subr.mxu0 0.0
    %2992 = vmatpush2.msra.mxu0 0.0
    %2993 = vmatprep.subr.mxu0 0.0
    %2994 = vmatpush2.msra.mxu0 0.0
    %2995 = vmatprep.subr.mxu0 0.0
    %2996 = vmatpush2.msra.mxu0 0.0
    %2997 = vmatprep.subr.mxu0 0.0
    %2998 = vmatpush2.msra.mxu0 0.0
    %2999 = vmatprep.subr.mxu0 0.0
    %3000 = vmatpush2.msra.mxu0 0.0
    %3001 = vmatprep.subr.mxu0 0.0
    %3002 = vmatpush2.msra.mxu0 0.0
    %3003 = vmatprep.subr.mxu0 0.0
    %3004 = vmatpush2.msra.mxu0 0.0
    %3005 = vmatprep.subr.mxu0 0.0
    %3006 = vmatpush2.msra.mxu0 0.0
    %3007 = vmatprep.subr.mxu0 0.0
    %3008 = vmatpush2.msra.mxu0 0.0
    %3009 = vmatprep.subr.mxu0 0.0
    %3010 = vmatpush2.msra.mxu0 0.0
    %3011 = vmatprep.subr.mxu0 0.0
    %3012 = vmatpush2.msra.mxu0 0.0
    %3013 = vmatprep.subr.mxu0 0.0
    %3014 = vmatpush2.msra.mxu0 0.0
    %3015 = vmatprep.mubr.f32.mxu0 0.0
    %3016 = vmatmul.mubr.f32.gmra.mxu0 %v2949
    %v3017 = vpop.f32.mrf.mxu0
    %v3018 = vadd.f32 0.0, %v3017
    %v3019 = vpop.f32.mrf.mxu0
    %3020 = vdwg.mxu0
    %3021 = vrot.lane.b32.xlu0 %v1988, 64
    %v3022 = vpop.permute.xlu0 %3021
    %v3025 = vsel %vm170, %v2710, 0
    %3027 = vmatprep.subr.mxu0 0.0
    %3028 = vmatpush1.msra.mxu0 0.0
    %3029 = vmatprep.subr.mxu0 0.0
    %3030 = vmatpush1.msra.mxu0 0.0
    %3031 = vmatprep.subr.mxu0 0.0
    %3032 = vmatpush1.msra.mxu0 0.0
    %3033 = vmatprep.subr.mxu0 0.0
    %3034 = vmatpush1.msra.mxu0 0.0
    %3035 = vmatprep.subr.mxu0 0.0
    %3036 = vmatpush1.msra.mxu0 0.0
    %3037 = vmatprep.subr.mxu0 0.0
    %3038 = vmatpush1.msra.mxu0 0.0
    %3039 = vmatprep.subr.mxu0 0.0
    %3040 = vmatpush1.msra.mxu0 0.0
    %3041 = vmatprep.subr.mxu0 0.0
    %3042 = vmatpush1.msra.mxu0 0.0
    %3043 = vmatprep.subr.mxu0 0.0
    %3044 = vmatpush1.msra.mxu0 0.0
    %3045 = vmatprep.subr.mxu0 0.0
    %3046 = vmatpush1.msra.mxu0 0.0
    %3047 = vmatprep.subr.mxu0 0.0
    %3048 = vmatpush1.msra.mxu0 0.0
    %3049 = vmatprep.subr.mxu0 0.0
    %3050 = vmatpush1.msra.mxu0 0.0
    %3051 = vmatprep.subr.mxu0 0.0
    %3052 = vmatpush1.msra.mxu0 0.0
    %3053 = vmatprep.subr.mxu0 0.0
    %3054 = vmatpush1.msra.mxu0 0.0
    %3055 = vmatprep.subr.mxu0 0.0
    %3056 = vmatpush1.msra.mxu0 0.0
    %3057 = vmatprep.subr.mxu0 0.0
    %3058 = vmatpush1.msra.mxu0 %v3022
    %3059 = vmatprep.subr.mxu0 0.0
    %3060 = vmatpush2.msra.mxu0 0.0
    %3061 = vmatprep.subr.mxu0 0.0
    %3062 = vmatpush2.msra.mxu0 0.0
    %3063 = vmatprep.subr.mxu0 0.0
    %3064 = vmatpush2.msra.mxu0 0.0
    %3065 = vmatprep.subr.mxu0 0.0
    %3066 = vmatpush2.msra.mxu0 0.0
    %3067 = vmatprep.subr.mxu0 0.0
    %3068 = vmatpush2.msra.mxu0 0.0
    %3069 = vmatprep.subr.mxu0 0.0
    %3070 = vmatpush2.msra.mxu0 0.0
    %3071 = vmatprep.subr.mxu0 0.0
    %3072 = vmatpush2.msra.mxu0 0.0
    %3073 = vmatprep.subr.mxu0 0.0
    %3074 = vmatpush2.msra.mxu0 0.0
    %3075 = vmatprep.subr.mxu0 0.0
    %3076 = vmatpush2.msra.mxu0 0.0
    %3077 = vmatprep.subr.mxu0 0.0
    %3078 = vmatpush2.msra.mxu0 0.0
    %3079 = vmatprep.subr.mxu0 0.0
    %3080 = vmatpush2.msra.mxu0 0.0
    %3081 = vmatprep.subr.mxu0 0.0
    %3082 = vmatpush2.msra.mxu0 0.0
    %3083 = vmatprep.subr.mxu0 0.0
    %3084 = vmatpush2.msra.mxu0 0.0
    %3085 = vmatprep.subr.mxu0 0.0
    %3086 = vmatpush2.msra.mxu0 0.0
    %3087 = vmatprep.subr.mxu0 0.0
    %3088 = vmatpush2.msra.mxu0 0.0
    %3089 = vmatprep.subr.mxu0 0.0
    %3090 = vmatpush2.msra.mxu0 0.0
    %3091 = vmatprep.mubr.f32.mxu0 0.0
    %3092 = vmatmul.mubr.f32.gmra.mxu0 %v3025
    %v3093 = vpop.f32.mrf.mxu0
    %v3094 = vadd.f32 0.0, %v3093
    %v3095 = vpop.f32.mrf.mxu0
    %3096 = vdwg.mxu0
    %3097 = vrot.lane.b32.xlu0 %v2000, 64
    %v3098 = vpop.permute.xlu0 %3097
    %v3101 = vsel %vm170, %v2712, 0
    %3103 = vmatprep.subr.mxu0 0.0
    %3104 = vmatpush1.msra.mxu0 0.0
    %3105 = vmatprep.subr.mxu0 0.0
    %3106 = vmatpush1.msra.mxu0 0.0
    %3107 = vmatprep.subr.mxu0 0.0
    %3108 = vmatpush1.msra.mxu0 0.0
    %3109 = vmatprep.subr.mxu0 0.0
    %3110 = vmatpush1.msra.mxu0 0.0
    %3111 = vmatprep.subr.mxu0 0.0
    %3112 = vmatpush1.msra.mxu0 0.0
    %3113 = vmatprep.subr.mxu0 0.0
    %3114 = vmatpush1.msra.mxu0 0.0
    %3115 = vmatprep.subr.mxu0 0.0
    %3116 = vmatpush1.msra.mxu0 0.0
    %3117 = vmatprep.subr.mxu0 0.0
    %3118 = vmatpush1.msra.mxu0 0.0
    %3119 = vmatprep.subr.mxu0 0.0
    %3120 = vmatpush1.msra.mxu0 0.0
    %3121 = vmatprep.subr.mxu0 0.0
    %3122 = vmatpush1.msra.mxu0 0.0
    %3123 = vmatprep.subr.mxu0 0.0
    %3124 = vmatpush1.msra.mxu0 0.0
    %3125 = vmatprep.subr.mxu0 0.0
    %3126 = vmatpush1.msra.mxu0 0.0
    %3127 = vmatprep.subr.mxu0 0.0
    %3128 = vmatpush1.msra.mxu0 0.0
    %3129 = vmatprep.subr.mxu0 0.0
    %3130 = vmatpush1.msra.mxu0 0.0
    %3131 = vmatprep.subr.mxu0 0.0
    %3132 = vmatpush1.msra.mxu0 0.0
    %3133 = vmatprep.subr.mxu0 0.0
    %3134 = vmatpush1.msra.mxu0 %v3098
    %3135 = vmatprep.subr.mxu0 0.0
    %3136 = vmatpush2.msra.mxu0 0.0
    %3137 = vmatprep.subr.mxu0 0.0
    %3138 = vmatpush2.msra.mxu0 0.0
    %3139 = vmatprep.subr.mxu0 0.0
    %3140 = vmatpush2.msra.mxu0 0.0
    %3141 = vmatprep.subr.mxu0 0.0
    %3142 = vmatpush2.msra.mxu0 0.0
    %3143 = vmatprep.subr.mxu0 0.0
    %3144 = vmatpush2.msra.mxu0 0.0
    %3145 = vmatprep.subr.mxu0 0.0
    %3146 = vmatpush2.msra.mxu0 0.0
    %3147 = vmatprep.subr.mxu0 0.0
    %3148 = vmatpush2.msra.mxu0 0.0
    %3149 = vmatprep.subr.mxu0 0.0
    %3150 = vmatpush2.msra.mxu0 0.0
    %3151 = vmatprep.subr.mxu0 0.0
    %3152 = vmatpush2.msra.mxu0 0.0
    %3153 = vmatprep.subr.mxu0 0.0
    %3154 = vmatpush2.msra.mxu0 0.0
    %3155 = vmatprep.subr.mxu0 0.0
    %3156 = vmatpush2.msra.mxu0 0.0
    %3157 = vmatprep.subr.mxu0 0.0
    %3158 = vmatpush2.msra.mxu0 0.0
    %3159 = vmatprep.subr.mxu0 0.0
    %3160 = vmatpush2.msra.mxu0 0.0
    %3161 = vmatprep.subr.mxu0 0.0
    %3162 = vmatpush2.msra.mxu0 0.0
    %3163 = vmatprep.subr.mxu0 0.0
    %3164 = vmatpush2.msra.mxu0 0.0
    %3165 = vmatprep.subr.mxu0 0.0
    %3166 = vmatpush2.msra.mxu0 0.0
    %3167 = vmatprep.mubr.f32.mxu0 0.0
    %3168 = vmatmul.mubr.f32.gmra.mxu0 %v3101
    %v3169 = vpop.f32.mrf.mxu0
    %v3170 = vadd.f32 0.0, %v3169
    %v3171 = vpop.f32.mrf.mxu0
    %3172 = vdwg.mxu0
    %3173 = vrot.lane.b32.xlu0 %v2002, 64
    %v3174 = vpop.permute.xlu0 %3173
    %v3177 = vsel %vm170, %v2714, 0
    %3179 = vmatprep.subr.mxu0 0.0
    %3180 = vmatpush1.msra.mxu0 0.0
    %3181 = vmatprep.subr.mxu0 0.0
    %3182 = vmatpush1.msra.mxu0 0.0
    %3183 = vmatprep.subr.mxu0 0.0
    %3184 = vmatpush1.msra.mxu0 0.0
    %3185 = vmatprep.subr.mxu0 0.0
    %3186 = vmatpush1.msra.mxu0 0.0
    %3187 = vmatprep.subr.mxu0 0.0
    %3188 = vmatpush1.msra.mxu0 0.0
    %3189 = vmatprep.subr.mxu0 0.0
    %3190 = vmatpush1.msra.mxu0 0.0
    %3191 = vmatprep.subr.mxu0 0.0
    %3192 = vmatpush1.msra.mxu0 0.0
    %3193 = vmatprep.subr.mxu0 0.0
    %3194 = vmatpush1.msra.mxu0 0.0
    %3195 = vmatprep.subr.mxu0 0.0
    %3196 = vmatpush1.msra.mxu0 0.0
    %3197 = vmatprep.subr.mxu0 0.0
    %3198 = vmatpush1.msra.mxu0 0.0
    %3199 = vmatprep.subr.mxu0 0.0
    %3200 = vmatpush1.msra.mxu0 0.0
    %3201 = vmatprep.subr.mxu0 0.0
    %3202 = vmatpush1.msra.mxu0 0.0
    %3203 = vmatprep.subr.mxu0 0.0
    %3204 = vmatpush1.msra.mxu0 0.0
    %3205 = vmatprep.subr.mxu0 0.0
    %3206 = vmatpush1.msra.mxu0 0.0
    %3207 = vmatprep.subr.mxu0 0.0
    %3208 = vmatpush1.msra.mxu0 0.0
    %3209 = vmatprep.subr.mxu0 0.0
    %3210 = vmatpush1.msra.mxu0 %v3174
    %3211 = vmatprep.subr.mxu0 0.0
    %3212 = vmatpush2.msra.mxu0 0.0
    %3213 = vmatprep.subr.mxu0 0.0
    %3214 = vmatpush2.msra.mxu0 0.0
    %3215 = vmatprep.subr.mxu0 0.0
    %3216 = vmatpush2.msra.mxu0 0.0
    %3217 = vmatprep.subr.mxu0 0.0
    %3218 = vmatpush2.msra.mxu0 0.0
    %3219 = vmatprep.subr.mxu0 0.0
    %3220 = vmatpush2.msra.mxu0 0.0
    %3221 = vmatprep.subr.mxu0 0.0
    %3222 = vmatpush2.msra.mxu0 0.0
    %3223 = vmatprep.subr.mxu0 0.0
    %3224 = vmatpush2.msra.mxu0 0.0
    %3225 = vmatprep.subr.mxu0 0.0
    %3226 = vmatpush2.msra.mxu0 0.0
    %3227 = vmatprep.subr.mxu0 0.0
    %3228 = vmatpush2.msra.mxu0 0.0
    %3229 = vmatprep.subr.mxu0 0.0
    %3230 = vmatpush2.msra.mxu0 0.0
    %3231 = vmatprep.subr.mxu0 0.0
    %3232 = vmatpush2.msra.mxu0 0.0
    %3233 = vmatprep.subr.mxu0 0.0
    %3234 = vmatpush2.msra.mxu0 0.0
    %3235 = vmatprep.subr.mxu0 0.0
    %3236 = vmatpush2.msra.mxu0 0.0
    %3237 = vmatprep.subr.mxu0 0.0
    %3238 = vmatpush2.msra.mxu0 0.0
    %3239 = vmatprep.subr.mxu0 0.0
    %3240 = vmatpush2.msra.mxu0 0.0
    %3241 = vmatprep.subr.mxu0 0.0
    %3242 = vmatpush2.msra.mxu0 0.0
    %3243 = vmatprep.mubr.f32.mxu0 0.0
    %3244 = vmatmul.mubr.f32.gmra.mxu0 %v3177
    %v3245 = vpop.f32.mrf.mxu0
    %v3246 = vadd.f32 0.0, %v3245
    %v3247 = vpop.f32.mrf.mxu0
    %3248 = vdwg.mxu0
    %3249 = vrot.lane.b32.xlu0 %v2004, 64
    %v3250 = vpop.permute.xlu0 %3249
    %v3253 = vsel %vm170, %v2716, 0
    %3255 = vmatprep.subr.mxu0 0.0
    %3256 = vmatpush1.msra.mxu0 0.0
    %3257 = vmatprep.subr.mxu0 0.0
    %3258 = vmatpush1.msra.mxu0 0.0
    %3259 = vmatprep.subr.mxu0 0.0
    %3260 = vmatpush1.msra.mxu0 0.0
    %3261 = vmatprep.subr.mxu0 0.0
    %3262 = vmatpush1.msra.mxu0 0.0
    %3263 = vmatprep.subr.mxu0 0.0
    %3264 = vmatpush1.msra.mxu0 0.0
    %3265 = vmatprep.subr.mxu0 0.0
    %3266 = vmatpush1.msra.mxu0 0.0
    %3267 = vmatprep.subr.mxu0 0.0
    %3268 = vmatpush1.msra.mxu0 0.0
    %3269 = vmatprep.subr.mxu0 0.0
    %3270 = vmatpush1.msra.mxu0 0.0
    %3271 = vmatprep.subr.mxu0 0.0
    %3272 = vmatpush1.msra.mxu0 0.0
    %3273 = vmatprep.subr.mxu0 0.0
    %3274 = vmatpush1.msra.mxu0 0.0
    %3275 = vmatprep.subr.mxu0 0.0
    %3276 = vmatpush1.msra.mxu0 0.0
    %3277 = vmatprep.subr.mxu0 0.0
    %3278 = vmatpush1.msra.mxu0 0.0
    %3279 = vmatprep.subr.mxu0 0.0
    %3280 = vmatpush1.msra.mxu0 0.0
    %3281 = vmatprep.subr.mxu0 0.0
    %3282 = vmatpush1.msra.mxu0 0.0
    %3283 = vmatprep.subr.mxu0 0.0
    %3284 = vmatpush1.msra.mxu0 0.0
    %3285 = vmatprep.subr.mxu0 0.0
    %3286 = vmatpush1.msra.mxu0 %v3250
    %3287 = vmatprep.subr.mxu0 0.0
    %3288 = vmatpush2.msra.mxu0 0.0
    %3289 = vmatprep.subr.mxu0 0.0
    %3290 = vmatpush2.msra.mxu0 0.0
    %3291 = vmatprep.subr.mxu0 0.0
    %3292 = vmatpush2.msra.mxu0 0.0
    %3293 = vmatprep.subr.mxu0 0.0
    %3294 = vmatpush2.msra.mxu0 0.0
    %3295 = vmatprep.subr.mxu0 0.0
    %3296 = vmatpush2.msra.mxu0 0.0
    %3297 = vmatprep.subr.mxu0 0.0
    %3298 = vmatpush2.msra.mxu0 0.0
    %3299 = vmatprep.subr.mxu0 0.0
    %3300 = vmatpush2.msra.mxu0 0.0
    %3301 = vmatprep.subr.mxu0 0.0
    %3302 = vmatpush2.msra.mxu0 0.0
    %3303 = vmatprep.subr.mxu0 0.0
    %3304 = vmatpush2.msra.mxu0 0.0
    %3305 = vmatprep.subr.mxu0 0.0
    %3306 = vmatpush2.msra.mxu0 0.0
    %3307 = vmatprep.subr.mxu0 0.0
    %3308 = vmatpush2.msra.mxu0 0.0
    %3309 = vmatprep.subr.mxu0 0.0
    %3310 = vmatpush2.msra.mxu0 0.0
    %3311 = vmatprep.subr.mxu0 0.0
    %3312 = vmatpush2.msra.mxu0 0.0
    %3313 = vmatprep.subr.mxu0 0.0
    %3314 = vmatpush2.msra.mxu0 0.0
    %3315 = vmatprep.subr.mxu0 0.0
    %3316 = vmatpush2.msra.mxu0 0.0
    %3317 = vmatprep.subr.mxu0 0.0
    %3318 = vmatpush2.msra.mxu0 0.0
    %3319 = vmatprep.mubr.f32.mxu0 0.0
    %3320 = vmatmul.mubr.f32.gmra.mxu0 %v3253
    %v3321 = vpop.f32.mrf.mxu0
    %v3322 = vadd.f32 0.0, %v3321
    %v3323 = vpop.f32.mrf.mxu0
    %3324 = vdwg.mxu0
    %3326 = vrot.lane.b32.xlu0 %v2866, 8
    %v3327 = vpop.permute.xlu0 %3326
    %3330 = vrot.lane.b32.xlu0 %v2942, 16
    %v3331 = vpop.permute.xlu0 %3330
    %3334 = vrot.lane.b32.xlu0 %v3018, 24
    %v3335 = vpop.permute.xlu0 %3334
    %v3337 = vsel %vm170, %v2790, %v3327
    %v3338 = vsel %vm1514, %v3337, %v3331
    %v3339 = vsel %vm1516, %v3338, %v3335
    %3341 = vrot.lane.b32.xlu0 %v3170, 8
    %v3342 = vpop.permute.xlu0 %3341
    %3345 = vrot.lane.b32.xlu0 %v3246, 16
    %v3346 = vpop.permute.xlu0 %3345
    %3349 = vrot.lane.b32.xlu0 %v3322, 24
    %v3350 = vpop.permute.xlu0 %3349
    %v3352 = vsel %vm170, %v3094, %v3342
    %v3353 = vsel %vm1514, %v3352, %v3346
    %v3354 = vsel %vm1516, %v3353, %v3350
    %v3355 = vlaneseq
    %v3356 = vshrl.u32 %v3355, 7
    %v3357 = vsub.s32 0, %v3356
    %v3358 = vrot.slane %v1903, %v3357
    %v3360 = vsel %vm72, %v3339, 0
    %v3363 = vsel %vm72, %v3354, 0
    %3365 = vmatprep.subr.mxu0 0.0
    %3366 = vmatpush1.msra.mxu0 0.0
    %3367 = vmatprep.subr.mxu0 0.0
    %3368 = vmatpush1.msra.mxu0 0.0
    %3369 = vmatprep.subr.mxu0 0.0
    %3370 = vmatpush1.msra.mxu0 0.0
    %3371 = vmatprep.subr.mxu0 0.0
    %3372 = vmatpush1.msra.mxu0 0.0
    %3373 = vmatprep.subr.mxu0 0.0
    %3374 = vmatpush1.msra.mxu0 0.0
    %3375 = vmatprep.subr.mxu0 0.0
    %3376 = vmatpush1.msra.mxu0 0.0
    %3377 = vmatprep.subr.mxu0 0.0
    %3378 = vmatpush1.msra.mxu0 0.0
    %3379 = vmatprep.subr.mxu0 0.0
    %3380 = vmatpush1.msra.mxu0 0.0
    %3381 = vmatprep.subr.mxu0 0.0
    %3382 = vmatpush1.msra.mxu0 0.0
    %3383 = vmatprep.subr.mxu0 0.0
    %3384 = vmatpush1.msra.mxu0 0.0
    %3385 = vmatprep.subr.mxu0 0.0
    %3386 = vmatpush1.msra.mxu0 0.0
    %3387 = vmatprep.subr.mxu0 0.0
    %3388 = vmatpush1.msra.mxu0 0.0
    %3389 = vmatprep.subr.mxu0 0.0
    %3390 = vmatpush1.msra.mxu0 %v1885
    %3391 = vmatprep.subr.mxu0 0.0
    %3392 = vmatpush1.msra.mxu0 %v1884
    %3393 = vmatprep.subr.mxu0 0.0
    %3394 = vmatpush1.msra.mxu0 %v1883
    %3395 = vmatprep.subr.mxu0 0.0
    %3396 = vmatpush1.msra.mxu0 %v1882
    %3397 = vmatprep.subr.mxu0 0.0
    %3398 = vmatpush2.msra.mxu0 0.0
    %3399 = vmatprep.subr.mxu0 0.0
    %3400 = vmatpush2.msra.mxu0 0.0
    %3401 = vmatprep.subr.mxu0 0.0
    %3402 = vmatpush2.msra.mxu0 0.0
    %3403 = vmatprep.subr.mxu0 0.0
    %3404 = vmatpush2.msra.mxu0 0.0
    %3405 = vmatprep.subr.mxu0 0.0
    %3406 = vmatpush2.msra.mxu0 0.0
    %3407 = vmatprep.subr.mxu0 0.0
    %3408 = vmatpush2.msra.mxu0 0.0
    %3409 = vmatprep.subr.mxu0 0.0
    %3410 = vmatpush2.msra.mxu0 0.0
    %3411 = vmatprep.subr.mxu0 0.0
    %3412 = vmatpush2.msra.mxu0 0.0
    %3413 = vmatprep.subr.mxu0 0.0
    %3414 = vmatpush2.msra.mxu0 0.0
    %3415 = vmatprep.subr.mxu0 0.0
    %3416 = vmatpush2.msra.mxu0 0.0
    %3417 = vmatprep.subr.mxu0 0.0
    %3418 = vmatpush2.msra.mxu0 0.0
    %3419 = vmatprep.subr.mxu0 0.0
    %3420 = vmatpush2.msra.mxu0 0.0
    %3421 = vmatprep.subr.mxu0 0.0
    %3422 = vmatpush2.msra.mxu0 0.0
    %3423 = vmatprep.subr.mxu0 0.0
    %3424 = vmatpush2.msra.mxu0 0.0
    %3425 = vmatprep.subr.mxu0 0.0
    %3426 = vmatpush2.msra.mxu0 0.0
    %3427 = vmatprep.subr.mxu0 0.0
    %3428 = vmatpush2.msra.mxu0 0.0
    %3429 = vmatprep.mubr.f32.mxu0 0.0
    %3430 = vmatmul.mubr.f32.gmra.mxu0 %v3360
    %v3431 = vpop.f32.mrf.mxu0
    %v3432 = vadd.f32 %v3358, %v3431
    %v3433 = vpop.f32.mrf.mxu0
    %3434 = vmatprep.mubr.f32.mxu0 0.0
    %3435 = vmatmul.mubr.f32.gmra.mxu0 %v3363
    %v3436 = vpop.f32.mrf.mxu0
    %v3437 = vadd.f32 %v3358, %v3436
    %v3438 = vpop.f32.mrf.mxu0
    %3439 = vdwg.mxu0
    %v3440 = vadd.f32 %v3432, %v1872
    %v3441 = vadd.f32 %v3437, %v1873
    %v3442 = vsel %vm72, %v3440, 0.0
    %3443 = vadd.xlane.f32.xlu0 %v3442
    %v3444 = vpop.xlane.xlu0 %3443
    %v3445 = vsel %vm72, %v3441, 0.0
    %3446 = vadd.xlane.f32.xlu0 %v3445
    %v3447 = vpop.xlane.xlu0 %3446
    %v3448 = vmul.f32 %v3444, %v1626
    %v3449 = vmul.f32 %v3447, %v1626
    %v3450 = vsub.f32 %v3440, %v3448
    %v3451 = vsub.f32 %v3441, %v3449
    %v3452 = vmul.f32 %v3450, %v3450
    %v3453 = vmul.f32 %v3451, %v3451
    %v3454 = vsel %vm72, %v3452, 0.0
    %3455 = vadd.xlane.f32.xlu0 %v3454
    %v3456 = vpop.xlane.xlu0 %3455
    %v3457 = vsel %vm72, %v3453, 0.0
    %3458 = vadd.xlane.f32.xlu0 %v3457
    %v3459 = vpop.xlane.xlu0 %3458
    %v3460 = vmul.f32 %v3456, %v1626
    %v3461 = vmul.f32 %v3459, %v1626
    %v3462 = vlaneseq
    %v3463 = vshrl.u32 %v3462, 7
    %v3464 = vsub.s32 1, %v3463
    %v3465 = vrot.slane %v1903, %v3464
    %v3466 = vmul.f32 %v3465, %v3450
    %v3467 = vmul.f32 %v3465, %v3451
    %v3468 = vadd.f32 %v3460, 1e-12
    %v3469 = vadd.f32 %v3461, 1e-12
    %v3470 = vrsqrt.pop %v3468
    %v3471 = vrsqrt.pop %v3469
    %v3472 = vmul.f32 %v3466, %v3470
    %v3473 = vmul.f32 %v3467, %v3471
    %v3474 = vlaneseq
    %v3475 = vshrl.u32 %v3474, 7
    %v3476 = vsub.s32 2, %v3475
    %v3477 = vrot.slane %v1903, %v3476
    %v3478 = vadd.f32 %v3472, %v3477
    %v3479 = vadd.f32 %v3473, %v3477
    %v3481 = vlaneseq
    %v3482 = vshrl.u32 %v3481, 7
    %v3483 = vsub.s32 0, %v3482
    %v3484 = vrot.slane %v1892, %v3483
    %v3487 = vsel %vm72, %v3478, 0
    %v3490 = vsel %vm72, %v3479, 0
    %3492 = vmatprep.subr.mxu0 0.0
    %3493 = vmatpush1.msra.mxu0 0.0
    %3494 = vmatprep.subr.mxu0 0.0
    %3495 = vmatpush1.msra.mxu0 0.0
    %3496 = vmatprep.subr.mxu0 0.0
    %3497 = vmatpush1.msra.mxu0 0.0
    %3498 = vmatprep.subr.mxu0 0.0
    %3499 = vmatpush1.msra.mxu0 0.0
    %3500 = vmatprep.subr.mxu0 0.0
    %3501 = vmatpush1.msra.mxu0 0.0
    %3502 = vmatprep.subr.mxu0 0.0
    %3503 = vmatpush1.msra.mxu0 0.0
    %3504 = vmatprep.subr.mxu0 0.0
    %3505 = vmatpush1.msra.mxu0 0.0
    %3506 = vmatprep.subr.mxu0 0.0
    %3507 = vmatpush1.msra.mxu0 0.0
    %3508 = vmatprep.subr.mxu0 0.0
    %3509 = vmatpush1.msra.mxu0 0.0
    %3510 = vmatprep.subr.mxu0 0.0
    %3511 = vmatpush1.msra.mxu0 0.0
    %3512 = vmatprep.subr.mxu0 0.0
    %3513 = vmatpush1.msra.mxu0 0.0
    %3514 = vmatprep.subr.mxu0 0.0
    %3515 = vmatpush1.msra.mxu0 0.0
    %3516 = vmatprep.subr.mxu0 0.0
    %3517 = vmatpush1.msra.mxu0 %v1890
    %3518 = vmatprep.subr.mxu0 0.0
    %3519 = vmatpush1.msra.mxu0 %v1889
    %3520 = vmatprep.subr.mxu0 0.0
    %3521 = vmatpush1.msra.mxu0 %v1888
    %3522 = vmatprep.subr.mxu0 0.0
    %3523 = vmatpush1.msra.mxu0 %v1887
    %3524 = vmatprep.subr.mxu0 0.0
    %3525 = vmatpush2.msra.mxu0 0.0
    %3526 = vmatprep.subr.mxu0 0.0
    %3527 = vmatpush2.msra.mxu0 0.0
    %3528 = vmatprep.subr.mxu0 0.0
    %3529 = vmatpush2.msra.mxu0 0.0
    %3530 = vmatprep.subr.mxu0 0.0
    %3531 = vmatpush2.msra.mxu0 0.0
    %3532 = vmatprep.subr.mxu0 0.0
    %3533 = vmatpush2.msra.mxu0 0.0
    %3534 = vmatprep.subr.mxu0 0.0
    %3535 = vmatpush2.msra.mxu0 0.0
    %3536 = vmatprep.subr.mxu0 0.0
    %3537 = vmatpush2.msra.mxu0 0.0
    %3538 = vmatprep.subr.mxu0 0.0
    %3539 = vmatpush2.msra.mxu0 0.0
    %3540 = vmatprep.subr.mxu0 0.0
    %3541 = vmatpush2.msra.mxu0 0.0
    %3542 = vmatprep.subr.mxu0 0.0
    %3543 = vmatpush2.msra.mxu0 0.0
    %3544 = vmatprep.subr.mxu0 0.0
    %3545 = vmatpush2.msra.mxu0 0.0
    %3546 = vmatprep.subr.mxu0 0.0
    %3547 = vmatpush2.msra.mxu0 0.0
    %3548 = vmatprep.subr.mxu0 0.0
    %3549 = vmatpush2.msra.mxu0 0.0
    %3550 = vmatprep.subr.mxu0 0.0
    %3551 = vmatpush2.msra.mxu0 0.0
    %3552 = vmatprep.subr.mxu0 0.0
    %3553 = vmatpush2.msra.mxu0 0.0
    %3554 = vmatprep.subr.mxu0 0.0
    %3555 = vmatpush2.msra.mxu0 0.0
    %3556 = vmatprep.mubr.f32.mxu0 0.0
    %3557 = vmatmul.mubr.f32.gmra.mxu0 %v3487
    %v3558 = vpop.f32.mrf.mxu0
    %v3559 = vadd.f32 %v3484, %v3558
    %v3560 = vpop.f32.mrf.mxu0
    %3561 = vmatprep.mubr.f32.mxu0 0.0
    %3562 = vmatmul.mubr.f32.gmra.mxu0 %v3490
    %v3563 = vpop.f32.mrf.mxu0
    %v3564 = vadd.f32 %v3484, %v3563
    %v3565 = vpop.f32.mrf.mxu0
    %3566 = vdwg.mxu0
    %v3567 = vmax.f32 %v3559, 0.0
    %v3568 = vmax.f32 %v3564, 0.0
    %v3569 = vlaneseq
    %v3570 = vshrl.u32 %v3569, 7
    %v3571 = vsub.s32 3, %v3570
    %v3572 = vrot.slane %v1903, %v3571
    %v3574 = vsel %vm1752, %v3567, 0
    %v3577 = vsel %vm1752, %v3568, 0
    %3579 = vmatprep.subr.mxu0 0.0
    %3580 = vmatpush1.msra.mxu0 0.0
    %3581 = vmatprep.subr.mxu0 0.0
    %3582 = vmatpush1.msra.mxu0 0.0
    %3583 = vmatprep.subr.mxu0 0.0
    %3584 = vmatpush1.msra.mxu0 0.0
    %3585 = vmatprep.subr.mxu0 0.0
    %3586 = vmatpush1.msra.mxu0 0.0
    %3587 = vmatprep.subr.mxu0 0.0
    %3588 = vmatpush1.msra.mxu0 0.0
    %3589 = vmatprep.subr.mxu0 0.0
    %3590 = vmatpush1.msra.mxu0 0.0
    %3591 = vmatprep.subr.mxu0 0.0
    %3592 = vmatpush1.msra.mxu0 0.0
    %3593 = vmatprep.subr.mxu0 0.0
    %3594 = vmatpush1.msra.mxu0 0.0
    %3595 = vmatprep.subr.mxu0 0.0
    %3596 = vmatpush1.msra.mxu0 %v1901
    %3597 = vmatprep.subr.mxu0 0.0
    %3598 = vmatpush1.msra.mxu0 %v1900
    %3599 = vmatprep.subr.mxu0 0.0
    %3600 = vmatpush1.msra.mxu0 %v1899
    %3601 = vmatprep.subr.mxu0 0.0
    %3602 = vmatpush1.msra.mxu0 %v1898
    %3603 = vmatprep.subr.mxu0 0.0
    %3604 = vmatpush1.msra.mxu0 %v1897
    %3605 = vmatprep.subr.mxu0 0.0
    %3606 = vmatpush1.msra.mxu0 %v1896
    %3607 = vmatprep.subr.mxu0 0.0
    %3608 = vmatpush1.msra.mxu0 %v1895
    %3609 = vmatprep.subr.mxu0 0.0
    %3610 = vmatpush1.msra.mxu0 %v1894
    %3611 = vmatprep.subr.mxu0 0.0
    %3612 = vmatpush2.msra.mxu0 0.0
    %3613 = vmatprep.subr.mxu0 0.0
    %3614 = vmatpush2.msra.mxu0 0.0
    %3615 = vmatprep.subr.mxu0 0.0
    %3616 = vmatpush2.msra.mxu0 0.0
    %3617 = vmatprep.subr.mxu0 0.0
    %3618 = vmatpush2.msra.mxu0 0.0
    %3619 = vmatprep.subr.mxu0 0.0
    %3620 = vmatpush2.msra.mxu0 0.0
    %3621 = vmatprep.subr.mxu0 0.0
    %3622 = vmatpush2.msra.mxu0 0.0
    %3623 = vmatprep.subr.mxu0 0.0
    %3624 = vmatpush2.msra.mxu0 0.0
    %3625 = vmatprep.subr.mxu0 0.0
    %3626 = vmatpush2.msra.mxu0 0.0
    %3627 = vmatprep.subr.mxu0 0.0
    %3628 = vmatpush2.msra.mxu0 0.0
    %3629 = vmatprep.subr.mxu0 0.0
    %3630 = vmatpush2.msra.mxu0 0.0
    %3631 = vmatprep.subr.mxu0 0.0
    %3632 = vmatpush2.msra.mxu0 0.0
    %3633 = vmatprep.subr.mxu0 0.0
    %3634 = vmatpush2.msra.mxu0 0.0
    %3635 = vmatprep.subr.mxu0 0.0
    %3636 = vmatpush2.msra.mxu0 0.0
    %3637 = vmatprep.subr.mxu0 0.0
    %3638 = vmatpush2.msra.mxu0 0.0
    %3639 = vmatprep.subr.mxu0 0.0
    %3640 = vmatpush2.msra.mxu0 0.0
    %3641 = vmatprep.subr.mxu0 0.0
    %3642 = vmatpush2.msra.mxu0 0.0
    %3643 = vmatprep.mubr.f32.mxu0 0.0
    %3644 = vmatmul.mubr.f32.gmra.mxu0 %v3574
    %v3645 = vpop.f32.mrf.mxu0
    %v3646 = vadd.f32 %v3572, %v3645
    %v3647 = vpop.f32.mrf.mxu0
    %3648 = vmatprep.mubr.f32.mxu0 0.0
    %3649 = vmatmul.mubr.f32.gmra.mxu0 %v3577
    %v3650 = vpop.f32.mrf.mxu0
    %v3651 = vadd.f32 %v3572, %v3650
    %v3652 = vpop.f32.mrf.mxu0
    %3653 = vdwg.mxu0
    %v3654 = vadd.f32 %v3646, %v3478
    %v3655 = vadd.f32 %v3651, %v3479
    %v3656 = vsel %vm72, %v3654, 0.0
    %3657 = vadd.xlane.f32.xlu0 %v3656
    %v3658 = vpop.xlane.xlu0 %3657
    %v3659 = vsel %vm72, %v3655, 0.0
    %3660 = vadd.xlane.f32.xlu0 %v3659
    %v3661 = vpop.xlane.xlu0 %3660
    %v3662 = vmul.f32 %v3658, %v1626
    %v3663 = vmul.f32 %v3661, %v1626
    %v3664 = vsub.f32 %v3654, %v3662
    %v3665 = vsub.f32 %v3655, %v3663
    %v3666 = vmul.f32 %v3664, %v3664
    %v3667 = vmul.f32 %v3665, %v3665
    %v3668 = vsel %vm72, %v3666, 0.0
    %3669 = vadd.xlane.f32.xlu0 %v3668
    %v3670 = vpop.xlane.xlu0 %3669
    %v3671 = vsel %vm72, %v3667, 0.0
    %3672 = vadd.xlane.f32.xlu0 %v3671
    %v3673 = vpop.xlane.xlu0 %3672
    %v3674 = vmul.f32 %v3670, %v1626
    %v3675 = vmul.f32 %v3673, %v1626
    %v3676 = vlaneseq
    %v3677 = vshrl.u32 %v3676, 7
    %v3678 = vsub.s32 4, %v3677
    %v3679 = vrot.slane %v1903, %v3678
    %v3680 = vmul.f32 %v3679, %v3664
    %v3681 = vmul.f32 %v3679, %v3665
    %v3682 = vadd.f32 %v3674, 1e-12
    %v3683 = vadd.f32 %v3675, 1e-12
    %v3684 = vrsqrt.pop %v3682
    %v3685 = vrsqrt.pop %v3683
    %v3686 = vmul.f32 %v3680, %v3684
    %v3687 = vmul.f32 %v3681, %v3685
    %v3688 = vlaneseq
    %v3689 = vshrl.u32 %v3688, 7
    %v3690 = vsub.s32 5, %v3689
    %v3691 = vrot.slane %v1903, %v3690
    %v3692 = vadd.f32 %v3686, %v3691
    %v3693 = vadd.f32 %v3687, %v3691
    %3694 = vst.msk [vmem:[#allocation2] sm:$0xff] %vm72, %v3692
    %3695 = vst.msk [vmem:[#allocation2 + $0x8] sm:$0xff] %vm72, %v3693
    // Predicated region
    $region38: #{tpu_custom_call.1} parent=1 // pred_check
      _
    $region39: #{tpu_custom_call.1} parent=1 // pred_check_branch
      %3697 = sbr.rel (0) target = $region41
    $region40: #{tpu_custom_call.1} parent=1 // pred_region
      %s3699 = ssub.s32 256, 256
      %3700 = vsyncadd [#allocation3], %s3699
      %s3701 = sshll.u32 [#allocation2], 4
      %s3702 = int_to_ptr.vmem [resolvable:$true] %s3701
      %3707 = dma.vmem_to_hbm [thread:$0]  %s3702, 256, %s9, [#allocation3], 128, 128, 8
    $region41: #{tpu_custom_call.1} parent=1 // pred_fallthru
      _
    // Predicated region
    $region42: #{tpu_custom_call.1} parent=1 // pred_check
      _
    $region43: #{tpu_custom_call.1} parent=1 // pred_check_branch
      %3709 = sbr.rel (0) target = $region45
    $region44: #{tpu_custom_call.1} parent=1 // pred_region
      %3710 = dma.done [#allocation3], 256
    $region45: #{tpu_custom_call.1} parent=1 // pred_fallthru
      _
    %3711 = vsyncpa [#allocation3], 1

</llo_original>
